<compile_context>
chip_gen: v7x
topology: tpu7x:2x2x1
jax: 0.10.0
libtpu: 0.0.40
codegen_flags: <defaults>
</compile_context>

<pallas_src>
import math

import jax
import jax.numpy as jnp
from jax import lax
from jax.experimental import pallas as pl
from jax.experimental.pallas import tpu as pltpu


# ----------------------------- in-kernel helpers ----------------------------

def _silu(x):
    # exact SiLU: sigmoid(x) = 0.5*(tanh(x/2)+1)  -> a single EUP op
    return x * (0.5 * jnp.tanh(0.5 * x) + 0.5)


def _layernorm(h, gamma, beta, eps=1e-5):
    mu = jnp.mean(h, axis=-1, keepdims=True)
    var = jnp.mean(jnp.square(h - mu), axis=-1, keepdims=True)
    return (h - mu) * lax.rsqrt(var + eps) * gamma + beta


def _mm(a, w_bf16):
    # bf16 MXU operands (same as default TPU matmul precision), f32 accumulate.
    return jnp.dot(a.astype(jnp.bfloat16), w_bf16,
                   preferred_element_type=jnp.float32)


# ------------------------------- static config -------------------------------

def make_config(input_dim=128, cond_dim=64, hidden_dims=(128, 128, 64, 64),
                freq_dim=256):
    h0 = hidden_dims[0]
    n_down = len(hidden_dims)

    blocks = []
    dins = [input_dim] + list(hidden_dims[:-1])
    for j in range(n_down):                       # encoder ("layers")
        blocks.append(dict(din=dins[j], dout=hidden_dims[j],
                           skip_store=j if j < n_down - 1 else None,
                           skip_read=None))
    for i in reversed(range(n_down - 1)):         # decoder ("reverse_layers")
        blocks.append(dict(din=hidden_dims[i + 1], dout=hidden_dims[i],
                           skip_store=None, skip_read=i))

    n_blocks = len(blocks)
    n_phases = 2 + n_blocks + 2                   # embedders + blocks + head(2)

    n_max = 128
    head_mid = 2 * input_dim
    n_head_chunks = head_mid // n_max
    k_max = max(freq_dim + h0, cond_dim + h0,
                max(b['din'] for b in blocks) + 2 * h0,
                n_head_chunks * h0, head_mid)

    rows = {}
    r = 0
    for name in ('freqs', 't_b1', 't_b2', 'c_b1', 'c_b2'):
        rows[name] = r
        r += 1
    for blk in blocks:
        blk['rb'], blk['rg'], blk['rbe'] = r, r + 1, r + 2
        r += 3
    for name in ('o_b1', 'o_g', 'o_be', 'o_b2'):
        rows[name] = r
        r += 1
    n_rows = ((r + 7) // 8) * 8
    slab_w = max(head_mid, 2 * h0, n_max)

    return dict(input_dim=input_dim, cond_dim=cond_dim,
                hidden_dims=tuple(hidden_dims), freq_dim=freq_dim, h0=h0,
                n_down=n_down, blocks=blocks, n_blocks=n_blocks,
                n_phases=n_phases, k_max=k_max, n_max=n_max,
                head_mid=head_mid, n_head_chunks=n_head_chunks,
                rows=rows, n_rows=n_rows, slab_w=slab_w)


# ------------------------------- parameters ----------------------------------

def _lin_init(key, din, dout):
    kw, kb = jax.random.split(key)
    bound = 1.0 / math.sqrt(din)
    w = jax.random.uniform(kw, (din, dout), jnp.float32, -bound, bound)
    b = jax.random.uniform(kb, (dout,), jnp.float32, -bound, bound)
    return w, b


def init_model(key, cfg):
    h0, freq, cond = cfg['h0'], cfg['freq_dim'], cfg['cond_dim']
    idim, blocks, rows = cfg['input_dim'], cfg['blocks'], cfg['rows']
    P, K, N = cfg['n_phases'], cfg['k_max'], cfg['n_max']

    keys = iter(jax.random.split(key, 4 + 3 * len(blocks) + 2))
    W = jnp.zeros((P, K, N), jnp.float32)
    S = jnp.zeros((cfg['n_rows'], cfg['slab_w']), jnp.float32)

    half = freq // 2
    S = S.at[rows['freqs'], :half].set(
        jnp.exp(-math.log(10000.0) * jnp.arange(half, dtype=jnp.float32) / half))

    # TimestepEmbedder.mlp  (phase 0)
    w, b = _lin_init(next(keys), freq, h0)
    W = W.at[0, 0:freq, 0:h0].set(w)
    S = S.at[rows['t_b1'], 0:h0].set(b)
    w, b = _lin_init(next(keys), h0, h0)
    W = W.at[0, freq:freq + h0, 0:h0].set(w)
    S = S.at[rows['t_b2'], 0:h0].set(b)

    # CondEmbedder  (phase 1)
    w, b = _lin_init(next(keys), cond, h0)
    W = W.at[1, 0:cond, 0:h0].set(w)
    S = S.at[rows['c_b1'], 0:h0].set(b)
    w, b = _lin_init(next(keys), h0, h0)
    W = W.at[1, cond:cond + h0, 0:h0].set(w)
    S = S.at[rows['c_b2'], 0:h0].set(b)

    # Residual blocks  (phases 2 .. 2+n_blocks-1)
    for j, blk in enumerate(blocks):
        din, dout = blk['din'], blk['dout']
        wfc, bfc = _lin_init(next(keys), din, dout)
        wt, bt = _lin_init(next(keys), h0, dout)
        wc, bc = _lin_init(next(keys), h0, dout)
        ph = 2 + j
        W = W.at[ph, 0:din, 0:dout].set(wfc)
        W = W.at[ph, din:din + h0, 0:dout].set(wt)
        W = W.at[ph, din + h0:din + 2 * h0, 0:dout].set(wc)
        S = S.at[blk['rb'], 0:dout].set(bfc + bt + bc)        # fused bias
        S = S.at[blk['rg'], 0:dout].set(jnp.ones((dout,), jnp.float32))
        # LayerNorm beta stays zero

    # Output head  (phases P-2, P-1)
    head_mid = cfg['head_mid']
    w, b = _lin_init(next(keys), h0, head_mid)
    for c in range(cfg['n_head_chunks']):
        W = W.at[P - 2, c * h0:(c + 1) * h0, :].set(w[:, c * N:(c + 1) * N])
    S = S.at[rows['o_b1'], 0:head_mid].set(b)
    S = S.at[rows['o_g'], 0:head_mid].set(jnp.ones((head_mid,), jnp.float32))
    w, b = _lin_init(next(keys), head_mid, idim)
    W = W.at[P - 1, 0:head_mid, 0:idim].set(w)
    S = S.at[rows['o_b2'], 0:idim].set(b)

    return dict(W=W.astype(jnp.bfloat16), S=S)


# --------------------------------- kernel ------------------------------------

def _make_kernel(cfg):
    h0 = cfg['h0']
    freq = cfg['freq_dim']
    half = freq // 2
    cond = cfg['cond_dim']
    blocks = cfg['blocks']
    rows = cfg['rows']
    head_mid = cfg['head_mid']
    n_chunks = cfg['n_head_chunks']
    idim = cfg['input_dim']
    P = cfg['n_phases']

    def kernel(t_ref, y_ref, x_ref, w_ref, s_ref, o_ref, emb_s, h_s, hist_s):
        pid = pl.program_id(0)

        def srow(r, n):                 # (1, n) slice of the f32 param slab
            return s_ref[r:r + 1, 0:n]

        # ---- phase 0: TimestepEmbedder (sinusoid feat -> Linear/SiLU/Linear)
        @pl.when(pid == 0)
        def _():
            freqs = srow(rows['freqs'], half)                  # (1, half)
            arg = t_ref[...] * freqs                           # (B, half)
            t_freq = jnp.concatenate([jnp.cos(arg), jnp.sin(arg)], axis=-1)
            h = _silu(_mm(t_freq, w_ref[0:freq, 0:h0]) + srow(rows['t_b1'], h0))
            emb_t = _mm(h, w_ref[freq:freq + h0, 0:h0]) + srow(rows['t_b2'], h0)
            emb_s[:, 0:h0] = _silu(emb_t)      # blocks consume SiLU(emb_t)

        # ---- phase 1: CondEmbedder
        @pl.when(pid == 1)
        def _():
            h = _silu(_mm(y_ref[...], w_ref[0:cond, 0:h0]) + srow(rows['c_b1'], h0))
            emb_y = _mm(h, w_ref[cond:cond + h0, 0:h0]) + srow(rows['c_b2'], h0)
            emb_s[:, h0:2 * h0] = _silu(emb_y)

        # ---- phases 2..2+n_blocks-1: residual blocks (encoder + decoder)
        for j, blk in enumerate(blocks):
            @pl.when(pid == 2 + j)
            def _(j=j, blk=blk):
                din, dout = blk['din'], blk['dout']
                h_in = x_ref[...] if j == 0 else h_s[:, 0:din]
                hh = (_mm(h_in, w_ref[0:din, 0:dout])
                      + _mm(emb_s[...], w_ref[din:din + 2 * h0, 0:dout])
                      + srow(blk['rb'], dout))               # bfc + bt + bc fused
                hh = _layernorm(hh, srow(blk['rg'], dout), srow(blk['rbe'], dout))
                hh = _silu(hh)                               # Dropout p=0 -> id
                if blk['skip_read'] is not None:             # decoder: + skip
                    hh = hh + hist_s[blk['skip_read'], :, 0:dout]
                if blk['skip_store'] is not None:            # encoder: save skip
                    hist_s[blk['skip_store'], :, 0:dout] = hh
                h_s[:, 0:dout] = hh

        # ---- phase P-2: output head, Linear -> LayerNorm -> SiLU
        @pl.when(pid == P - 2)
        def _():
            h_in = h_s[:, 0:h0]
            parts = [_mm(h_in, w_ref[c * h0:(c + 1) * h0, :])
                     for c in range(n_chunks)]
            h1 = parts[0] if n_chunks == 1 else jnp.concatenate(parts, axis=-1)
            h1 = h1 + srow(rows['o_b1'], head_mid)
            h1 = _layernorm(h1, srow(rows['o_g'], head_mid),
                            srow(rows['o_be'], head_mid))
            h_s[:, 0:head_mid] = _silu(h1)

        # ---- phase P-1: output head final Linear
        @pl.when(pid == P - 1)
        def _():
            out = (_mm(h_s[:, 0:head_mid], w_ref[0:head_mid, 0:idim])
                   + srow(rows['o_b2'], idim))
            o_ref[...] = out.astype(o_ref.dtype)

    return kernel


# --------------------------------- forward -----------------------------------

def build_forward(cfg, batch):
    kernel = _make_kernel(cfg)
    B = batch
    idim, cond, h0 = cfg['input_dim'], cfg['cond_dim'], cfg['h0']
    K, N, P = cfg['k_max'], cfg['n_max'], cfg['n_phases']
    n_skip = cfg['n_down'] - 1
    skip_w = max(cfg['hidden_dims'][:-1])
    h_w = max(cfg['head_mid'], max(b['dout'] for b in cfg['blocks']))

    call = pl.pallas_call(
        kernel,
        out_shape=jax.ShapeDtypeStruct((B, idim), jnp.float32),
        grid=(P,),
        in_specs=[
            pl.BlockSpec((B, 1), lambda i: (0, 0)),             # t  (B, 1)
            pl.BlockSpec((B, cond), lambda i: (0, 0)),          # y
            pl.BlockSpec((B, idim), lambda i: (0, 0)),          # x
            pl.BlockSpec((None, K, N), lambda i: (i, 0, 0)),    # per-phase weights
            pl.BlockSpec((cfg['n_rows'], cfg['slab_w']),
                         lambda i: (0, 0)),                     # biases / LN / freqs
        ],
        out_specs=pl.BlockSpec((B, idim), lambda i: (0, 0)),
        scratch_shapes=[
            pltpu.VMEM((B, 2 * h0), jnp.float32),      # [silu(emb_t)|silu(emb_y)]
            pltpu.VMEM((B, h_w), jnp.float32),         # carried activation
            pltpu.VMEM((n_skip, B, skip_w), jnp.float32),   # UNet skip history
        ],
        compiler_params=pltpu.CompilerParams(
            dimension_semantics=("arbitrary",)),
    )

    def fwd(model, x, t, y):
        t2d = t.astype(jnp.float32).reshape(B, 1)
        return call(t2d, y.astype(jnp.float32), x.astype(jnp.float32),
                    model['W'], model['S'])

    return jax.jit(fwd)


# --------------------- pure-JAX reference (same packed params) ----------------

def reference_forward(model, cfg, x, t, y):
    f32 = jnp.float32
    W = model['W'].astype(f32)
    S = model['S']
    rows, blocks = cfg['rows'], cfg['blocks']
    h0, freq, cond, idim = cfg['h0'], cfg['freq_dim'], cfg['cond_dim'], cfg['input_dim']
    half = freq // 2
    head_mid, P = cfg['head_mid'], cfg['n_phases']
    n_down = cfg['n_down']

    def lin(a, w, b):
        return jnp.dot(a.astype(jnp.bfloat16), w.astype(jnp.bfloat16),
                       preferred_element_type=f32) + b

    def ln(h, g, be, eps=1e-5):
        mu = h.mean(-1, keepdims=True)
        v = jnp.square(h - mu).mean(-1, keepdims=True)
        return (h - mu) / jnp.sqrt(v + eps) * g + be

    silu = lambda v: v * jax.nn.sigmoid(v)

    arg = t.astype(f32)[:, None] * S[rows['freqs'], :half][None, :]
    t_freq = jnp.concatenate([jnp.cos(arg), jnp.sin(arg)], axis=-1)
    h = silu(lin(t_freq, W[0, 0:freq, 0:h0], S[rows['t_b1'], 0:h0]))
    emb_t = lin(h, W[0, freq:freq + h0, 0:h0], S[rows['t_b2'], 0:h0])
    h = silu(lin(y.astype(f32), W[1, 0:cond, 0:h0], S[rows['c_b1'], 0:h0]))
    emb_y = lin(h, W[1, cond:cond + h0, 0:h0], S[rows['c_b2'], 0:h0])
    st, sy = silu(emb_t), silu(emb_y)

    def resblock(hcur, j):
        blk = blocks[j]
        din, dout = blk['din'], blk['dout']
        ph = 2 + j
        hh = (lin(hcur, W[ph, 0:din, 0:dout], S[blk['rb'], 0:dout])
              + lin(st, W[ph, din:din + h0, 0:dout], 0.0)
              + lin(sy, W[ph, din + h0:din + 2 * h0, 0:dout], 0.0))
        return silu(ln(hh, S[blk['rg'], 0:dout], S[blk['rbe'], 0:dout]))

    hcur = x.astype(f32)
    history = []
    for j in range(n_down):
        hcur = resblock(hcur, j)
        history.append(hcur)
    history.pop()
    for j in range(n_down, len(blocks)):
        hcur = resblock(hcur, j)
        hcur = hcur + history.pop()

    parts = [jnp.dot(hcur.astype(jnp.bfloat16),
                     W[P - 2, c * h0:(c + 1) * h0, :].astype(jnp.bfloat16),
                     preferred_element_type=f32)
             for c in range(cfg['n_head_chunks'])]
    h1 = jnp.concatenate(parts, axis=-1) + S[rows['o_b1'], 0:head_mid]
    h1 = silu(ln(h1, S[rows['o_g'], 0:head_mid], S[rows['o_be'], 0:head_mid]))
    return (jnp.dot(h1.astype(jnp.bfloat16),
                    W[P - 1, 0:head_mid, 0:idim].astype(jnp.bfloat16),
                    preferred_element_type=f32)
            + S[rows['o_b2'], 0:idim])


# ----------------------------------- main -------------------------------------

if __name__ == "__main__":
    key = jax.random.PRNGKey(0)
    k_params, k_x, k_t, k_y = jax.random.split(key, 4)

    B = 8
    cfg = make_config(input_dim=128, cond_dim=64,
                      hidden_dims=(128, 128, 64, 64), freq_dim=256)
    model = init_model(k_params, cfg)
    fwd = build_forward(cfg, B)

    x = jax.random.normal(k_x, (B, cfg['input_dim']), jnp.float32)
    t = jax.random.uniform(k_t, (B,), jnp.float32, 0.0, 1000.0)
    y = jax.random.normal(k_y, (B, cfg['cond_dim']), jnp.float32)

    out = jax.block_until_ready(fwd(model, x, t, y))
    assert out.shape == (B, cfg['input_dim']), out.shape
    assert bool(jnp.all(jnp.isfinite(out)))

    ref = reference_forward(model, cfg, x, t, y)
    max_err = float(jnp.max(jnp.abs(out - ref)))
    assert max_err < 5e-2, f"max |kernel - reference| = {max_err}"

    print("KERNEL_OK")
</pallas_src>

<mosaic_0001>
module attributes {stable_mosaic.version = 11 : i64} {
  func.func @kernel(%arg0: i32, %arg1: memref<8x1xf32, #tpu.memory_space<vmem>>, %arg2: memref<8x64xf32, #tpu.memory_space<vmem>>, %arg3: memref<8x128xf32, #tpu.memory_space<vmem>>, %arg4: memref<1x384x128xbf16, #tpu.memory_space<vmem>>, %arg5: memref<32x256xf32, #tpu.memory_space<vmem>>, %arg6: memref<8x128xf32, #tpu.memory_space<vmem>>, %arg7: memref<8x256xf32, #tpu.memory_space<vmem>>, %arg8: memref<8x256xf32, #tpu.memory_space<vmem>>, %arg9: memref<3x8x128xf32, #tpu.memory_space<vmem>>) attributes {dimension_semantics = [#tpu.dimension_semantics<arbitrary>], iteration_bounds = array<i64: 11>, scalar_prefetch = 0 : i64, scratch_operands = 3 : i64, tpu.core_type = #tpu.core_type<tc>, window_params = [{pipeline_mode = #tpu.pipeline_mode<synchronous>, transform_indices = @transform_0, window_bounds = array<i64: 8, 1>}, {pipeline_mode = #tpu.pipeline_mode<synchronous>, transform_indices = @transform_1, window_bounds = array<i64: 8, 64>}, {pipeline_mode = #tpu.pipeline_mode<synchronous>, transform_indices = @transform_2, window_bounds = array<i64: 8, 128>}, {transform_indices = @transform_3, window_bounds = array<i64: 1, 384, 128>}, {pipeline_mode = #tpu.pipeline_mode<synchronous>, transform_indices = @transform_4, window_bounds = array<i64: 32, 256>}, {pipeline_mode = #tpu.pipeline_mode<synchronous>, transform_indices = @transform_5, window_bounds = array<i64: 8, 128>}]} {
    %c0_i32 = arith.constant 0 : i32
    %0 = arith.cmpi eq, %arg0, %c0_i32 : i32
    %1 = arith.extui %0 : i1 to i32
    %c0_i32_0 = arith.constant 0 : i32
    %2 = arith.cmpi ne, %1, %c0_i32_0 : i32
    scf.if %2 {
      %c0 = arith.constant 0 : index
      %c0_11 = arith.constant 0 : index
      %33 = vector.load %arg5[%c0, %c0_11] : memref<32x256xf32, #tpu.memory_space<vmem>>, vector<1x128xf32>
      %c0_12 = arith.constant 0 : index
      %c0_13 = arith.constant 0 : index
      %34 = vector.load %arg1[%c0_12, %c0_13] : memref<8x1xf32, #tpu.memory_space<vmem>>, vector<8x1xf32>
      %35 = vector.broadcast %34 : vector<8x1xf32> to vector<8x128xf32>
      %36 = vector.broadcast %33 : vector<1x128xf32> to vector<8x128xf32>
      %37 = arith.mulf %35, %36 : vector<8x128xf32>
      %38 = math.cos %37 : vector<8x128xf32>
      %39 = math.sin %37 : vector<8x128xf32>
      %40 = tpu.concatenate %38, %39 in 1 : vector<8x128xf32>, vector<8x128xf32> -> vector<8x256xf32>
      %c0_14 = arith.constant 0 : index
      %c0_15 = arith.constant 0 : index
      %c0_16 = arith.constant 0 : index
      %41 = vector.load %arg4[%c0_14, %c0_15, %c0_16] : memref<1x384x128xbf16, #tpu.memory_space<vmem>>, vector<1x256x128xbf16>
      %42 = vector.shape_cast %41 : vector<1x256x128xbf16> to vector<256x128xbf16>
      %43 = arith.truncf %40 : vector<8x256xf32> to vector<8x256xbf16>
      %cst = arith.constant dense<0.000000e+00> : vector<8x128xf32>
      %44 = tpu.matmul %43, %42, %cst {dimension_numbers = #tpu.dot_dimension_numbers<[1], [0], [0], [1], [0, 0, 1, 1], [], []>} : vector<8x256xbf16>, vector<256x128xbf16>, vector<8x128xf32> -> vector<8x128xf32>
      %c1 = arith.constant 1 : index
      %c0_17 = arith.constant 0 : index
      %45 = vector.load %arg5[%c1, %c0_17] : memref<32x256xf32, #tpu.memory_space<vmem>>, vector<1x128xf32>
      %46 = vector.broadcast %45 : vector<1x128xf32> to vector<8x128xf32>
      %47 = arith.addf %44, %46 : vector<8x128xf32>
      %cst_18 = arith.constant 5.000000e-01 : f32
      %48 = vector.broadcast %cst_18 : f32 to vector<8x128xf32>
      %49 = arith.mulf %48, %47 : vector<8x128xf32>
      %50 = math.tanh %49 : vector<8x128xf32>
      %cst_19 = arith.constant 5.000000e-01 : f32
      %51 = vector.broadcast %cst_19 : f32 to vector<8x128xf32>
      %52 = arith.mulf %51, %50 : vector<8x128xf32>
      %cst_20 = arith.constant 5.000000e-01 : f32
      %53 = vector.broadcast %cst_20 : f32 to vector<8x128xf32>
      %54 = arith.addf %52, %53 : vector<8x128xf32>
      %55 = arith.mulf %47, %54 : vector<8x128xf32>
      %c0_21 = arith.constant 0 : index
      %c256 = arith.constant 256 : index
      %c0_22 = arith.constant 0 : index
      %56 = vector.load %arg4[%c0_21, %c256, %c0_22] : memref<1x384x128xbf16, #tpu.memory_space<vmem>>, vector<1x128x128xbf16>
      %57 = vector.shape_cast %56 : vector<1x128x128xbf16> to vector<128x128xbf16>
      %58 = arith.truncf %55 : vector<8x128xf32> to vector<8x128xbf16>
      %cst_23 = arith.constant dense<0.000000e+00> : vector<8x128xf32>
      %59 = tpu.matmul %58, %57, %cst_23 {dimension_numbers = #tpu.dot_dimension_numbers<[1], [0], [0], [1], [0, 0, 1, 1], [], []>} : vector<8x128xbf16>, vector<128x128xbf16>, vector<8x128xf32> -> vector<8x128xf32>
      %c2 = arith.constant 2 : index
      %c0_24 = arith.constant 0 : index
      %60 = vector.load %arg5[%c2, %c0_24] : memref<32x256xf32, #tpu.memory_space<vmem>>, vector<1x128xf32>
      %61 = vector.broadcast %60 : vector<1x128xf32> to vector<8x128xf32>
      %62 = arith.addf %59, %61 : vector<8x128xf32>
      %cst_25 = arith.constant 5.000000e-01 : f32
      %63 = vector.broadcast %cst_25 : f32 to vector<8x128xf32>
      %64 = arith.mulf %63, %62 : vector<8x128xf32>
      %65 = math.tanh %64 : vector<8x128xf32>
      %cst_26 = arith.constant 5.000000e-01 : f32
      %66 = vector.broadcast %cst_26 : f32 to vector<8x128xf32>
      %67 = arith.mulf %66, %65 : vector<8x128xf32>
      %cst_27 = arith.constant 5.000000e-01 : f32
      %68 = vector.broadcast %cst_27 : f32 to vector<8x128xf32>
      %69 = arith.addf %67, %68 : vector<8x128xf32>
      %70 = arith.mulf %62, %69 : vector<8x128xf32>
      %c0_28 = arith.constant 0 : index
      %c0_29 = arith.constant 0 : index
      %71 = vector.load %arg7[%c0_28, %c0_29] : memref<8x256xf32, #tpu.memory_space<vmem>>, vector<8x128xf32>
      tpu.vector_store %arg7[%c0_28, %c0_29], %70 {strides = array<i32>} : memref<8x256xf32, #tpu.memory_space<vmem>>, vector<8x128xf32>,
    } else {
    }
    %c1_i32 = arith.constant 1 : i32
    %3 = arith.cmpi eq, %arg0, %c1_i32 : i32
    %4 = arith.extui %3 : i1 to i32
    %c0_i32_1 = arith.constant 0 : i32
    %5 = arith.cmpi ne, %4, %c0_i32_1 : i32
    scf.if %5 {
      %c0 = arith.constant 0 : index
      %c0_11 = arith.constant 0 : index
      %33 = vector.load %arg2[%c0, %c0_11] : memref<8x64xf32, #tpu.memory_space<vmem>>, vector<8x64xf32>
      %c0_12 = arith.constant 0 : index
      %c0_13 = arith.constant 0 : index
      %c0_14 = arith.constant 0 : index
      %34 = vector.load %arg4[%c0_12, %c0_13, %c0_14] : memref<1x384x128xbf16, #tpu.memory_space<vmem>>, vector<1x64x128xbf16>
      %35 = vector.shape_cast %34 : vector<1x64x128xbf16> to vector<64x128xbf16>
      %36 = arith.truncf %33 : vector<8x64xf32> to vector<8x64xbf16>
      %cst = arith.constant dense<0.000000e+00> : vector<8x128xf32>
      %37 = tpu.matmul %36, %35, %cst {dimension_numbers = #tpu.dot_dimension_numbers<[1], [0], [0], [1], [0, 0, 1, 1], [], []>} : vector<8x64xbf16>, vector<64x128xbf16>, vector<8x128xf32> -> vector<8x128xf32>
      %c3 = arith.constant 3 : index
      %c0_15 = arith.constant 0 : index
      %38 = vector.load %arg5[%c3, %c0_15] : memref<32x256xf32, #tpu.memory_space<vmem>>, vector<1x128xf32>
      %39 = vector.broadcast %38 : vector<1x128xf32> to vector<8x128xf32>
      %40 = arith.addf %37, %39 : vector<8x128xf32>
      %cst_16 = arith.constant 5.000000e-01 : f32
      %41 = vector.broadcast %cst_16 : f32 to vector<8x128xf32>
      %42 = arith.mulf %41, %40 : vector<8x128xf32>
      %43 = math.tanh %42 : vector<8x128xf32>
      %cst_17 = arith.constant 5.000000e-01 : f32
      %44 = vector.broadcast %cst_17 : f32 to vector<8x128xf32>
      %45 = arith.mulf %44, %43 : vector<8x128xf32>
      %cst_18 = arith.constant 5.000000e-01 : f32
      %46 = vector.broadcast %cst_18 : f32 to vector<8x128xf32>
      %47 = arith.addf %45, %46 : vector<8x128xf32>
      %48 = arith.mulf %40, %47 : vector<8x128xf32>
      %c0_19 = arith.constant 0 : index
      %c64 = arith.constant 64 : index
      %c0_20 = arith.constant 0 : index
      %49 = vector.load %arg4[%c0_19, %c64, %c0_20] : memref<1x384x128xbf16, #tpu.memory_space<vmem>>, vector<1x128x128xbf16>
      %50 = vector.shape_cast %49 : vector<1x128x128xbf16> to vector<128x128xbf16>
      %51 = arith.truncf %48 : vector<8x128xf32> to vector<8x128xbf16>
      %cst_21 = arith.constant dense<0.000000e+00> : vector<8x128xf32>
      %52 = tpu.matmul %51, %50, %cst_21 {dimension_numbers = #tpu.dot_dimension_numbers<[1], [0], [0], [1], [0, 0, 1, 1], [], []>} : vector<8x128xbf16>, vector<128x128xbf16>, vector<8x128xf32> -> vector<8x128xf32>
      %c4 = arith.constant 4 : index
      %c0_22 = arith.constant 0 : index
      %53 = vector.load %arg5[%c4, %c0_22] : memref<32x256xf32, #tpu.memory_space<vmem>>, vector<1x128xf32>
      %54 = vector.broadcast %53 : vector<1x128xf32> to vector<8x128xf32>
      %55 = arith.addf %52, %54 : vector<8x128xf32>
      %cst_23 = arith.constant 5.000000e-01 : f32
      %56 = vector.broadcast %cst_23 : f32 to vector<8x128xf32>
      %57 = arith.mulf %56, %55 : vector<8x128xf32>
      %58 = math.tanh %57 : vector<8x128xf32>
      %cst_24 = arith.constant 5.000000e-01 : f32
      %59 = vector.broadcast %cst_24 : f32 to vector<8x128xf32>
      %60 = arith.mulf %59, %58 : vector<8x128xf32>
      %cst_25 = arith.constant 5.000000e-01 : f32
      %61 = vector.broadcast %cst_25 : f32 to vector<8x128xf32>
      %62 = arith.addf %60, %61 : vector<8x128xf32>
      %63 = arith.mulf %55, %62 : vector<8x128xf32>
      %c0_26 = arith.constant 0 : index
      %c128 = arith.constant 128 : index
      %64 = vector.load %arg7[%c0_26, %c128] : memref<8x256xf32, #tpu.memory_space<vmem>>, vector<8x128xf32>
      tpu.vector_store %arg7[%c0_26, %c128], %63 {strides = array<i32>} : memref<8x256xf32, #tpu.memory_space<vmem>>, vector<8x128xf32>,
    } else {
    }
    %c2_i32 = arith.constant 2 : i32
    %6 = arith.cmpi eq, %arg0, %c2_i32 : i32
    %7 = arith.extui %6 : i1 to i32
    %c0_i32_2 = arith.constant 0 : i32
    %8 = arith.cmpi ne, %7, %c0_i32_2 : i32
    scf.if %8 {
      %c0 = arith.constant 0 : index
      %c0_11 = arith.constant 0 : index
      %33 = vector.load %arg3[%c0, %c0_11] : memref<8x128xf32, #tpu.memory_space<vmem>>, vector<8x128xf32>
      %c0_12 = arith.constant 0 : index
      %c0_13 = arith.constant 0 : index
      %c0_14 = arith.constant 0 : index
      %34 = vector.load %arg4[%c0_12, %c0_13, %c0_14] : memref<1x384x128xbf16, #tpu.memory_space<vmem>>, vector<1x128x128xbf16>
      %35 = vector.shape_cast %34 : vector<1x128x128xbf16> to vector<128x128xbf16>
      %36 = arith.truncf %33 : vector<8x128xf32> to vector<8x128xbf16>
      %cst = arith.constant dense<0.000000e+00> : vector<8x128xf32>
      %37 = tpu.matmul %36, %35, %cst {dimension_numbers = #tpu.dot_dimension_numbers<[1], [0], [0], [1], [0, 0, 1, 1], [], []>} : vector<8x128xbf16>, vector<128x128xbf16>, vector<8x128xf32> -> vector<8x128xf32>
      %c0_15 = arith.constant 0 : index
      %c0_16 = arith.constant 0 : index
      %38 = vector.load %arg7[%c0_15, %c0_16] : memref<8x256xf32, #tpu.memory_space<vmem>>, vector<8x256xf32>
      %c0_17 = arith.constant 0 : index
      %c128 = arith.constant 128 : index
      %c0_18 = arith.constant 0 : index
      %39 = vector.load %arg4[%c0_17, %c128, %c0_18] : memref<1x384x128xbf16, #tpu.memory_space<vmem>>, vector<1x256x128xbf16>
      %40 = vector.shape_cast %39 : vector<1x256x128xbf16> to vector<256x128xbf16>
      %41 = arith.truncf %38 : vector<8x256xf32> to vector<8x256xbf16>
      %cst_19 = arith.constant dense<0.000000e+00> : vector<8x128xf32>
      %42 = tpu.matmul %41, %40, %cst_19 {dimension_numbers = #tpu.dot_dimension_numbers<[1], [0], [0], [1], [0, 0, 1, 1], [], []>} : vector<8x256xbf16>, vector<256x128xbf16>, vector<8x128xf32> -> vector<8x128xf32>
      %43 = arith.addf %37, %42 : vector<8x128xf32>
      %c5 = arith.constant 5 : index
      %c0_20 = arith.constant 0 : index
      %44 = vector.load %arg5[%c5, %c0_20] : memref<32x256xf32, #tpu.memory_space<vmem>>, vector<1x128xf32>
      %45 = vector.broadcast %44 : vector<1x128xf32> to vector<8x128xf32>
      %46 = arith.addf %43, %45 : vector<8x128xf32>
      %c6 = arith.constant 6 : index
      %c0_21 = arith.constant 0 : index
      %47 = vector.load %arg5[%c6, %c0_21] : memref<32x256xf32, #tpu.memory_space<vmem>>, vector<1x128xf32>
      %c7 = arith.constant 7 : index
      %c0_22 = arith.constant 0 : index
      %48 = vector.load %arg5[%c7, %c0_22] : memref<32x256xf32, #tpu.memory_space<vmem>>, vector<1x128xf32>
      %cst_23 = arith.constant dense<0.000000e+00> : vector<8xf32>
      %49 = vector.multi_reduction <add>, %46, %cst_23 [1] : vector<8x128xf32> to vector<8xf32>
      %50 = vector.shape_cast %49 : vector<8xf32> to vector<8x1xf32>
      %cst_24 = arith.constant 1.280000e+02 : f32
      %51 = vector.broadcast %cst_24 : f32 to vector<8x1xf32>
      %52 = arith.divf %50, %51 : vector<8x1xf32>
      %53 = vector.broadcast %52 : vector<8x1xf32> to vector<8x128xf32>
      %54 = arith.subf %46, %53 : vector<8x128xf32>
      %55 = arith.mulf %54, %54 : vector<8x128xf32>
      %cst_25 = arith.constant dense<0.000000e+00> : vector<8xf32>
      %56 = vector.multi_reduction <add>, %55, %cst_25 [1] : vector<8x128xf32> to vector<8xf32>
      %57 = vector.shape_cast %56 : vector<8xf32> to vector<8x1xf32>
      %cst_26 = arith.constant 1.280000e+02 : f32
      %58 = vector.broadcast %cst_26 : f32 to vector<8x1xf32>
      %59 = arith.divf %57, %58 : vector<8x1xf32>
      %60 = vector.broadcast %52 : vector<8x1xf32> to vector<8x128xf32>
      %61 = arith.subf %46, %60 : vector<8x128xf32>
      %cst_27 = arith.constant 9.99999974E-6 : f32
      %62 = vector.broadcast %cst_27 : f32 to vector<8x1xf32>
      %63 = arith.addf %59, %62 : vector<8x1xf32>
      %64 = math.rsqrt %63 : vector<8x1xf32>
      %65 = vector.broadcast %64 : vector<8x1xf32> to vector<8x128xf32>
      %66 = arith.mulf %61, %65 : vector<8x128xf32>
      %67 = vector.broadcast %47 : vector<1x128xf32> to vector<8x128xf32>
      %68 = arith.mulf %66, %67 : vector<8x128xf32>
      %69 = vector.broadcast %48 : vector<1x128xf32> to vector<8x128xf32>
      %70 = arith.addf %68, %69 : vector<8x128xf32>
      %cst_28 = arith.constant 5.000000e-01 : f32
      %71 = vector.broadcast %cst_28 : f32 to vector<8x128xf32>
      %72 = arith.mulf %71, %70 : vector<8x128xf32>
      %73 = math.tanh %72 : vector<8x128xf32>
      %cst_29 = arith.constant 5.000000e-01 : f32
      %74 = vector.broadcast %cst_29 : f32 to vector<8x128xf32>
      %75 = arith.mulf %74, %73 : vector<8x128xf32>
      %cst_30 = arith.constant 5.000000e-01 : f32
      %76 = vector.broadcast %cst_30 : f32 to vector<8x128xf32>
      %77 = arith.addf %75, %76 : vector<8x128xf32>
      %78 = arith.mulf %70, %77 : vector<8x128xf32>
      %c0_31 = arith.constant 0 : index
      %c0_32 = arith.constant 0 : index
      %c0_33 = arith.constant 0 : index
      %79 = vector.load %arg9[%c0_31, %c0_32, %c0_33] : memref<3x8x128xf32, #tpu.memory_space<vmem>>, vector<1x8x128xf32>
      %80 = vector.shape_cast %79 : vector<1x8x128xf32> to vector<8x128xf32>
      %81 = vector.shape_cast %78 : vector<8x128xf32> to vector<1x8x128xf32>
      tpu.vector_store %arg9[%c0_31, %c0_32, %c0_33], %81 {strides = array<i32>} : memref<3x8x128xf32, #tpu.memory_space<vmem>>, vector<1x8x128xf32>,
      %c0_34 = arith.constant 0 : index
      %c0_35 = arith.constant 0 : index
      %82 = vector.load %arg8[%c0_34, %c0_35] : memref<8x256xf32, #tpu.memory_space<vmem>>, vector<8x128xf32>
      tpu.vector_store %arg8[%c0_34, %c0_35], %78 {strides = array<i32>} : memref<8x256xf32, #tpu.memory_space<vmem>>, vector<8x128xf32>,
    } else {
    }
    %c3_i32 = arith.constant 3 : i32
    %9 = arith.cmpi eq, %arg0, %c3_i32 : i32
    %10 = arith.extui %9 : i1 to i32
    %c0_i32_3 = arith.constant 0 : i32
    %11 = arith.cmpi ne, %10, %c0_i32_3 : i32
    scf.if %11 {
      %c0 = arith.constant 0 : index
      %c0_11 = arith.constant 0 : index
      %33 = vector.load %arg8[%c0, %c0_11] : memref<8x256xf32, #tpu.memory_space<vmem>>, vector<8x128xf32>
      %c0_12 = arith.constant 0 : index
      %c0_13 = arith.constant 0 : index
      %c0_14 = arith.constant 0 : index
      %34 = vector.load %arg4[%c0_12, %c0_13, %c0_14] : memref<1x384x128xbf16, #tpu.memory_space<vmem>>, vector<1x128x128xbf16>
      %35 = vector.shape_cast %34 : vector<1x128x128xbf16> to vector<128x128xbf16>
      %36 = arith.truncf %33 : vector<8x128xf32> to vector<8x128xbf16>
      %cst = arith.constant dense<0.000000e+00> : vector<8x128xf32>
      %37 = tpu.matmul %36, %35, %cst {dimension_numbers = #tpu.dot_dimension_numbers<[1], [0], [0], [1], [0, 0, 1, 1], [], []>} : vector<8x128xbf16>, vector<128x128xbf16>, vector<8x128xf32> -> vector<8x128xf32>
      %c0_15 = arith.constant 0 : index
      %c0_16 = arith.constant 0 : index
      %38 = vector.load %arg7[%c0_15, %c0_16] : memref<8x256xf32, #tpu.memory_space<vmem>>, vector<8x256xf32>
      %c0_17 = arith.constant 0 : index
      %c128 = arith.constant 128 : index
      %c0_18 = arith.constant 0 : index
      %39 = vector.load %arg4[%c0_17, %c128, %c0_18] : memref<1x384x128xbf16, #tpu.memory_space<vmem>>, vector<1x256x128xbf16>
      %40 = vector.shape_cast %39 : vector<1x256x128xbf16> to vector<256x128xbf16>
      %41 = arith.truncf %38 : vector<8x256xf32> to vector<8x256xbf16>
      %cst_19 = arith.constant dense<0.000000e+00> : vector<8x128xf32>
      %42 = tpu.matmul %41, %40, %cst_19 {dimension_numbers = #tpu.dot_dimension_numbers<[1], [0], [0], [1], [0, 0, 1, 1], [], []>} : vector<8x256xbf16>, vector<256x128xbf16>, vector<8x128xf32> -> vector<8x128xf32>
      %43 = arith.addf %37, %42 : vector<8x128xf32>
      %c8 = arith.constant 8 : index
      %c0_20 = arith.constant 0 : index
      %44 = vector.load %arg5[%c8, %c0_20] : memref<32x256xf32, #tpu.memory_space<vmem>>, vector<1x128xf32>
      %45 = vector.broadcast %44 : vector<1x128xf32> to vector<8x128xf32>
      %46 = arith.addf %43, %45 : vector<8x128xf32>
      %c9 = arith.constant 9 : index
      %c0_21 = arith.constant 0 : index
      %47 = vector.load %arg5[%c9, %c0_21] : memref<32x256xf32, #tpu.memory_space<vmem>>, vector<1x128xf32>
      %c10 = arith.constant 10 : index
      %c0_22 = arith.constant 0 : index
      %48 = vector.load %arg5[%c10, %c0_22] : memref<32x256xf32, #tpu.memory_space<vmem>>, vector<1x128xf32>
      %cst_23 = arith.constant dense<0.000000e+00> : vector<8xf32>
      %49 = vector.multi_reduction <add>, %46, %cst_23 [1] : vector<8x128xf32> to vector<8xf32>
      %50 = vector.shape_cast %49 : vector<8xf32> to vector<8x1xf32>
      %cst_24 = arith.constant 1.280000e+02 : f32
      %51 = vector.broadcast %cst_24 : f32 to vector<8x1xf32>
      %52 = arith.divf %50, %51 : vector<8x1xf32>
      %53 = vector.broadcast %52 : vector<8x1xf32> to vector<8x128xf32>
      %54 = arith.subf %46, %53 : vector<8x128xf32>
      %55 = arith.mulf %54, %54 : vector<8x128xf32>
      %cst_25 = arith.constant dense<0.000000e+00> : vector<8xf32>
      %56 = vector.multi_reduction <add>, %55, %cst_25 [1] : vector<8x128xf32> to vector<8xf32>
      %57 = vector.shape_cast %56 : vector<8xf32> to vector<8x1xf32>
      %cst_26 = arith.constant 1.280000e+02 : f32
      %58 = vector.broadcast %cst_26 : f32 to vector<8x1xf32>
      %59 = arith.divf %57, %58 : vector<8x1xf32>
      %60 = vector.broadcast %52 : vector<8x1xf32> to vector<8x128xf32>
      %61 = arith.subf %46, %60 : vector<8x128xf32>
      %cst_27 = arith.constant 9.99999974E-6 : f32
      %62 = vector.broadcast %cst_27 : f32 to vector<8x1xf32>
      %63 = arith.addf %59, %62 : vector<8x1xf32>
      %64 = math.rsqrt %63 : vector<8x1xf32>
      %65 = vector.broadcast %64 : vector<8x1xf32> to vector<8x128xf32>
      %66 = arith.mulf %61, %65 : vector<8x128xf32>
      %67 = vector.broadcast %47 : vector<1x128xf32> to vector<8x128xf32>
      %68 = arith.mulf %66, %67 : vector<8x128xf32>
      %69 = vector.broadcast %48 : vector<1x128xf32> to vector<8x128xf32>
      %70 = arith.addf %68, %69 : vector<8x128xf32>
      %cst_28 = arith.constant 5.000000e-01 : f32
      %71 = vector.broadcast %cst_28 : f32 to vector<8x128xf32>
      %72 = arith.mulf %71, %70 : vector<8x128xf32>
      %73 = math.tanh %72 : vector<8x128xf32>
      %cst_29 = arith.constant 5.000000e-01 : f32
      %74 = vector.broadcast %cst_29 : f32 to vector<8x128xf32>
      %75 = arith.mulf %74, %73 : vector<8x128xf32>
      %cst_30 = arith.constant 5.000000e-01 : f32
      %76 = vector.broadcast %cst_30 : f32 to vector<8x128xf32>
      %77 = arith.addf %75, %76 : vector<8x128xf32>
      %78 = arith.mulf %70, %77 : vector<8x128xf32>
      %c1 = arith.constant 1 : index
      %c0_31 = arith.constant 0 : index
      %c0_32 = arith.constant 0 : index
      %79 = vector.load %arg9[%c1, %c0_31, %c0_32] : memref<3x8x128xf32, #tpu.memory_space<vmem>>, vector<1x8x128xf32>
      %80 = vector.shape_cast %79 : vector<1x8x128xf32> to vector<8x128xf32>
      %81 = vector.shape_cast %78 : vector<8x128xf32> to vector<1x8x128xf32>
      tpu.vector_store %arg9[%c1, %c0_31, %c0_32], %81 {strides = array<i32>} : memref<3x8x128xf32, #tpu.memory_space<vmem>>, vector<1x8x128xf32>,
      %c0_33 = arith.constant 0 : index
      %c0_34 = arith.constant 0 : index
      %82 = vector.load %arg8[%c0_33, %c0_34] : memref<8x256xf32, #tpu.memory_space<vmem>>, vector<8x128xf32>
      tpu.vector_store %arg8[%c0_33, %c0_34], %78 {strides = array<i32>} : memref<8x256xf32, #tpu.memory_space<vmem>>, vector<8x128xf32>,
    } else {
    }
    %c4_i32 = arith.constant 4 : i32
    %12 = arith.cmpi eq, %arg0, %c4_i32 : i32
    %13 = arith.extui %12 : i1 to i32
    %c0_i32_4 = arith.constant 0 : i32
    %14 = arith.cmpi ne, %13, %c0_i32_4 : i32
    scf.if %14 {
      %c0 = arith.constant 0 : index
      %c0_11 = arith.constant 0 : index
      %33 = vector.load %arg8[%c0, %c0_11] : memref<8x256xf32, #tpu.memory_space<vmem>>, vector<8x128xf32>
      %c0_12 = arith.constant 0 : index
      %c0_13 = arith.constant 0 : index
      %c0_14 = arith.constant 0 : index
      %34 = vector.load %arg4[%c0_12, %c0_13, %c0_14] : memref<1x384x128xbf16, #tpu.memory_space<vmem>>, vector<1x128x64xbf16>
      %35 = vector.shape_cast %34 : vector<1x128x64xbf16> to vector<128x64xbf16>
      %36 = arith.truncf %33 : vector<8x128xf32> to vector<8x128xbf16>
      %cst = arith.constant dense<0.000000e+00> : vector<8x64xf32>
      %37 = tpu.matmul %36, %35, %cst {dimension_numbers = #tpu.dot_dimension_numbers<[1], [0], [0], [1], [0, 0, 1, 1], [], []>} : vector<8x128xbf16>, vector<128x64xbf16>, vector<8x64xf32> -> vector<8x64xf32>
      %c0_15 = arith.constant 0 : index
      %c0_16 = arith.constant 0 : index
      %38 = vector.load %arg7[%c0_15, %c0_16] : memref<8x256xf32, #tpu.memory_space<vmem>>, vector<8x256xf32>
      %c0_17 = arith.constant 0 : index
      %c128 = arith.constant 128 : index
      %c0_18 = arith.constant 0 : index
      %39 = vector.load %arg4[%c0_17, %c128, %c0_18] : memref<1x384x128xbf16, #tpu.memory_space<vmem>>, vector<1x256x64xbf16>
      %40 = vector.shape_cast %39 : vector<1x256x64xbf16> to vector<256x64xbf16>
      %41 = arith.truncf %38 : vector<8x256xf32> to vector<8x256xbf16>
      %cst_19 = arith.constant dense<0.000000e+00> : vector<8x64xf32>
      %42 = tpu.matmul %41, %40, %cst_19 {dimension_numbers = #tpu.dot_dimension_numbers<[1], [0], [0], [1], [0, 0, 1, 1], [], []>} : vector<8x256xbf16>, vector<256x64xbf16>, vector<8x64xf32> -> vector<8x64xf32>
      %43 = arith.addf %37, %42 : vector<8x64xf32>
      %c11 = arith.constant 11 : index
      %c0_20 = arith.constant 0 : index
      %44 = vector.load %arg5[%c11, %c0_20] : memref<32x256xf32, #tpu.memory_space<vmem>>, vector<1x64xf32>
      %45 = vector.broadcast %44 : vector<1x64xf32> to vector<8x64xf32>
      %46 = arith.addf %43, %45 : vector<8x64xf32>
      %c12 = arith.constant 12 : index
      %c0_21 = arith.constant 0 : index
      %47 = vector.load %arg5[%c12, %c0_21] : memref<32x256xf32, #tpu.memory_space<vmem>>, vector<1x64xf32>
      %c13 = arith.constant 13 : index
      %c0_22 = arith.constant 0 : index
      %48 = vector.load %arg5[%c13, %c0_22] : memref<32x256xf32, #tpu.memory_space<vmem>>, vector<1x64xf32>
      %cst_23 = arith.constant dense<0.000000e+00> : vector<8xf32>
      %49 = vector.multi_reduction <add>, %46, %cst_23 [1] : vector<8x64xf32> to vector<8xf32>
      %50 = vector.shape_cast %49 : vector<8xf32> to vector<8x1xf32>
      %cst_24 = arith.constant 6.400000e+01 : f32
      %51 = vector.broadcast %cst_24 : f32 to vector<8x1xf32>
      %52 = arith.divf %50, %51 : vector<8x1xf32>
      %53 = vector.broadcast %52 : vector<8x1xf32> to vector<8x64xf32>
      %54 = arith.subf %46, %53 : vector<8x64xf32>
      %55 = arith.mulf %54, %54 : vector<8x64xf32>
      %cst_25 = arith.constant dense<0.000000e+00> : vector<8xf32>
      %56 = vector.multi_reduction <add>, %55, %cst_25 [1] : vector<8x64xf32> to vector<8xf32>
      %57 = vector.shape_cast %56 : vector<8xf32> to vector<8x1xf32>
      %cst_26 = arith.constant 6.400000e+01 : f32
      %58 = vector.broadcast %cst_26 : f32 to vector<8x1xf32>
      %59 = arith.divf %57, %58 : vector<8x1xf32>
      %60 = vector.broadcast %52 : vector<8x1xf32> to vector<8x64xf32>
      %61 = arith.subf %46, %60 : vector<8x64xf32>
      %cst_27 = arith.constant 9.99999974E-6 : f32
      %62 = vector.broadcast %cst_27 : f32 to vector<8x1xf32>
      %63 = arith.addf %59, %62 : vector<8x1xf32>
      %64 = math.rsqrt %63 : vector<8x1xf32>
      %65 = vector.broadcast %64 : vector<8x1xf32> to vector<8x64xf32>
      %66 = arith.mulf %61, %65 : vector<8x64xf32>
      %67 = vector.broadcast %47 : vector<1x64xf32> to vector<8x64xf32>
      %68 = arith.mulf %66, %67 : vector<8x64xf32>
      %69 = vector.broadcast %48 : vector<1x64xf32> to vector<8x64xf32>
      %70 = arith.addf %68, %69 : vector<8x64xf32>
      %cst_28 = arith.constant 5.000000e-01 : f32
      %71 = vector.broadcast %cst_28 : f32 to vector<8x64xf32>
      %72 = arith.mulf %71, %70 : vector<8x64xf32>
      %73 = math.tanh %72 : vector<8x64xf32>
      %cst_29 = arith.constant 5.000000e-01 : f32
      %74 = vector.broadcast %cst_29 : f32 to vector<8x64xf32>
      %75 = arith.mulf %74, %73 : vector<8x64xf32>
      %cst_30 = arith.constant 5.000000e-01 : f32
      %76 = vector.broadcast %cst_30 : f32 to vector<8x64xf32>
      %77 = arith.addf %75, %76 : vector<8x64xf32>
      %78 = arith.mulf %70, %77 : vector<8x64xf32>
      %c2 = arith.constant 2 : index
      %c0_31 = arith.constant 0 : index
      %c0_32 = arith.constant 0 : index
      %79 = vector.load %arg9[%c2, %c0_31, %c0_32] : memref<3x8x128xf32, #tpu.memory_space<vmem>>, vector<1x8x64xf32>
      %80 = vector.shape_cast %79 : vector<1x8x64xf32> to vector<8x64xf32>
      %81 = vector.shape_cast %78 : vector<8x64xf32> to vector<1x8x64xf32>
      tpu.vector_store %arg9[%c2, %c0_31, %c0_32], %81 {strides = array<i32>} : memref<3x8x128xf32, #tpu.memory_space<vmem>>, vector<1x8x64xf32>,
      %c0_33 = arith.constant 0 : index
      %c0_34 = arith.constant 0 : index
      %82 = vector.load %arg8[%c0_33, %c0_34] : memref<8x256xf32, #tpu.memory_space<vmem>>, vector<8x64xf32>
      tpu.vector_store %arg8[%c0_33, %c0_34], %78 {strides = array<i32>} : memref<8x256xf32, #tpu.memory_space<vmem>>, vector<8x64xf32>,
    } else {
    }
    %c5_i32 = arith.constant 5 : i32
    %15 = arith.cmpi eq, %arg0, %c5_i32 : i32
    %16 = arith.extui %15 : i1 to i32
    %c0_i32_5 = arith.constant 0 : i32
    %17 = arith.cmpi ne, %16, %c0_i32_5 : i32
    scf.if %17 {
      %c0 = arith.constant 0 : index
      %c0_11 = arith.constant 0 : index
      %33 = vector.load %arg8[%c0, %c0_11] : memref<8x256xf32, #tpu.memory_space<vmem>>, vector<8x64xf32>
      %c0_12 = arith.constant 0 : index
      %c0_13 = arith.constant 0 : index
      %c0_14 = arith.constant 0 : index
      %34 = vector.load %arg4[%c0_12, %c0_13, %c0_14] : memref<1x384x128xbf16, #tpu.memory_space<vmem>>, vector<1x64x64xbf16>
      %35 = vector.shape_cast %34 : vector<1x64x64xbf16> to vector<64x64xbf16>
      %36 = arith.truncf %33 : vector<8x64xf32> to vector<8x64xbf16>
      %cst = arith.constant dense<0.000000e+00> : vector<8x64xf32>
      %37 = tpu.matmul %36, %35, %cst {dimension_numbers = #tpu.dot_dimension_numbers<[1], [0], [0], [1], [0, 0, 1, 1], [], []>} : vector<8x64xbf16>, vector<64x64xbf16>, vector<8x64xf32> -> vector<8x64xf32>
      %c0_15 = arith.constant 0 : index
      %c0_16 = arith.constant 0 : index
      %38 = vector.load %arg7[%c0_15, %c0_16] : memref<8x256xf32, #tpu.memory_space<vmem>>, vector<8x256xf32>
      %c0_17 = arith.constant 0 : index
      %c64 = arith.constant 64 : index
      %c0_18 = arith.constant 0 : index
      %39 = vector.load %arg4[%c0_17, %c64, %c0_18] : memref<1x384x128xbf16, #tpu.memory_space<vmem>>, vector<1x256x64xbf16>
      %40 = vector.shape_cast %39 : vector<1x256x64xbf16> to vector<256x64xbf16>
      %41 = arith.truncf %38 : vector<8x256xf32> to vector<8x256xbf16>
      %cst_19 = arith.constant dense<0.000000e+00> : vector<8x64xf32>
      %42 = tpu.matmul %41, %40, %cst_19 {dimension_numbers = #tpu.dot_dimension_numbers<[1], [0], [0], [1], [0, 0, 1, 1], [], []>} : vector<8x256xbf16>, vector<256x64xbf16>, vector<8x64xf32> -> vector<8x64xf32>
      %43 = arith.addf %37, %42 : vector<8x64xf32>
      %c14 = arith.constant 14 : index
      %c0_20 = arith.constant 0 : index
      %44 = vector.load %arg5[%c14, %c0_20] : memref<32x256xf32, #tpu.memory_space<vmem>>, vector<1x64xf32>
      %45 = vector.broadcast %44 : vector<1x64xf32> to vector<8x64xf32>
      %46 = arith.addf %43, %45 : vector<8x64xf32>
      %c15 = arith.constant 15 : index
      %c0_21 = arith.constant 0 : index
      %47 = vector.load %arg5[%c15, %c0_21] : memref<32x256xf32, #tpu.memory_space<vmem>>, vector<1x64xf32>
      %c16 = arith.constant 16 : index
      %c0_22 = arith.constant 0 : index
      %48 = vector.load %arg5[%c16, %c0_22] : memref<32x256xf32, #tpu.memory_space<vmem>>, vector<1x64xf32>
      %cst_23 = arith.constant dense<0.000000e+00> : vector<8xf32>
      %49 = vector.multi_reduction <add>, %46, %cst_23 [1] : vector<8x64xf32> to vector<8xf32>
      %50 = vector.shape_cast %49 : vector<8xf32> to vector<8x1xf32>
      %cst_24 = arith.constant 6.400000e+01 : f32
      %51 = vector.broadcast %cst_24 : f32 to vector<8x1xf32>
      %52 = arith.divf %50, %51 : vector<8x1xf32>
      %53 = vector.broadcast %52 : vector<8x1xf32> to vector<8x64xf32>
      %54 = arith.subf %46, %53 : vector<8x64xf32>
      %55 = arith.mulf %54, %54 : vector<8x64xf32>
      %cst_25 = arith.constant dense<0.000000e+00> : vector<8xf32>
      %56 = vector.multi_reduction <add>, %55, %cst_25 [1] : vector<8x64xf32> to vector<8xf32>
      %57 = vector.shape_cast %56 : vector<8xf32> to vector<8x1xf32>
      %cst_26 = arith.constant 6.400000e+01 : f32
      %58 = vector.broadcast %cst_26 : f32 to vector<8x1xf32>
      %59 = arith.divf %57, %58 : vector<8x1xf32>
      %60 = vector.broadcast %52 : vector<8x1xf32> to vector<8x64xf32>
      %61 = arith.subf %46, %60 : vector<8x64xf32>
      %cst_27 = arith.constant 9.99999974E-6 : f32
      %62 = vector.broadcast %cst_27 : f32 to vector<8x1xf32>
      %63 = arith.addf %59, %62 : vector<8x1xf32>
      %64 = math.rsqrt %63 : vector<8x1xf32>
      %65 = vector.broadcast %64 : vector<8x1xf32> to vector<8x64xf32>
      %66 = arith.mulf %61, %65 : vector<8x64xf32>
      %67 = vector.broadcast %47 : vector<1x64xf32> to vector<8x64xf32>
      %68 = arith.mulf %66, %67 : vector<8x64xf32>
      %69 = vector.broadcast %48 : vector<1x64xf32> to vector<8x64xf32>
      %70 = arith.addf %68, %69 : vector<8x64xf32>
      %cst_28 = arith.constant 5.000000e-01 : f32
      %71 = vector.broadcast %cst_28 : f32 to vector<8x64xf32>
      %72 = arith.mulf %71, %70 : vector<8x64xf32>
      %73 = math.tanh %72 : vector<8x64xf32>
      %cst_29 = arith.constant 5.000000e-01 : f32
      %74 = vector.broadcast %cst_29 : f32 to vector<8x64xf32>
      %75 = arith.mulf %74, %73 : vector<8x64xf32>
      %cst_30 = arith.constant 5.000000e-01 : f32
      %76 = vector.broadcast %cst_30 : f32 to vector<8x64xf32>
      %77 = arith.addf %75, %76 : vector<8x64xf32>
      %78 = arith.mulf %70, %77 : vector<8x64xf32>
      %c0_31 = arith.constant 0 : index
      %c0_32 = arith.constant 0 : index
      %79 = vector.load %arg8[%c0_31, %c0_32] : memref<8x256xf32, #tpu.memory_space<vmem>>, vector<8x64xf32>
      tpu.vector_store %arg8[%c0_31, %c0_32], %78 {strides = array<i32>} : memref<8x256xf32, #tpu.memory_space<vmem>>, vector<8x64xf32>,
    } else {
    }
    %c6_i32 = arith.constant 6 : i32
    %18 = arith.cmpi eq, %arg0, %c6_i32 : i32
    %19 = arith.extui %18 : i1 to i32
    %c0_i32_6 = arith.constant 0 : i32
    %20 = arith.cmpi ne, %19, %c0_i32_6 : i32
    scf.if %20 {
      %c0 = arith.constant 0 : index
      %c0_11 = arith.constant 0 : index
      %33 = vector.load %arg8[%c0, %c0_11] : memref<8x256xf32, #tpu.memory_space<vmem>>, vector<8x64xf32>
      %c0_12 = arith.constant 0 : index
      %c0_13 = arith.constant 0 : index
      %c0_14 = arith.constant 0 : index
      %34 = vector.load %arg4[%c0_12, %c0_13, %c0_14] : memref<1x384x128xbf16, #tpu.memory_space<vmem>>, vector<1x64x64xbf16>
      %35 = vector.shape_cast %34 : vector<1x64x64xbf16> to vector<64x64xbf16>
      %36 = arith.truncf %33 : vector<8x64xf32> to vector<8x64xbf16>
      %cst = arith.constant dense<0.000000e+00> : vector<8x64xf32>
      %37 = tpu.matmul %36, %35, %cst {dimension_numbers = #tpu.dot_dimension_numbers<[1], [0], [0], [1], [0, 0, 1, 1], [], []>} : vector<8x64xbf16>, vector<64x64xbf16>, vector<8x64xf32> -> vector<8x64xf32>
      %c0_15 = arith.constant 0 : index
      %c0_16 = arith.constant 0 : index
      %38 = vector.load %arg7[%c0_15, %c0_16] : memref<8x256xf32, #tpu.memory_space<vmem>>, vector<8x256xf32>
      %c0_17 = arith.constant 0 : index
      %c64 = arith.constant 64 : index
      %c0_18 = arith.constant 0 : index
      %39 = vector.load %arg4[%c0_17, %c64, %c0_18] : memref<1x384x128xbf16, #tpu.memory_space<vmem>>, vector<1x256x64xbf16>
      %40 = vector.shape_cast %39 : vector<1x256x64xbf16> to vector<256x64xbf16>
      %41 = arith.truncf %38 : vector<8x256xf32> to vector<8x256xbf16>
      %cst_19 = arith.constant dense<0.000000e+00> : vector<8x64xf32>
      %42 = tpu.matmul %41, %40, %cst_19 {dimension_numbers = #tpu.dot_dimension_numbers<[1], [0], [0], [1], [0, 0, 1, 1], [], []>} : vector<8x256xbf16>, vector<256x64xbf16>, vector<8x64xf32> -> vector<8x64xf32>
      %43 = arith.addf %37, %42 : vector<8x64xf32>
      %c17 = arith.constant 17 : index
      %c0_20 = arith.constant 0 : index
      %44 = vector.load %arg5[%c17, %c0_20] : memref<32x256xf32, #tpu.memory_space<vmem>>, vector<1x64xf32>
      %45 = vector.broadcast %44 : vector<1x64xf32> to vector<8x64xf32>
      %46 = arith.addf %43, %45 : vector<8x64xf32>
      %c18 = arith.constant 18 : index
      %c0_21 = arith.constant 0 : index
      %47 = vector.load %arg5[%c18, %c0_21] : memref<32x256xf32, #tpu.memory_space<vmem>>, vector<1x64xf32>
      %c19 = arith.constant 19 : index
      %c0_22 = arith.constant 0 : index
      %48 = vector.load %arg5[%c19, %c0_22] : memref<32x256xf32, #tpu.memory_space<vmem>>, vector<1x64xf32>
      %cst_23 = arith.constant dense<0.000000e+00> : vector<8xf32>
      %49 = vector.multi_reduction <add>, %46, %cst_23 [1] : vector<8x64xf32> to vector<8xf32>
      %50 = vector.shape_cast %49 : vector<8xf32> to vector<8x1xf32>
      %cst_24 = arith.constant 6.400000e+01 : f32
      %51 = vector.broadcast %cst_24 : f32 to vector<8x1xf32>
      %52 = arith.divf %50, %51 : vector<8x1xf32>
      %53 = vector.broadcast %52 : vector<8x1xf32> to vector<8x64xf32>
      %54 = arith.subf %46, %53 : vector<8x64xf32>
      %55 = arith.mulf %54, %54 : vector<8x64xf32>
      %cst_25 = arith.constant dense<0.000000e+00> : vector<8xf32>
      %56 = vector.multi_reduction <add>, %55, %cst_25 [1] : vector<8x64xf32> to vector<8xf32>
      %57 = vector.shape_cast %56 : vector<8xf32> to vector<8x1xf32>
      %cst_26 = arith.constant 6.400000e+01 : f32
      %58 = vector.broadcast %cst_26 : f32 to vector<8x1xf32>
      %59 = arith.divf %57, %58 : vector<8x1xf32>
      %60 = vector.broadcast %52 : vector<8x1xf32> to vector<8x64xf32>
      %61 = arith.subf %46, %60 : vector<8x64xf32>
      %cst_27 = arith.constant 9.99999974E-6 : f32
      %62 = vector.broadcast %cst_27 : f32 to vector<8x1xf32>
      %63 = arith.addf %59, %62 : vector<8x1xf32>
      %64 = math.rsqrt %63 : vector<8x1xf32>
      %65 = vector.broadcast %64 : vector<8x1xf32> to vector<8x64xf32>
      %66 = arith.mulf %61, %65 : vector<8x64xf32>
      %67 = vector.broadcast %47 : vector<1x64xf32> to vector<8x64xf32>
      %68 = arith.mulf %66, %67 : vector<8x64xf32>
      %69 = vector.broadcast %48 : vector<1x64xf32> to vector<8x64xf32>
      %70 = arith.addf %68, %69 : vector<8x64xf32>
      %cst_28 = arith.constant 5.000000e-01 : f32
      %71 = vector.broadcast %cst_28 : f32 to vector<8x64xf32>
      %72 = arith.mulf %71, %70 : vector<8x64xf32>
      %73 = math.tanh %72 : vector<8x64xf32>
      %cst_29 = arith.constant 5.000000e-01 : f32
      %74 = vector.broadcast %cst_29 : f32 to vector<8x64xf32>
      %75 = arith.mulf %74, %73 : vector<8x64xf32>
      %cst_30 = arith.constant 5.000000e-01 : f32
      %76 = vector.broadcast %cst_30 : f32 to vector<8x64xf32>
      %77 = arith.addf %75, %76 : vector<8x64xf32>
      %78 = arith.mulf %70, %77 : vector<8x64xf32>
      %c2 = arith.constant 2 : index
      %c0_31 = arith.constant 0 : index
      %c0_32 = arith.constant 0 : index
      %79 = vector.load %arg9[%c2, %c0_31, %c0_32] : memref<3x8x128xf32, #tpu.memory_space<vmem>>, vector<1x8x64xf32>
      %80 = vector.shape_cast %79 : vector<1x8x64xf32> to vector<8x64xf32>
      %81 = arith.addf %78, %80 : vector<8x64xf32>
      %c0_33 = arith.constant 0 : index
      %c0_34 = arith.constant 0 : index
      %82 = vector.load %arg8[%c0_33, %c0_34] : memref<8x256xf32, #tpu.memory_space<vmem>>, vector<8x64xf32>
      tpu.vector_store %arg8[%c0_33, %c0_34], %81 {strides = array<i32>} : memref<8x256xf32, #tpu.memory_space<vmem>>, vector<8x64xf32>,
    } else {
    }
    %c7_i32 = arith.constant 7 : i32
    %21 = arith.cmpi eq, %arg0, %c7_i32 : i32
    %22 = arith.extui %21 : i1 to i32
    %c0_i32_7 = arith.constant 0 : i32
    %23 = arith.cmpi ne, %22, %c0_i32_7 : i32
    scf.if %23 {
      %c0 = arith.constant 0 : index
      %c0_11 = arith.constant 0 : index
      %33 = vector.load %arg8[%c0, %c0_11] : memref<8x256xf32, #tpu.memory_space<vmem>>, vector<8x64xf32>
      %c0_12 = arith.constant 0 : index
      %c0_13 = arith.constant 0 : index
      %c0_14 = arith.constant 0 : index
      %34 = vector.load %arg4[%c0_12, %c0_13, %c0_14] : memref<1x384x128xbf16, #tpu.memory_space<vmem>>, vector<1x64x128xbf16>
      %35 = vector.shape_cast %34 : vector<1x64x128xbf16> to vector<64x128xbf16>
      %36 = arith.truncf %33 : vector<8x64xf32> to vector<8x64xbf16>
      %cst = arith.constant dense<0.000000e+00> : vector<8x128xf32>
      %37 = tpu.matmul %36, %35, %cst {dimension_numbers = #tpu.dot_dimension_numbers<[1], [0], [0], [1], [0, 0, 1, 1], [], []>} : vector<8x64xbf16>, vector<64x128xbf16>, vector<8x128xf32> -> vector<8x128xf32>
      %c0_15 = arith.constant 0 : index
      %c0_16 = arith.constant 0 : index
      %38 = vector.load %arg7[%c0_15, %c0_16] : memref<8x256xf32, #tpu.memory_space<vmem>>, vector<8x256xf32>
      %c0_17 = arith.constant 0 : index
      %c64 = arith.constant 64 : index
      %c0_18 = arith.constant 0 : index
      %39 = vector.load %arg4[%c0_17, %c64, %c0_18] : memref<1x384x128xbf16, #tpu.memory_space<vmem>>, vector<1x256x128xbf16>
      %40 = vector.shape_cast %39 : vector<1x256x128xbf16> to vector<256x128xbf16>
      %41 = arith.truncf %38 : vector<8x256xf32> to vector<8x256xbf16>
      %cst_19 = arith.constant dense<0.000000e+00> : vector<8x128xf32>
      %42 = tpu.matmul %41, %40, %cst_19 {dimension_numbers = #tpu.dot_dimension_numbers<[1], [0], [0], [1], [0, 0, 1, 1], [], []>} : vector<8x256xbf16>, vector<256x128xbf16>, vector<8x128xf32> -> vector<8x128xf32>
      %43 = arith.addf %37, %42 : vector<8x128xf32>
      %c20 = arith.constant 20 : index
      %c0_20 = arith.constant 0 : index
      %44 = vector.load %arg5[%c20, %c0_20] : memref<32x256xf32, #tpu.memory_space<vmem>>, vector<1x128xf32>
      %45 = vector.broadcast %44 : vector<1x128xf32> to vector<8x128xf32>
      %46 = arith.addf %43, %45 : vector<8x128xf32>
      %c21 = arith.constant 21 : index
      %c0_21 = arith.constant 0 : index
      %47 = vector.load %arg5[%c21, %c0_21] : memref<32x256xf32, #tpu.memory_space<vmem>>, vector<1x128xf32>
      %c22 = arith.constant 22 : index
      %c0_22 = arith.constant 0 : index
      %48 = vector.load %arg5[%c22, %c0_22] : memref<32x256xf32, #tpu.memory_space<vmem>>, vector<1x128xf32>
      %cst_23 = arith.constant dense<0.000000e+00> : vector<8xf32>
      %49 = vector.multi_reduction <add>, %46, %cst_23 [1] : vector<8x128xf32> to vector<8xf32>
      %50 = vector.shape_cast %49 : vector<8xf32> to vector<8x1xf32>
      %cst_24 = arith.constant 1.280000e+02 : f32
      %51 = vector.broadcast %cst_24 : f32 to vector<8x1xf32>
      %52 = arith.divf %50, %51 : vector<8x1xf32>
      %53 = vector.broadcast %52 : vector<8x1xf32> to vector<8x128xf32>
      %54 = arith.subf %46, %53 : vector<8x128xf32>
      %55 = arith.mulf %54, %54 : vector<8x128xf32>
      %cst_25 = arith.constant dense<0.000000e+00> : vector<8xf32>
      %56 = vector.multi_reduction <add>, %55, %cst_25 [1] : vector<8x128xf32> to vector<8xf32>
      %57 = vector.shape_cast %56 : vector<8xf32> to vector<8x1xf32>
      %cst_26 = arith.constant 1.280000e+02 : f32
      %58 = vector.broadcast %cst_26 : f32 to vector<8x1xf32>
      %59 = arith.divf %57, %58 : vector<8x1xf32>
      %60 = vector.broadcast %52 : vector<8x1xf32> to vector<8x128xf32>
      %61 = arith.subf %46, %60 : vector<8x128xf32>
      %cst_27 = arith.constant 9.99999974E-6 : f32
      %62 = vector.broadcast %cst_27 : f32 to vector<8x1xf32>
      %63 = arith.addf %59, %62 : vector<8x1xf32>
      %64 = math.rsqrt %63 : vector<8x1xf32>
      %65 = vector.broadcast %64 : vector<8x1xf32> to vector<8x128xf32>
      %66 = arith.mulf %61, %65 : vector<8x128xf32>
      %67 = vector.broadcast %47 : vector<1x128xf32> to vector<8x128xf32>
      %68 = arith.mulf %66, %67 : vector<8x128xf32>
      %69 = vector.broadcast %48 : vector<1x128xf32> to vector<8x128xf32>
      %70 = arith.addf %68, %69 : vector<8x128xf32>
      %cst_28 = arith.constant 5.000000e-01 : f32
      %71 = vector.broadcast %cst_28 : f32 to vector<8x128xf32>
      %72 = arith.mulf %71, %70 : vector<8x128xf32>
      %73 = math.tanh %72 : vector<8x128xf32>
      %cst_29 = arith.constant 5.000000e-01 : f32
      %74 = vector.broadcast %cst_29 : f32 to vector<8x128xf32>
      %75 = arith.mulf %74, %73 : vector<8x128xf32>
      %cst_30 = arith.constant 5.000000e-01 : f32
      %76 = vector.broadcast %cst_30 : f32 to vector<8x128xf32>
      %77 = arith.addf %75, %76 : vector<8x128xf32>
      %78 = arith.mulf %70, %77 : vector<8x128xf32>
      %c1 = arith.constant 1 : index
      %c0_31 = arith.constant 0 : index
      %c0_32 = arith.constant 0 : index
      %79 = vector.load %arg9[%c1, %c0_31, %c0_32] : memref<3x8x128xf32, #tpu.memory_space<vmem>>, vector<1x8x128xf32>
      %80 = vector.shape_cast %79 : vector<1x8x128xf32> to vector<8x128xf32>
      %81 = arith.addf %78, %80 : vector<8x128xf32>
      %c0_33 = arith.constant 0 : index
      %c0_34 = arith.constant 0 : index
      %82 = vector.load %arg8[%c0_33, %c0_34] : memref<8x256xf32, #tpu.memory_space<vmem>>, vector<8x128xf32>
      tpu.vector_store %arg8[%c0_33, %c0_34], %81 {strides = array<i32>} : memref<8x256xf32, #tpu.memory_space<vmem>>, vector<8x128xf32>,
    } else {
    }
    %c8_i32 = arith.constant 8 : i32
    %24 = arith.cmpi eq, %arg0, %c8_i32 : i32
    %25 = arith.extui %24 : i1 to i32
    %c0_i32_8 = arith.constant 0 : i32
    %26 = arith.cmpi ne, %25, %c0_i32_8 : i32
    scf.if %26 {
      %c0 = arith.constant 0 : index
      %c0_11 = arith.constant 0 : index
      %33 = vector.load %arg8[%c0, %c0_11] : memref<8x256xf32, #tpu.memory_space<vmem>>, vector<8x128xf32>
      %c0_12 = arith.constant 0 : index
      %c0_13 = arith.constant 0 : index
      %c0_14 = arith.constant 0 : index
      %34 = vector.load %arg4[%c0_12, %c0_13, %c0_14] : memref<1x384x128xbf16, #tpu.memory_space<vmem>>, vector<1x128x128xbf16>
      %35 = vector.shape_cast %34 : vector<1x128x128xbf16> to vector<128x128xbf16>
      %36 = arith.truncf %33 : vector<8x128xf32> to vector<8x128xbf16>
      %cst = arith.constant dense<0.000000e+00> : vector<8x128xf32>
      %37 = tpu.matmul %36, %35, %cst {dimension_numbers = #tpu.dot_dimension_numbers<[1], [0], [0], [1], [0, 0, 1, 1], [], []>} : vector<8x128xbf16>, vector<128x128xbf16>, vector<8x128xf32> -> vector<8x128xf32>
      %c0_15 = arith.constant 0 : index
      %c0_16 = arith.constant 0 : index
      %38 = vector.load %arg7[%c0_15, %c0_16] : memref<8x256xf32, #tpu.memory_space<vmem>>, vector<8x256xf32>
      %c0_17 = arith.constant 0 : index
      %c128 = arith.constant 128 : index
      %c0_18 = arith.constant 0 : index
      %39 = vector.load %arg4[%c0_17, %c128, %c0_18] : memref<1x384x128xbf16, #tpu.memory_space<vmem>>, vector<1x256x128xbf16>
      %40 = vector.shape_cast %39 : vector<1x256x128xbf16> to vector<256x128xbf16>
      %41 = arith.truncf %38 : vector<8x256xf32> to vector<8x256xbf16>
      %cst_19 = arith.constant dense<0.000000e+00> : vector<8x128xf32>
      %42 = tpu.matmul %41, %40, %cst_19 {dimension_numbers = #tpu.dot_dimension_numbers<[1], [0], [0], [1], [0, 0, 1, 1], [], []>} : vector<8x256xbf16>, vector<256x128xbf16>, vector<8x128xf32> -> vector<8x128xf32>
      %43 = arith.addf %37, %42 : vector<8x128xf32>
      %c23 = arith.constant 23 : index
      %c0_20 = arith.constant 0 : index
      %44 = vector.load %arg5[%c23, %c0_20] : memref<32x256xf32, #tpu.memory_space<vmem>>, vector<1x128xf32>
      %45 = vector.broadcast %44 : vector<1x128xf32> to vector<8x128xf32>
      %46 = arith.addf %43, %45 : vector<8x128xf32>
      %c24 = arith.constant 24 : index
      %c0_21 = arith.constant 0 : index
      %47 = vector.load %arg5[%c24, %c0_21] : memref<32x256xf32, #tpu.memory_space<vmem>>, vector<1x128xf32>
      %c25 = arith.constant 25 : index
      %c0_22 = arith.constant 0 : index
      %48 = vector.load %arg5[%c25, %c0_22] : memref<32x256xf32, #tpu.memory_space<vmem>>, vector<1x128xf32>
      %cst_23 = arith.constant dense<0.000000e+00> : vector<8xf32>
      %49 = vector.multi_reduction <add>, %46, %cst_23 [1] : vector<8x128xf32> to vector<8xf32>
      %50 = vector.shape_cast %49 : vector<8xf32> to vector<8x1xf32>
      %cst_24 = arith.constant 1.280000e+02 : f32
      %51 = vector.broadcast %cst_24 : f32 to vector<8x1xf32>
      %52 = arith.divf %50, %51 : vector<8x1xf32>
      %53 = vector.broadcast %52 : vector<8x1xf32> to vector<8x128xf32>
      %54 = arith.subf %46, %53 : vector<8x128xf32>
      %55 = arith.mulf %54, %54 : vector<8x128xf32>
      %cst_25 = arith.constant dense<0.000000e+00> : vector<8xf32>
      %56 = vector.multi_reduction <add>, %55, %cst_25 [1] : vector<8x128xf32> to vector<8xf32>
      %57 = vector.shape_cast %56 : vector<8xf32> to vector<8x1xf32>
      %cst_26 = arith.constant 1.280000e+02 : f32
      %58 = vector.broadcast %cst_26 : f32 to vector<8x1xf32>
      %59 = arith.divf %57, %58 : vector<8x1xf32>
      %60 = vector.broadcast %52 : vector<8x1xf32> to vector<8x128xf32>
      %61 = arith.subf %46, %60 : vector<8x128xf32>
      %cst_27 = arith.constant 9.99999974E-6 : f32
      %62 = vector.broadcast %cst_27 : f32 to vector<8x1xf32>
      %63 = arith.addf %59, %62 : vector<8x1xf32>
      %64 = math.rsqrt %63 : vector<8x1xf32>
      %65 = vector.broadcast %64 : vector<8x1xf32> to vector<8x128xf32>
      %66 = arith.mulf %61, %65 : vector<8x128xf32>
      %67 = vector.broadcast %47 : vector<1x128xf32> to vector<8x128xf32>
      %68 = arith.mulf %66, %67 : vector<8x128xf32>
      %69 = vector.broadcast %48 : vector<1x128xf32> to vector<8x128xf32>
      %70 = arith.addf %68, %69 : vector<8x128xf32>
      %cst_28 = arith.constant 5.000000e-01 : f32
      %71 = vector.broadcast %cst_28 : f32 to vector<8x128xf32>
      %72 = arith.mulf %71, %70 : vector<8x128xf32>
      %73 = math.tanh %72 : vector<8x128xf32>
      %cst_29 = arith.constant 5.000000e-01 : f32
      %74 = vector.broadcast %cst_29 : f32 to vector<8x128xf32>
      %75 = arith.mulf %74, %73 : vector<8x128xf32>
      %cst_30 = arith.constant 5.000000e-01 : f32
      %76 = vector.broadcast %cst_30 : f32 to vector<8x128xf32>
      %77 = arith.addf %75, %76 : vector<8x128xf32>
      %78 = arith.mulf %70, %77 : vector<8x128xf32>
      %c0_31 = arith.constant 0 : index
      %c0_32 = arith.constant 0 : index
      %c0_33 = arith.constant 0 : index
      %79 = vector.load %arg9[%c0_31, %c0_32, %c0_33] : memref<3x8x128xf32, #tpu.memory_space<vmem>>, vector<1x8x128xf32>
      %80 = vector.shape_cast %79 : vector<1x8x128xf32> to vector<8x128xf32>
      %81 = arith.addf %78, %80 : vector<8x128xf32>
      %c0_34 = arith.constant 0 : index
      %c0_35 = arith.constant 0 : index
      %82 = vector.load %arg8[%c0_34, %c0_35] : memref<8x256xf32, #tpu.memory_space<vmem>>, vector<8x128xf32>
      tpu.vector_store %arg8[%c0_34, %c0_35], %81 {strides = array<i32>} : memref<8x256xf32, #tpu.memory_space<vmem>>, vector<8x128xf32>,
    } else {
    }
    %c9_i32 = arith.constant 9 : i32
    %27 = arith.cmpi eq, %arg0, %c9_i32 : i32
    %28 = arith.extui %27 : i1 to i32
    %c0_i32_9 = arith.constant 0 : i32
    %29 = arith.cmpi ne, %28, %c0_i32_9 : i32
    scf.if %29 {
      %c0 = arith.constant 0 : index
      %c0_11 = arith.constant 0 : index
      %33 = vector.load %arg8[%c0, %c0_11] : memref<8x256xf32, #tpu.memory_space<vmem>>, vector<8x128xf32>
      %c0_12 = arith.constant 0 : index
      %c0_13 = arith.constant 0 : index
      %c0_14 = arith.constant 0 : index
      %34 = vector.load %arg4[%c0_12, %c0_13, %c0_14] : memref<1x384x128xbf16, #tpu.memory_space<vmem>>, vector<1x128x128xbf16>
      %35 = vector.shape_cast %34 : vector<1x128x128xbf16> to vector<128x128xbf16>
      %36 = arith.truncf %33 : vector<8x128xf32> to vector<8x128xbf16>
      %cst = arith.constant dense<0.000000e+00> : vector<8x128xf32>
      %37 = tpu.matmul %36, %35, %cst {dimension_numbers = #tpu.dot_dimension_numbers<[1], [0], [0], [1], [0, 0, 1, 1], [], []>} : vector<8x128xbf16>, vector<128x128xbf16>, vector<8x128xf32> -> vector<8x128xf32>
      %c0_15 = arith.constant 0 : index
      %c128 = arith.constant 128 : index
      %c0_16 = arith.constant 0 : index
      %38 = vector.load %arg4[%c0_15, %c128, %c0_16] : memref<1x384x128xbf16, #tpu.memory_space<vmem>>, vector<1x128x128xbf16>
      %39 = vector.shape_cast %38 : vector<1x128x128xbf16> to vector<128x128xbf16>
      %40 = arith.truncf %33 : vector<8x128xf32> to vector<8x128xbf16>
      %cst_17 = arith.constant dense<0.000000e+00> : vector<8x128xf32>
      %41 = tpu.matmul %40, %39, %cst_17 {dimension_numbers = #tpu.dot_dimension_numbers<[1], [0], [0], [1], [0, 0, 1, 1], [], []>} : vector<8x128xbf16>, vector<128x128xbf16>, vector<8x128xf32> -> vector<8x128xf32>
      %42 = tpu.concatenate %37, %41 in 1 : vector<8x128xf32>, vector<8x128xf32> -> vector<8x256xf32>
      %c26 = arith.constant 26 : index
      %c0_18 = arith.constant 0 : index
      %43 = vector.load %arg5[%c26, %c0_18] : memref<32x256xf32, #tpu.memory_space<vmem>>, vector<1x256xf32>
      %44 = vector.broadcast %43 : vector<1x256xf32> to vector<8x256xf32>
      %45 = arith.addf %42, %44 : vector<8x256xf32>
      %c27 = arith.constant 27 : index
      %c0_19 = arith.constant 0 : index
      %46 = vector.load %arg5[%c27, %c0_19] : memref<32x256xf32, #tpu.memory_space<vmem>>, vector<1x256xf32>
      %c28 = arith.constant 28 : index
      %c0_20 = arith.constant 0 : index
      %47 = vector.load %arg5[%c28, %c0_20] : memref<32x256xf32, #tpu.memory_space<vmem>>, vector<1x256xf32>
      %cst_21 = arith.constant dense<0.000000e+00> : vector<8xf32>
      %48 = vector.multi_reduction <add>, %45, %cst_21 [1] : vector<8x256xf32> to vector<8xf32>
      %49 = vector.shape_cast %48 : vector<8xf32> to vector<8x1xf32>
      %cst_22 = arith.constant 2.560000e+02 : f32
      %50 = vector.broadcast %cst_22 : f32 to vector<8x1xf32>
      %51 = arith.divf %49, %50 : vector<8x1xf32>
      %52 = vector.broadcast %51 : vector<8x1xf32> to vector<8x256xf32>
      %53 = arith.subf %45, %52 : vector<8x256xf32>
      %54 = arith.mulf %53, %53 : vector<8x256xf32>
      %cst_23 = arith.constant dense<0.000000e+00> : vector<8xf32>
      %55 = vector.multi_reduction <add>, %54, %cst_23 [1] : vector<8x256xf32> to vector<8xf32>
      %56 = vector.shape_cast %55 : vector<8xf32> to vector<8x1xf32>
      %cst_24 = arith.constant 2.560000e+02 : f32
      %57 = vector.broadcast %cst_24 : f32 to vector<8x1xf32>
      %58 = arith.divf %56, %57 : vector<8x1xf32>
      %59 = vector.broadcast %51 : vector<8x1xf32> to vector<8x256xf32>
      %60 = arith.subf %45, %59 : vector<8x256xf32>
      %cst_25 = arith.constant 9.99999974E-6 : f32
      %61 = vector.broadcast %cst_25 : f32 to vector<8x1xf32>
      %62 = arith.addf %58, %61 : vector<8x1xf32>
      %63 = math.rsqrt %62 : vector<8x1xf32>
      %64 = vector.broadcast %63 : vector<8x1xf32> to vector<8x256xf32>
      %65 = arith.mulf %60, %64 : vector<8x256xf32>
      %66 = vector.broadcast %46 : vector<1x256xf32> to vector<8x256xf32>
      %67 = arith.mulf %65, %66 : vector<8x256xf32>
      %68 = vector.broadcast %47 : vector<1x256xf32> to vector<8x256xf32>
      %69 = arith.addf %67, %68 : vector<8x256xf32>
      %cst_26 = arith.constant 5.000000e-01 : f32
      %70 = vector.broadcast %cst_26 : f32 to vector<8x256xf32>
      %71 = arith.mulf %70, %69 : vector<8x256xf32>
      %72 = math.tanh %71 : vector<8x256xf32>
      %cst_27 = arith.constant 5.000000e-01 : f32
      %73 = vector.broadcast %cst_27 : f32 to vector<8x256xf32>
      %74 = arith.mulf %73, %72 : vector<8x256xf32>
      %cst_28 = arith.constant 5.000000e-01 : f32
      %75 = vector.broadcast %cst_28 : f32 to vector<8x256xf32>
      %76 = arith.addf %74, %75 : vector<8x256xf32>
      %77 = arith.mulf %69, %76 : vector<8x256xf32>
      %c0_29 = arith.constant 0 : index
      %c0_30 = arith.constant 0 : index
      %78 = vector.load %arg8[%c0_29, %c0_30] : memref<8x256xf32, #tpu.memory_space<vmem>>, vector<8x256xf32>
      tpu.vector_store %arg8[%c0_29, %c0_30], %77 {strides = array<i32>} : memref<8x256xf32, #tpu.memory_space<vmem>>, vector<8x256xf32>,
    } else {
    }
    %c10_i32 = arith.constant 10 : i32
    %30 = arith.cmpi eq, %arg0, %c10_i32 : i32
    %31 = arith.extui %30 : i1 to i32
    %c0_i32_10 = arith.constant 0 : i32
    %32 = arith.cmpi ne, %31, %c0_i32_10 : i32
    scf.if %32 {
      %c0 = arith.constant 0 : index
      %c0_11 = arith.constant 0 : index
      %33 = vector.load %arg8[%c0, %c0_11] : memref<8x256xf32, #tpu.memory_space<vmem>>, vector<8x256xf32>
      %c0_12 = arith.constant 0 : index
      %c0_13 = arith.constant 0 : index
      %c0_14 = arith.constant 0 : index
      %34 = vector.load %arg4[%c0_12, %c0_13, %c0_14] : memref<1x384x128xbf16, #tpu.memory_space<vmem>>, vector<1x256x128xbf16>
      %35 = vector.shape_cast %34 : vector<1x256x128xbf16> to vector<256x128xbf16>
      %36 = arith.truncf %33 : vector<8x256xf32> to vector<8x256xbf16>
      %cst = arith.constant dense<0.000000e+00> : vector<8x128xf32>
      %37 = tpu.matmul %36, %35, %cst {dimension_numbers = #tpu.dot_dimension_numbers<[1], [0], [0], [1], [0, 0, 1, 1], [], []>} : vector<8x256xbf16>, vector<256x128xbf16>, vector<8x128xf32> -> vector<8x128xf32>
      %c29 = arith.constant 29 : index
      %c0_15 = arith.constant 0 : index
      %38 = vector.load %arg5[%c29, %c0_15] : memref<32x256xf32, #tpu.memory_space<vmem>>, vector<1x128xf32>
      %39 = vector.broadcast %38 : vector<1x128xf32> to vector<8x128xf32>
      %40 = arith.addf %37, %39 : vector<8x128xf32>
      %c0_16 = arith.constant 0 : index
      %c0_17 = arith.constant 0 : index
      %41 = vector.load %arg6[%c0_16, %c0_17] : memref<8x128xf32, #tpu.memory_space<vmem>>, vector<8x128xf32>
      tpu.vector_store %arg6[%c0_16, %c0_17], %40 {strides = array<i32>} : memref<8x128xf32, #tpu.memory_space<vmem>>, vector<8x128xf32>,
    } else {
    }
    return
  }
  func.func @transform_0(%arg0: i32) -> (i32, i32) {
    %c0_i32 = arith.constant 0 : i32
    %c0_i32_0 = arith.constant 0 : i32
    %c0_i32_1 = arith.constant 0 : i32
    return %c0_i32, %c0_i32_0 : i32, i32
  }
  func.func @transform_1(%arg0: i32) -> (i32, i32) {
    %c0_i32 = arith.constant 0 : i32
    %c0_i32_0 = arith.constant 0 : i32
    %c0_i32_1 = arith.constant 0 : i32
    return %c0_i32, %c0_i32_0 : i32, i32
  }
  func.func @transform_2(%arg0: i32) -> (i32, i32) {
    %c0_i32 = arith.constant 0 : i32
    %c0_i32_0 = arith.constant 0 : i32
    %c0_i32_1 = arith.constant 0 : i32
    return %c0_i32, %c0_i32_0 : i32, i32
  }
  func.func @transform_3(%arg0: i32) -> (i32, i32, i32) {
    %c0_i32 = arith.constant 0 : i32
    %c0_i32_0 = arith.constant 0 : i32
    %c0_i32_1 = arith.constant 0 : i32
    return %arg0, %c0_i32, %c0_i32_0 : i32, i32, i32
  }
  func.func @transform_4(%arg0: i32) -> (i32, i32) {
    %c0_i32 = arith.constant 0 : i32
    %c0_i32_0 = arith.constant 0 : i32
    %c0_i32_1 = arith.constant 0 : i32
    return %c0_i32, %c0_i32_0 : i32, i32
  }
  func.func @transform_5(%arg0: i32) -> (i32, i32) {
    %c0_i32 = arith.constant 0 : i32
    %c0_i32_0 = arith.constant 0 : i32
    %c0_i32_1 = arith.constant 0 : i32
    return %c0_i32, %c0_i32_0 : i32, i32
  }
}

</mosaic_0001>

<llo_original>
// kernel: fwd.1
$region0: #{fwd.1}
  #allocation0 [shape = 'u32[]', space=smem, size = 0x4, offset = 0x4, fixed_abs, tag = 'smem constant byte address 0x4 - core index']
  #allocation1 [shape = 'u32[144,128]{1,0:T(1,128)}', space=vmem, size = 0x12000, scoped, tag = 'internal scratch']
  #allocation2 [shape = 'f32[8,256]{1,0:T(8,128)}', space=vmem, size = 0x2000, scoped, tag = 'scratch operand']
  #allocation3 [shape = 'f32[8,256]{1,0:T(8,128)}', space=vmem, size = 0x2000, scoped, tag = 'scratch operand']
  #allocation4 [shape = 'f32[3,8,128]{2,1,0:T(8,128)}', space=vmem, size = 0x3000, scoped, tag = 'scratch operand']
  %s0 = inlined_call_operand.vmem [shape: f32[8,1], index: 0, kind: input, shape index: {}]
  %s1 = inlined_call_operand.hbm [shape: f32[8,64], index: 1, kind: input, shape index: {}]
  %s2 = inlined_call_operand.hbm [shape: f32[8,128], index: 2, kind: input, shape index: {}]
  %s3 = inlined_call_operand.hbm [shape: bf16[11,384,128], index: 3, kind: input, shape index: {}]
  %s4 = inlined_call_operand.hbm [shape: f32[32,256], index: 4, kind: input, shape index: {}]
  %s5 = inlined_call_operand.hbm [shape: f32[8,128], index: 5, kind: output, shape index: {}]
  %s6 = sld [smem:[#allocation0]]
  $region113: #{fwd.1} parent=0
    _
  %s8 = ssub.s32 1, %s6
  %s9 = scalar_select 0, %s8, %s6
  $region1: #{fwd.1} parent=0
    #allocation5 [shape = 'u8[4096]{0}', space=vmem, size = 0x1000, scoped, tag = 'input window, operand 1, single buffered']
    #allocation6 [shape = 's32[2]{0}', space=sflag, size = 0x8, scoped, tag = 'scoped memory for fwd.1']
    #allocation7 [shape = 's32[2]{0}', space=sflag, size = 0x8, scoped, tag = 'scoped memory for fwd.1']
    #allocation8 [shape = 'u8[4096]{0}', space=vmem, size = 0x1000, scoped, tag = 'input window, operand 2, single buffered']
    #allocation9 [shape = 's32[1]{0}', space=sflag, size = 0x4, scoped, tag = 'scoped memory for fwd.1']
    #allocation10 [shape = 'u8[196608]{0}', space=vmem, size = 0x30000, scoped, tag = 'input window, operand 3']
    #allocation11 [shape = 'u8[32768]{0}', space=vmem, size = 0x8000, scoped, tag = 'input window, operand 4, single buffered']
    #allocation12 [shape = 'u8[4096]{0}', space=vmem, size = 0x1000, scoped, tag = 'output window, operand 0, single buffered']
    %10 = vsyncpa [#allocation6], 0
    %11 = vsyncpa [#allocation9], 0
    %12 = vsyncpa [#allocation7], 0
    loop: start=0, step=1, limit=13
    $region2: #{fwd.1} parent=1 // loop_pre_header
      _
    $region3: #{fwd.1} parent=1 // loop_header
      %s14 = sphi 0, %s18
      %p15 = scmp.ge.s32.totalorder %s14, 13
      %s22 = sphi 0, %s22
      %s24 = sphi 0, %s22
      %s25 = sphi 0, %s24
      %s39 = sphi 0, %s25
      %s43 = sphi 0, %s43
      %s45 = sphi 0, %s43
      %s46 = sphi 0, %s45
      %s60 = sphi 0, %s46
      %s64 = sphi 0, %s64
      %s66 = sphi 0, %s64
      %s67 = sphi 0, %s66
      %s81 = sphi 0, %s67
      %s87 = sphi 0, %s89
      %s90 = sphi 0, %s87
      %s91 = sphi 0, %s90
      %s107 = sphi 0, %s91
      %s111 = sphi 0, %s111
      %s113 = sphi 0, %s111
      %s114 = sphi 0, %s113
      %s128 = sphi 0, %s114
      %s132 = sphi 0, %s132
      %s134 = sphi 0, %s132
      %s135 = sphi 0, %s134
      %s149 = sphi 0, %s135
    $region4: #{fwd.1} parent=1 // loop_header_branch
      %17 = sbr.rel (%p15) target = $region8
    $region5: #{fwd.1} parent=1 // loop_body
      %s19 = ssub.s32 %s14, 1
      %s20 = ssub.s32 %s14, 2
      %s21 = sadd.s32 %s14, 1
      %s23 = sadd.s32 %s22, 1
      %p26 = scmp.eq.s32.totalorder %s14, 10
      %p27 = scmp.ne.s32.totalorder %s22, %s24
      %p28 = scmp.eq.s32.totalorder %s14, 0
      %p29 = por %p27, %p28
      %p30 = scmp.ne.s32.totalorder %s22, %s24
      %p31 = scmp.eq.s32.totalorder %s19, 10
      %p32 = por %p30, %p31
      %p33 = scmp.ne.s32.totalorder %s24, %s25
      %p34 = scmp.eq.s32.totalorder %s19, 0
      %p35 = por %p33, %p34
      %p36 = scmp.ne.s32.totalorder %s24, %s25
      %p37 = scmp.eq.s32.totalorder %s20, 10
      %p38 = por %p36, %p37
      %p40 = scmp.ne.s32.totalorder %s25, %s39
      %p41 = scmp.eq.s32.totalorder %s20, 0
      %p42 = por %p40, %p41
      %s44 = sadd.s32 %s43, 1
      %p47 = scmp.eq.s32.totalorder %s14, 10
      %p48 = scmp.ne.s32.totalorder %s43, %s45
      %p49 = scmp.eq.s32.totalorder %s14, 0
      %p50 = por %p48, %p49
      %p51 = scmp.ne.s32.totalorder %s43, %s45
      %p52 = scmp.eq.s32.totalorder %s19, 10
      %p53 = por %p51, %p52
      %p54 = scmp.ne.s32.totalorder %s45, %s46
      %p55 = scmp.eq.s32.totalorder %s19, 0
      %p56 = por %p54, %p55
      %p57 = scmp.ne.s32.totalorder %s45, %s46
      %p58 = scmp.eq.s32.totalorder %s20, 10
      %p59 = por %p57, %p58
      %p61 = scmp.ne.s32.totalorder %s46, %s60
      %p62 = scmp.eq.s32.totalorder %s20, 0
      %p63 = por %p61, %p62
      %s65 = sadd.s32 %s64, 1
      %p68 = scmp.eq.s32.totalorder %s14, 10
      %p69 = scmp.ne.s32.totalorder %s64, %s66
      %p70 = scmp.eq.s32.totalorder %s14, 0
      %p71 = por %p69, %p70
      %p72 = scmp.ne.s32.totalorder %s64, %s66
      %p73 = scmp.eq.s32.totalorder %s19, 10
      %p74 = por %p72, %p73
      %p75 = scmp.ne.s32.totalorder %s66, %s67
      %p76 = scmp.eq.s32.totalorder %s19, 0
      %p77 = por %p75, %p76
      %p78 = scmp.ne.s32.totalorder %s66, %s67
      %p79 = scmp.eq.s32.totalorder %s20, 10
      %p80 = por %p78, %p79
      %p82 = scmp.ne.s32.totalorder %s67, %s81
      %p83 = scmp.eq.s32.totalorder %s20, 0
      %p84 = por %p82, %p83
      %s85 = ssub.s32 %s14, %s21
      %p86 = scmp.eq.s32.totalorder %s85, 0
      %s88 = sadd.s32 %s87, 1
      %s89 = scalar_select %p86, %s87, %s88
      %p92 = pneg %p86
      %p93 = scmp.eq.s32.totalorder %s14, 10
      %p94 = por %p92, %p93
      %p95 = scmp.ne.s32.totalorder %s87, %s90
      %p96 = scmp.eq.s32.totalorder %s14, 0
      %p97 = por %p95, %p96
      %p98 = scmp.ne.s32.totalorder %s87, %s90
      %p99 = scmp.eq.s32.totalorder %s19, 10
      %p100 = por %p98, %p99
      %p101 = scmp.ne.s32.totalorder %s90, %s91
      %p102 = scmp.eq.s32.totalorder %s19, 0
      %p103 = por %p101, %p102
      %p104 = scmp.ne.s32.totalorder %s90, %s91
      %p105 = scmp.eq.s32.totalorder %s20, 10
      %p106 = por %p104, %p105
      %p108 = scmp.ne.s32.totalorder %s91, %s107
      %p109 = scmp.eq.s32.totalorder %s20, 0
      %p110 = por %p108, %p109
      %s112 = sadd.s32 %s111, 1
      %p115 = scmp.eq.s32.totalorder %s14, 10
      %p116 = scmp.ne.s32.totalorder %s111, %s113
      %p117 = scmp.eq.s32.totalorder %s14, 0
      %p118 = por %p116, %p117
      %p119 = scmp.ne.s32.totalorder %s111, %s113
      %p120 = scmp.eq.s32.totalorder %s19, 10
      %p121 = por %p119, %p120
      %p122 = scmp.ne.s32.totalorder %s113, %s114
      %p123 = scmp.eq.s32.totalorder %s19, 0
      %p124 = por %p122, %p123
      %p125 = scmp.ne.s32.totalorder %s113, %s114
      %p126 = scmp.eq.s32.totalorder %s20, 10
      %p127 = por %p125, %p126
      %p129 = scmp.ne.s32.totalorder %s114, %s128
      %p130 = scmp.eq.s32.totalorder %s20, 0
      %p131 = por %p129, %p130
      %s133 = sadd.s32 %s132, 1
      %p136 = scmp.eq.s32.totalorder %s14, 10
      %p137 = scmp.ne.s32.totalorder %s132, %s134
      %p138 = scmp.eq.s32.totalorder %s14, 0
      %p139 = por %p137, %p138
      %p140 = scmp.ne.s32.totalorder %s132, %s134
      %p141 = scmp.eq.s32.totalorder %s19, 10
      %p142 = por %p140, %p141
      %p143 = scmp.ne.s32.totalorder %s134, %s135
      %p144 = scmp.eq.s32.totalorder %s19, 0
      %p145 = por %p143, %p144
      %p146 = scmp.ne.s32.totalorder %s134, %s135
      %p147 = scmp.eq.s32.totalorder %s20, 10
      %p148 = por %p146, %p147
      %p150 = scmp.ne.s32.totalorder %s135, %s149
      %p151 = scmp.eq.s32.totalorder %s20, 0
      %p152 = por %p150, %p151
      %p153 = scmp.le.s32.totalorder 1, %s14
      %p154 = scmp.lt.s32.totalorder %s14, 12
      %p155 = pnand %p153, %p154
      %p156 = pneg %p155
      // Predicated region
      $region9: #{fwd.1} parent=5 // pred_check
        _
      $region10: #{fwd.1} parent=5 // pred_check_branch
        %158 = sbr.rel (%p155) target = $region12
      $region11: #{fwd.1} parent=5 // pred_region
        %s159 = ssub.s32 %s14, 1
        // Predicated region
        $region13: #{fwd.1} parent=11 // pred_check
          %p160 = pneg %p35
        $region14: #{fwd.1} parent=11 // pred_check_branch
          %162 = sbr.rel (%p160) target = $region16
        $region15: #{fwd.1} parent=11 // pred_region
          _
        $region16: #{fwd.1} parent=11 // pred_fallthru
          _
        // Predicated region
        $region17: #{fwd.1} parent=11 // pred_check
          %p163 = pneg %p56
        $region18: #{fwd.1} parent=11 // pred_check_branch
          %165 = sbr.rel (%p163) target = $region20
        $region19: #{fwd.1} parent=11 // pred_region
          %s167 = ssub.s32 128, 128
          %168 = vsyncadd [#allocation6], %s167
          %s170 = sshll.u32 [#allocation5], 4
          %s171 = int_to_ptr.vmem [resolvable:$true] %s170
          %173 = dma.hbm_to_vmem [thread:$0]  %s1, 128, %s171, [#allocation6]
        $region20: #{fwd.1} parent=11 // pred_fallthru
          _
        // Predicated region
        $region21: #{fwd.1} parent=11 // pred_check
          %p174 = pneg %p77
        $region22: #{fwd.1} parent=11 // pred_check_branch
          %176 = sbr.rel (%p174) target = $region24
        $region23: #{fwd.1} parent=11 // pred_region
          %s178 = ssub.s32 128, 128
          %179 = vsyncadd [#allocation9], %s178
          %s181 = sshll.u32 [#allocation8], 4
          %s182 = int_to_ptr.vmem [resolvable:$true] %s181
          %184 = dma.hbm_to_vmem [thread:$0]  %s2, 128, %s182, [#allocation9]
        $region24: #{fwd.1} parent=11 // pred_fallthru
          _
        // Predicated region
        $region25: #{fwd.1} parent=11 // pred_check
          %p185 = pneg %p124
        $region26: #{fwd.1} parent=11 // pred_check_branch
          %187 = sbr.rel (%p185) target = $region28
        $region27: #{fwd.1} parent=11 // pred_region
          %s189 = ssub.s32 1024, 1024
          %190 = vsyncadd [#allocation9], %s189
          %s191 = sshll.u32 [#allocation11], 4
          %s192 = int_to_ptr.vmem [resolvable:$true] %s191
          %197 = dma.hbm_to_vmem [thread:$0]  %s4, 1024, %s192, [#allocation9], 256, 256, 16
        $region28: #{fwd.1} parent=11 // pred_fallthru
          _
      $region12: #{fwd.1} parent=5 // pred_fallthru
        _
      %p198 = scmp.lt.s32.totalorder %s14, 11
      // Predicated region
      $region29: #{fwd.1} parent=5 // pred_check
        %p199 = pneg %p198
      $region30: #{fwd.1} parent=5 // pred_check_branch
        %201 = sbr.rel (%p199) target = $region32
      $region31: #{fwd.1} parent=5 // pred_region
        // Predicated region
        $region33: #{fwd.1} parent=31 // pred_check
          %p202 = pneg %p97
        $region34: #{fwd.1} parent=31 // pred_check_branch
          %204 = sbr.rel (%p202) target = $region36
        $region35: #{fwd.1} parent=31 // pred_region
          %s205 = sand.u32 %s14, 1
          %s206 = scalar_lea.sflag [#allocation6], %s205
          %s207 = sand.u32 %s87, 1
          %s208 = smul.addr %s207, 192
          %s209 = scalar_lea.vmem [#allocation10], %s208
          %s211 = ssub.s32 3072, 3072
          %212 = vsyncadd %s206, %s211
          %s213 = smul.addr %s14, 48
          %s214 = smul.addr %s213, 64
          %s215 = scalar_lea.hbm %s3, %s214
          %s216 = sshll.u32 %s209, 4
          %s217 = int_to_ptr.vmem [resolvable:$true] %s216
          %222 = dma.hbm_to_vmem [thread:$0]  %s215, 3072, %s217, %s206, 64, 64, 4
        $region36: #{fwd.1} parent=31 // pred_fallthru
          _
      $region32: #{fwd.1} parent=5 // pred_fallthru
        _
      %p223 = scmp.le.s32.totalorder 1, %s14
      %p224 = scmp.lt.s32.totalorder %s14, 12
      %p225 = pnand %p223, %p224
      %p226 = pneg %p225
      // Predicated region
      $region37: #{fwd.1} parent=5 // pred_check
        _
      $region38: #{fwd.1} parent=5 // pred_check_branch
        %228 = sbr.rel (%p225) target = $region40
      $region39: #{fwd.1} parent=5 // pred_region
        %s229 = ssub.s32 %s14, 1
        // Predicated region
        $region41: #{fwd.1} parent=39 // pred_check
          %p230 = pneg %p56
        $region42: #{fwd.1} parent=39 // pred_check_branch
          %232 = sbr.rel (%p230) target = $region44
        $region43: #{fwd.1} parent=39 // pred_region
          %233 = dma.done [#allocation6], 128
        $region44: #{fwd.1} parent=39 // pred_fallthru
          _
        // Predicated region
        $region45: #{fwd.1} parent=39 // pred_check
          %p234 = pneg %p77
        $region46: #{fwd.1} parent=39 // pred_check_branch
          %236 = sbr.rel (%p234) target = $region48
        $region47: #{fwd.1} parent=39 // pred_region
          %237 = dma.done [#allocation9], 128
        $region48: #{fwd.1} parent=39 // pred_fallthru
          _
        %s238 = sand.u32 %s19, 1
        %s239 = scalar_lea.sflag [#allocation6], %s238
        %s240 = sand.u32 %s90, 1
        %s241 = smul.addr %s240, 192
        %s242 = scalar_lea.vmem [#allocation10], %s241
        // Predicated region
        $region49: #{fwd.1} parent=39 // pred_check
          %p243 = pneg %p103
        $region50: #{fwd.1} parent=39 // pred_check_branch
          %245 = sbr.rel (%p243) target = $region52
        $region51: #{fwd.1} parent=39 // pred_region
          %246 = dma.done %s239, 3072
        $region52: #{fwd.1} parent=39 // pred_fallthru
          _
        // Predicated region
        $region53: #{fwd.1} parent=39 // pred_check
          %p247 = pneg %p124
        $region54: #{fwd.1} parent=39 // pred_check_branch
          %249 = sbr.rel (%p247) target = $region56
        $region55: #{fwd.1} parent=39 // pred_region
          %250 = dma.done [#allocation9], 1024
        $region56: #{fwd.1} parent=39 // pred_fallthru
          _
        %p251 = pneg %p35
        %p252 = pneg %p32
        %p253 = pneg %p56
        %p254 = pneg %p53
        %p255 = pneg %p77
        %p256 = pneg %p74
        %s257 = sand.u32 %s19, 1
        %s258 = scalar_lea.sflag [#allocation6], %s257
        %s259 = sand.u32 %s90, 1
        %s260 = smul.addr %s259, 192
        %s261 = scalar_lea.vmem [#allocation10], %s260
        %p262 = pneg %p103
        %p263 = pneg %p100
        %p264 = pneg %p124
        %p265 = pneg %p121
        %p266 = pneg %p145
        %p267 = pneg %p142
        %p269 = scmp.eq.s32.totalorder %s19, 0
        // Predicated region
        $region57: #{fwd.1} parent=39 // pred_check
          %p270 = pneg %p269
        $region58: #{fwd.1} parent=39 // pred_check_branch
          %272 = sbr.rel (%p270) target = $region60
        $region59: #{fwd.1} parent=39 // pred_region
          %v273 = vld [vmem:[#allocation11] ss:$0 sm:$0xff]
          %v274 = vld [vmem:[%s0] sm:$0xff]
          %276 = vset.pattern.permute.xlu0 0
          %277 = vperm.xlu0 %276, %v274
          %v278 = vpop.permute.xlu0 %277
          %v280 = vmul.f32 %v278, %v273
          %v281 = vand.u32 2147483647, %v280
          %vm282 = vcmp.le.f32.partialorder %v281, 0.7853982
          %vm283 = vcmp.lt.s32.totalorder %v280, 0
          %v284 = vand.u32 %v280, 2139095040
          %v285 = vshrl.u32 %v284, 23
          %v286 = vsub.s32 %v285, 127
          %v287 = vand.u32 2147483647, %v280
          %v288 = vand.u32 %v287, 8388607
          %v289 = vor.u32 %v288, 8388608
          %v290 = vsub.s32 0, %v289
          %v291 = vadd.s32 %v286, 1
          %vm292 = vcmp.gt.s32.totalorder %v291, 0
          %v293 = vsel %vm292, %v291, 0
          %v294 = vshrl.u32 %v293, 5
          %v295 = vand.u32 %v293, 31
          %v296 = vsub.s32 32, %v295
          %v297 = vshrl.u32 683565275, %v296
          %v298 = vshll.u32 683565275, %v295
          %v299 = vshrl.u32 2475754826, %v296
          %v300 = vor.u32 %v298, %v299
          %v301 = vshll.u32 2475754826, %v295
          %v302 = vshrl.u32 2131351028, %v296
          %v303 = vor.u32 %v301, %v302
          %v304 = vshll.u32 2131351028, %v295
          %v305 = vshrl.u32 2102212464, %v296
          %v306 = vor.u32 %v304, %v305
          %v307 = vshll.u32 2102212464, %v295
          %v308 = vshrl.u32 920167782, %v296
          %v309 = vor.u32 %v307, %v308
          %v310 = vshll.u32 920167782, %v295
          %v311 = vshrl.u32 1326507024, %v296
          %v312 = vor.u32 %v310, %v311
          %vm313 = vcmp.lt.s32.totalorder %v294, 1
          %vm314 = vcmp.lt.s32.totalorder %v294, 2
          %vm315 = vcmp.lt.s32.totalorder %v294, 3
          %vm316 = vcmp.lt.s32.totalorder %v294, 4
          %v317 = vsel %vm313, %v297, %v300
          %v318 = vsel %vm316, %v306, 2102212464
          %v319 = vsel %vm315, %v303, %v318
          %v320 = vsel %vm314, %v317, %v319
          %v321 = vsel %vm313, %v300, %v303
          %v322 = vsel %vm316, %v309, 920167782
          %v323 = vsel %vm315, %v306, %v322
          %v324 = vsel %vm314, %v321, %v323
          %v325 = vsel %vm313, %v303, %v306
          %v326 = vsel %vm316, %v312, 1326507024
          %v327 = vsel %vm315, %v309, %v326
          %v328 = vsel %vm314, %v325, %v327
          %v329 = vshll.u32 %v289, 8
          %v330 = vmul.u32.u64.compose %v329, %v328
          %v331 = vextract.low.u32 %v330
          %v332 = vextract.high.u32 %v330
          %v333 = vmul.u32.u64.compose %v329, %v324
          %v334 = vextract.low.u32 %v333
          %v335 = vextract.high.u32 %v333
          %v336 = vmul.u32 %v329, %v320
          %v337 = vadd.s32 %v332, %v334
          %vm338 = vc.u32 %v332, %v334
          %v339 = vadd.s32 %v335, 1
          %v340 = vsel %vm338, %v339, %v335
          %v341 = vadd.s32 %v336, %v340
          %v342 = vadd.s32 %v341, 536870912
          %v343 = vshrl.u32 %v342, 30
          %v344 = vshll.u32 %v343, 30
          %v345 = vsub.s32 %v341, %v344
          %vm346 = vcmp.lt.s32.totalorder %v345, 0
          %v347 = vsub.s32 0, %v345
          %v348 = vsel %vm346, %v347, %v345
          %v349 = vclz %v348
          %v350 = vsub.s32 %v349, 2
          %vm351 = vcmp.gt.s32.totalorder 0, %v350
          %v352 = vsel %vm351, 0, %v350
          %v353 = vsub.s32 32, %v352
          %v354 = vshll.u32 %v345, %v352
          %v355 = vshrl.u32 %v337, %v353
          %v356 = vor.u32 %v354, %v355
          %v357 = vsub.s32 4294967266, %v352
          %v358 = vadd.s32 %v357, 127
          %v359 = vshll.u32 %v358, 23
          %v360 = vor.u32 4788187, %v359
          %v361 = vand.u32 2147483647, %v360
          %v363 = vcvt.s32.f32 %v356
          %v364 = vmul.f32 %v363, %v361
          %v365 = vxor.u32 %v364, 2147483648
          %v366 = vsel %vm283, %v365, %v364
          %v367 = vsub.s32 4, %v343
          %v368 = vsel %vm283, %v367, %v343
          %v369 = vsel %vm282, %v280, %v366
          %v370 = vsel %vm282, 0, %v368
          %v371 = vcosq.f32.pop %v369
          %v372 = vsinq.f32.pop %v369
          %vm373 = vweird.f32 %v280
          %v374 = vand.u32 %v370, 3
          %vm375 = vcmp.lt.s32.totalorder %v374, 2
          %vm376 = vcmp.eq.s32.totalorder %v374, 0
          %v377 = vxor.u32 %v372, 2147483648
          %v378 = vsel %vm376, %v371, %v377
          %vm379 = vcmp.eq.s32.totalorder %v374, 2
          %v380 = vxor.u32 %v371, 2147483648
          %v381 = vsel %vm379, %v380, %v372
          %v382 = vsel %vm375, %v378, %v381
          %v383 = vsel %vm373, nan, %v382
          %v384 = vand.u32 2147483647, %v280
          %vm385 = vcmp.le.f32.partialorder %v384, 0.7853982
          %vm386 = vcmp.lt.s32.totalorder %v280, 0
          %v387 = vand.u32 %v280, 2139095040
          %v388 = vshrl.u32 %v387, 23
          %v389 = vsub.s32 %v388, 127
          %v390 = vand.u32 2147483647, %v280
          %v391 = vand.u32 %v390, 8388607
          %v392 = vor.u32 %v391, 8388608
          %v393 = vsub.s32 0, %v392
          %v394 = vadd.s32 %v389, 1
          %vm395 = vcmp.gt.s32.totalorder %v394, 0
          %v396 = vsel %vm395, %v394, 0
          %v397 = vshrl.u32 %v396, 5
          %v398 = vand.u32 %v396, 31
          %v399 = vsub.s32 32, %v398
          %v400 = vshrl.u32 683565275, %v399
          %v401 = vshll.u32 683565275, %v398
          %v402 = vshrl.u32 2475754826, %v399
          %v403 = vor.u32 %v401, %v402
          %v404 = vshll.u32 2475754826, %v398
          %v405 = vshrl.u32 2131351028, %v399
          %v406 = vor.u32 %v404, %v405
          %v407 = vshll.u32 2131351028, %v398
          %v408 = vshrl.u32 2102212464, %v399
          %v409 = vor.u32 %v407, %v408
          %v410 = vshll.u32 2102212464, %v398
          %v411 = vshrl.u32 920167782, %v399
          %v412 = vor.u32 %v410, %v411
          %v413 = vshll.u32 920167782, %v398
          %v414 = vshrl.u32 1326507024, %v399
          %v415 = vor.u32 %v413, %v414
          %vm416 = vcmp.lt.s32.totalorder %v397, 1
          %vm417 = vcmp.lt.s32.totalorder %v397, 2
          %vm418 = vcmp.lt.s32.totalorder %v397, 3
          %vm419 = vcmp.lt.s32.totalorder %v397, 4
          %v420 = vsel %vm416, %v400, %v403
          %v421 = vsel %vm419, %v409, 2102212464
          %v422 = vsel %vm418, %v406, %v421
          %v423 = vsel %vm417, %v420, %v422
          %v424 = vsel %vm416, %v403, %v406
          %v425 = vsel %vm419, %v412, 920167782
          %v426 = vsel %vm418, %v409, %v425
          %v427 = vsel %vm417, %v424, %v426
          %v428 = vsel %vm416, %v406, %v409
          %v429 = vsel %vm419, %v415, 1326507024
          %v430 = vsel %vm418, %v412, %v429
          %v431 = vsel %vm417, %v428, %v430
          %v432 = vshll.u32 %v392, 8
          %v433 = vmul.u32.u64.compose %v432, %v431
          %v434 = vextract.low.u32 %v433
          %v435 = vextract.high.u32 %v433
          %v436 = vmul.u32.u64.compose %v432, %v427
          %v437 = vextract.low.u32 %v436
          %v438 = vextract.high.u32 %v436
          %v439 = vmul.u32 %v432, %v423
          %v440 = vadd.s32 %v435, %v437
          %vm441 = vc.u32 %v435, %v437
          %v442 = vadd.s32 %v438, 1
          %v443 = vsel %vm441, %v442, %v438
          %v444 = vadd.s32 %v439, %v443
          %v445 = vadd.s32 %v444, 536870912
          %v446 = vshrl.u32 %v445, 30
          %v447 = vshll.u32 %v446, 30
          %v448 = vsub.s32 %v444, %v447
          %vm449 = vcmp.lt.s32.totalorder %v448, 0
          %v450 = vsub.s32 0, %v448
          %v451 = vsel %vm449, %v450, %v448
          %v452 = vclz %v451
          %v453 = vsub.s32 %v452, 2
          %vm454 = vcmp.gt.s32.totalorder 0, %v453
          %v455 = vsel %vm454, 0, %v453
          %v456 = vsub.s32 32, %v455
          %v457 = vshll.u32 %v448, %v455
          %v458 = vshrl.u32 %v440, %v456
          %v459 = vor.u32 %v457, %v458
          %v460 = vsub.s32 4294967266, %v455
          %v461 = vadd.s32 %v460, 127
          %v462 = vshll.u32 %v461, 23
          %v463 = vor.u32 4788187, %v462
          %v464 = vand.u32 2147483647, %v463
          %v466 = vcvt.s32.f32 %v459
          %v467 = vmul.f32 %v466, %v464
          %v468 = vxor.u32 %v467, 2147483648
          %v469 = vsel %vm386, %v468, %v467
          %v470 = vsub.s32 4, %v446
          %v471 = vsel %vm386, %v470, %v446
          %v472 = vsel %vm385, %v280, %v469
          %v473 = vsel %vm385, 0, %v471
          %v474 = vcosq.f32.pop %v472
          %v475 = vsinq.f32.pop %v472
          %vm476 = vweird.f32 %v280
          %v477 = vadd.s32 %v473, 3
          %v478 = vand.u32 %v477, 3
          %vm479 = vcmp.lt.s32.totalorder %v478, 2
          %vm480 = vcmp.eq.s32.totalorder %v478, 0
          %v481 = vxor.u32 %v475, 2147483648
          %v482 = vsel %vm480, %v474, %v481
          %vm483 = vcmp.eq.s32.totalorder %v478, 2
          %v484 = vxor.u32 %v474, 2147483648
          %v485 = vsel %vm483, %v484, %v475
          %v486 = vsel %vm479, %v482, %v485
          %v487 = vsel %vm476, nan, %v486
          %v488 = vld [vmem:[%s242] sm:$0xf]
          %v489 = vld [vmem:[%s242 + $0x4] sm:$0xf]
          %v490 = vld [vmem:[%s242 + $0x8] sm:$0xf]
          %v491 = vld [vmem:[%s242 + $0xc] sm:$0xf]
          %v492 = vld [vmem:[%s242 + $0x10] sm:$0xf]
          %v493 = vld [vmem:[%s242 + $0x14] sm:$0xf]
          %v494 = vld [vmem:[%s242 + $0x18] sm:$0xf]
          %v495 = vld [vmem:[%s242 + $0x1c] sm:$0xf]
          %v496 = vld [vmem:[%s242 + $0x20] sm:$0xf]
          %v497 = vld [vmem:[%s242 + $0x24] sm:$0xf]
          %v498 = vld [vmem:[%s242 + $0x28] sm:$0xf]
          %v499 = vld [vmem:[%s242 + $0x2c] sm:$0xf]
          %v500 = vld [vmem:[%s242 + $0x30] sm:$0xf]
          %v501 = vld [vmem:[%s242 + $0x34] sm:$0xf]
          %v502 = vld [vmem:[%s242 + $0x38] sm:$0xf]
          %v503 = vld [vmem:[%s242 + $0x3c] sm:$0xf]
          %v504 = vld [vmem:[%s242 + $0x40] sm:$0xf]
          %v505 = vld [vmem:[%s242 + $0x44] sm:$0xf]
          %v506 = vld [vmem:[%s242 + $0x48] sm:$0xf]
          %v507 = vld [vmem:[%s242 + $0x4c] sm:$0xf]
          %v508 = vld [vmem:[%s242 + $0x50] sm:$0xf]
          %v509 = vld [vmem:[%s242 + $0x54] sm:$0xf]
          %v510 = vld [vmem:[%s242 + $0x58] sm:$0xf]
          %v511 = vld [vmem:[%s242 + $0x5c] sm:$0xf]
          %v512 = vld [vmem:[%s242 + $0x60] sm:$0xf]
          %v513 = vld [vmem:[%s242 + $0x64] sm:$0xf]
          %v514 = vld [vmem:[%s242 + $0x68] sm:$0xf]
          %v515 = vld [vmem:[%s242 + $0x6c] sm:$0xf]
          %v516 = vld [vmem:[%s242 + $0x70] sm:$0xf]
          %v517 = vld [vmem:[%s242 + $0x74] sm:$0xf]
          %v518 = vld [vmem:[%s242 + $0x78] sm:$0xf]
          %v519 = vld [vmem:[%s242 + $0x7c] sm:$0xf]
          %v520 = vpack.c.bf16 %v383, %v383
          %v521 = vpack.c.bf16 %v487, %v487
          %v522 = vld [vmem:[#allocation11 + $0x1] ss:$0 sm:$0xff]
          %v555 = vunpack.c.l.b16 %v488
          %v556 = vunpack.c.l.b16 %v489
          %v557 = vunpack.c.l.b16 %v490
          %v558 = vunpack.c.l.b16 %v491
          %v559 = vunpack.c.l.b16 %v492
          %v560 = vunpack.c.l.b16 %v493
          %v561 = vunpack.c.l.b16 %v494
          %v562 = vunpack.c.l.b16 %v495
          %v563 = vunpack.c.l.b16 %v496
          %v564 = vunpack.c.l.b16 %v497
          %v565 = vunpack.c.l.b16 %v498
          %v566 = vunpack.c.l.b16 %v499
          %v567 = vunpack.c.l.b16 %v500
          %v568 = vunpack.c.l.b16 %v501
          %v569 = vunpack.c.l.b16 %v502
          %v570 = vunpack.c.l.b16 %v503
          %v571 = vunpack.c.l.b16 %v504
          %v572 = vunpack.c.l.b16 %v505
          %v573 = vunpack.c.l.b16 %v506
          %v574 = vunpack.c.l.b16 %v507
          %v575 = vunpack.c.l.b16 %v508
          %v576 = vunpack.c.l.b16 %v509
          %v577 = vunpack.c.l.b16 %v510
          %v578 = vunpack.c.l.b16 %v511
          %v579 = vunpack.c.l.b16 %v512
          %v580 = vunpack.c.l.b16 %v513
          %v581 = vunpack.c.l.b16 %v514
          %v582 = vunpack.c.l.b16 %v515
          %v583 = vunpack.c.l.b16 %v516
          %v584 = vunpack.c.l.b16 %v517
          %v585 = vunpack.c.l.b16 %v518
          %v586 = vunpack.c.l.b16 %v519
          %v587 = vpack.c.b16 %v556, %v555
          %v588 = vpack.c.b16 %v558, %v557
          %v589 = vpack.c.b16 %v560, %v559
          %v590 = vpack.c.b16 %v562, %v561
          %v591 = vpack.c.b16 %v564, %v563
          %v592 = vpack.c.b16 %v566, %v565
          %v593 = vpack.c.b16 %v568, %v567
          %v594 = vpack.c.b16 %v570, %v569
          %v595 = vpack.c.b16 %v572, %v571
          %v596 = vpack.c.b16 %v574, %v573
          %v597 = vpack.c.b16 %v576, %v575
          %v598 = vpack.c.b16 %v578, %v577
          %v599 = vpack.c.b16 %v580, %v579
          %v600 = vpack.c.b16 %v582, %v581
          %v601 = vpack.c.b16 %v584, %v583
          %v602 = vpack.c.b16 %v586, %v585
          %619 = vmatprep.subr.bf16.mxu0 0
          %620 = vmatpush1.bf16.msra.mxu0 %v587
          %621 = vmatprep.subr.bf16.mxu0 0
          %622 = vmatpush1.bf16.msra.mxu0 %v588
          %623 = vmatprep.subr.bf16.mxu0 0
          %624 = vmatpush1.bf16.msra.mxu0 %v589
          %625 = vmatprep.subr.bf16.mxu0 0
          %626 = vmatpush1.bf16.msra.mxu0 %v590
          %627 = vmatprep.subr.bf16.mxu0 0
          %628 = vmatpush1.bf16.msra.mxu0 %v591
          %629 = vmatprep.subr.bf16.mxu0 0
          %630 = vmatpush1.bf16.msra.mxu0 %v592
          %631 = vmatprep.subr.bf16.mxu0 0
          %632 = vmatpush1.bf16.msra.mxu0 %v593
          %633 = vmatprep.subr.bf16.mxu0 0
          %634 = vmatpush1.bf16.msra.mxu0 %v594
          %635 = vmatprep.subr.bf16.mxu0 0
          %636 = vmatpush1.bf16.msra.mxu0 %v595
          %637 = vmatprep.subr.bf16.mxu0 0
          %638 = vmatpush1.bf16.msra.mxu0 %v596
          %639 = vmatprep.subr.bf16.mxu0 0
          %640 = vmatpush1.bf16.msra.mxu0 %v597
          %641 = vmatprep.subr.bf16.mxu0 0
          %642 = vmatpush1.bf16.msra.mxu0 %v598
          %643 = vmatprep.subr.bf16.mxu0 0
          %644 = vmatpush1.bf16.msra.mxu0 %v599
          %645 = vmatprep.subr.bf16.mxu0 0
          %646 = vmatpush1.bf16.msra.mxu0 %v600
          %647 = vmatprep.subr.bf16.mxu0 0
          %648 = vmatpush1.bf16.msra.mxu0 %v601
          %649 = vmatprep.subr.bf16.mxu0 0
          %650 = vmatpush1.bf16.msra.mxu0 %v602
          %651 = vmatprep.mubr.bf16.mxu0 %v521
          %652 = vmatmul.mubr.bf16.gmra.mrb[0].mxu0 %v520
          %v653 = vpop.f32.mrb[0].mxu0
          %v654 = vadd.f32 %v522, %v653
          %v655 = vpop.f32.mrb[0].mxu0
          %v656 = vpop.f32.mrb[0].mxu0
          %v657 = vpop.f32.mrb[0].mxu0
          %658 = vdwg.mxu0
          %v659 = vmul.f32 %v654, 0.5
          %v660 = vtanh.pop %v659
          %v661 = vmul.f32 %v660, 0.5
          %v662 = vadd.f32 %v661, 0.5
          %v663 = vmul.f32 %v654, %v662
          %v664 = vld [vmem:[%s242 + $0x80] sm:$0xf]
          %v665 = vld [vmem:[%s242 + $0x84] sm:$0xf]
          %v666 = vld [vmem:[%s242 + $0x88] sm:$0xf]
          %v667 = vld [vmem:[%s242 + $0x8c] sm:$0xf]
          %v668 = vld [vmem:[%s242 + $0x90] sm:$0xf]
          %v669 = vld [vmem:[%s242 + $0x94] sm:$0xf]
          %v670 = vld [vmem:[%s242 + $0x98] sm:$0xf]
          %v671 = vld [vmem:[%s242 + $0x9c] sm:$0xf]
          %v672 = vld [vmem:[%s242 + $0xa0] sm:$0xf]
          %v673 = vld [vmem:[%s242 + $0xa4] sm:$0xf]
          %v674 = vld [vmem:[%s242 + $0xa8] sm:$0xf]
          %v675 = vld [vmem:[%s242 + $0xac] sm:$0xf]
          %v676 = vld [vmem:[%s242 + $0xb0] sm:$0xf]
          %v677 = vld [vmem:[%s242 + $0xb4] sm:$0xf]
          %v678 = vld [vmem:[%s242 + $0xb8] sm:$0xf]
          %v679 = vld [vmem:[%s242 + $0xbc] sm:$0xf]
          %v680 = vpack.c.bf16 %v663, %v663
          %v681 = vld [vmem:[#allocation11 + $0x2] ss:$0 sm:$0xff]
          %v698 = vunpack.c.l.b16 %v664
          %v699 = vunpack.c.l.b16 %v665
          %v700 = vunpack.c.l.b16 %v666
          %v701 = vunpack.c.l.b16 %v667
          %v702 = vunpack.c.l.b16 %v668
          %v703 = vunpack.c.l.b16 %v669
          %v704 = vunpack.c.l.b16 %v670
          %v705 = vunpack.c.l.b16 %v671
          %v706 = vunpack.c.l.b16 %v672
          %v707 = vunpack.c.l.b16 %v673
          %v708 = vunpack.c.l.b16 %v674
          %v709 = vunpack.c.l.b16 %v675
          %v710 = vunpack.c.l.b16 %v676
          %v711 = vunpack.c.l.b16 %v677
          %v712 = vunpack.c.l.b16 %v678
          %v713 = vunpack.c.l.b16 %v679
          %v714 = vpack.c.b16 %v699, %v698
          %v715 = vpack.c.b16 %v701, %v700
          %v716 = vpack.c.b16 %v703, %v702
          %v717 = vpack.c.b16 %v705, %v704
          %v718 = vpack.c.b16 %v707, %v706
          %v719 = vpack.c.b16 %v709, %v708
          %v720 = vpack.c.b16 %v711, %v710
          %v721 = vpack.c.b16 %v713, %v712
          %730 = vmatprep.subr.bf16.mxu0 0
          %731 = vmatpush1.bf16.msra.mxu0 %v714
          %732 = vmatprep.subr.bf16.mxu0 0
          %733 = vmatpush1.bf16.msra.mxu0 %v715
          %734 = vmatprep.subr.bf16.mxu0 0
          %735 = vmatpush1.bf16.msra.mxu0 %v716
          %736 = vmatprep.subr.bf16.mxu0 0
          %737 = vmatpush1.bf16.msra.mxu0 %v717
          %738 = vmatprep.subr.bf16.mxu0 0
          %739 = vmatpush1.bf16.msra.mxu0 %v718
          %740 = vmatprep.subr.bf16.mxu0 0
          %741 = vmatpush1.bf16.msra.mxu0 %v719
          %742 = vmatprep.subr.bf16.mxu0 0
          %743 = vmatpush1.bf16.msra.mxu0 %v720
          %744 = vmatprep.subr.bf16.mxu0 0
          %745 = vmatpush1.bf16.msra.mxu0 %v721
          %746 = vmatprep.subr.bf16.mxu0 0
          %747 = vmatpush1.bf16.msra.mxu0 0
          %748 = vmatprep.subr.bf16.mxu0 0
          %749 = vmatpush1.bf16.msra.mxu0 0
          %750 = vmatprep.subr.bf16.mxu0 0
          %751 = vmatpush1.bf16.msra.mxu0 0
          %752 = vmatprep.subr.bf16.mxu0 0
          %753 = vmatpush1.bf16.msra.mxu0 0
          %754 = vmatprep.subr.bf16.mxu0 0
          %755 = vmatpush1.bf16.msra.mxu0 0
          %756 = vmatprep.subr.bf16.mxu0 0
          %757 = vmatpush1.bf16.msra.mxu0 0
          %758 = vmatprep.subr.bf16.mxu0 0
          %759 = vmatpush1.bf16.msra.mxu0 0
          %760 = vmatprep.subr.bf16.mxu0 0
          %761 = vmatpush1.bf16.msra.mxu0 0
          %762 = vmatprep.mubr.bf16.mxu0 0
          %763 = vmatmul.mubr.bf16.gmra.mrb[0].mxu0 %v680
          %v764 = vpop.f32.mrb[0].mxu0
          %v765 = vadd.f32 %v681, %v764
          %v766 = vpop.f32.mrb[0].mxu0
          %v767 = vpop.f32.mrb[0].mxu0
          %v768 = vpop.f32.mrb[0].mxu0
          %769 = vdwg.mxu0
          %v770 = vmul.f32 %v765, 0.5
          %v771 = vtanh.pop %v770
          %v772 = vmul.f32 %v771, 0.5
          %v773 = vadd.f32 %v772, 0.5
          %v774 = vmul.f32 %v765, %v773
          %775 = vst [vmem:[#allocation2] sm:$0xff] %v774
        $region60: #{fwd.1} parent=39 // pred_fallthru
          _
        %p776 = scmp.eq.s32.totalorder %s19, 1
        // Predicated region
        $region61: #{fwd.1} parent=39 // pred_check
          %p777 = pneg %p776
        $region62: #{fwd.1} parent=39 // pred_check_branch
          %779 = sbr.rel (%p777) target = $region64
        $region63: #{fwd.1} parent=39 // pred_region
          %v780 = vld [vmem:[#allocation5] sm:$0xff]
          %v781 = vld [vmem:[%s242] sm:$0xf]
          %v782 = vld [vmem:[%s242 + $0x4] sm:$0xf]
          %v783 = vld [vmem:[%s242 + $0x8] sm:$0xf]
          %v784 = vld [vmem:[%s242 + $0xc] sm:$0xf]
          %v785 = vld [vmem:[%s242 + $0x10] sm:$0xf]
          %v786 = vld [vmem:[%s242 + $0x14] sm:$0xf]
          %v787 = vld [vmem:[%s242 + $0x18] sm:$0xf]
          %v788 = vld [vmem:[%s242 + $0x1c] sm:$0xf]
          %v789 = vpack.c.bf16 %v780, %v780
          %v790 = vld [vmem:[#allocation11 + $0x3] ss:$0 sm:$0xff]
          %v799 = vunpack.c.l.b16 %v781
          %v800 = vunpack.c.l.b16 %v782
          %v801 = vunpack.c.l.b16 %v783
          %v802 = vunpack.c.l.b16 %v784
          %v803 = vunpack.c.l.b16 %v785
          %v804 = vunpack.c.l.b16 %v786
          %v805 = vunpack.c.l.b16 %v787
          %v806 = vunpack.c.l.b16 %v788
          %v807 = vpack.c.b16 %v800, %v799
          %v808 = vpack.c.b16 %v802, %v801
          %v809 = vpack.c.b16 %v804, %v803
          %v810 = vpack.c.b16 %v806, %v805
          %vm815 = vcmask 523264
          %v817 = vsel %vm815, %v789, 0
          %819 = vmatprep.subr.bf16.mxu0 0
          %820 = vmatpush1.bf16.msra.mxu0 %v807
          %821 = vmatprep.subr.bf16.mxu0 0
          %822 = vmatpush1.bf16.msra.mxu0 %v808
          %823 = vmatprep.subr.bf16.mxu0 0
          %824 = vmatpush1.bf16.msra.mxu0 %v809
          %825 = vmatprep.subr.bf16.mxu0 0
          %826 = vmatpush1.bf16.msra.mxu0 %v810
          %827 = vmatprep.subr.bf16.mxu0 0
          %828 = vmatpush1.bf16.msra.mxu0 0
          %829 = vmatprep.subr.bf16.mxu0 0
          %830 = vmatpush1.bf16.msra.mxu0 0
          %831 = vmatprep.subr.bf16.mxu0 0
          %832 = vmatpush1.bf16.msra.mxu0 0
          %833 = vmatprep.subr.bf16.mxu0 0
          %834 = vmatpush1.bf16.msra.mxu0 0
          %835 = vmatprep.subr.bf16.mxu0 0
          %836 = vmatpush1.bf16.msra.mxu0 0
          %837 = vmatprep.subr.bf16.mxu0 0
          %838 = vmatpush1.bf16.msra.mxu0 0
          %839 = vmatprep.subr.bf16.mxu0 0
          %840 = vmatpush1.bf16.msra.mxu0 0
          %841 = vmatprep.subr.bf16.mxu0 0
          %842 = vmatpush1.bf16.msra.mxu0 0
          %843 = vmatprep.subr.bf16.mxu0 0
          %844 = vmatpush1.bf16.msra.mxu0 0
          %845 = vmatprep.subr.bf16.mxu0 0
          %846 = vmatpush1.bf16.msra.mxu0 0
          %847 = vmatprep.subr.bf16.mxu0 0
          %848 = vmatpush1.bf16.msra.mxu0 0
          %849 = vmatprep.subr.bf16.mxu0 0
          %850 = vmatpush1.bf16.msra.mxu0 0
          %851 = vmatprep.mubr.bf16.mxu0 0
          %852 = vmatmul.mubr.bf16.gmra.mrb[0].mxu0 %v817
          %v853 = vpop.f32.mrb[0].mxu0
          %v854 = vadd.f32 %v790, %v853
          %v855 = vpop.f32.mrb[0].mxu0
          %v856 = vpop.f32.mrb[0].mxu0
          %v857 = vpop.f32.mrb[0].mxu0
          %858 = vdwg.mxu0
          %v859 = vmul.f32 %v854, 0.5
          %v860 = vtanh.pop %v859
          %v861 = vmul.f32 %v860, 0.5
          %v862 = vadd.f32 %v861, 0.5
          %v863 = vmul.f32 %v854, %v862
          %v864 = vld [vmem:[%s242 + $0x20] sm:$0xf]
          %v865 = vld [vmem:[%s242 + $0x24] sm:$0xf]
          %v866 = vld [vmem:[%s242 + $0x28] sm:$0xf]
          %v867 = vld [vmem:[%s242 + $0x2c] sm:$0xf]
          %v868 = vld [vmem:[%s242 + $0x30] sm:$0xf]
          %v869 = vld [vmem:[%s242 + $0x34] sm:$0xf]
          %v870 = vld [vmem:[%s242 + $0x38] sm:$0xf]
          %v871 = vld [vmem:[%s242 + $0x3c] sm:$0xf]
          %v872 = vld [vmem:[%s242 + $0x40] sm:$0xf]
          %v873 = vld [vmem:[%s242 + $0x44] sm:$0xf]
          %v874 = vld [vmem:[%s242 + $0x48] sm:$0xf]
          %v875 = vld [vmem:[%s242 + $0x4c] sm:$0xf]
          %v876 = vld [vmem:[%s242 + $0x50] sm:$0xf]
          %v877 = vld [vmem:[%s242 + $0x54] sm:$0xf]
          %v878 = vld [vmem:[%s242 + $0x58] sm:$0xf]
          %v879 = vld [vmem:[%s242 + $0x5c] sm:$0xf]
          %v880 = vpack.c.bf16 %v863, %v863
          %v881 = vld [vmem:[#allocation11 + $0x4] ss:$0 sm:$0xff]
          %v898 = vunpack.c.l.b16 %v864
          %v899 = vunpack.c.l.b16 %v865
          %v900 = vunpack.c.l.b16 %v866
          %v901 = vunpack.c.l.b16 %v867
          %v902 = vunpack.c.l.b16 %v868
          %v903 = vunpack.c.l.b16 %v869
          %v904 = vunpack.c.l.b16 %v870
          %v905 = vunpack.c.l.b16 %v871
          %v906 = vunpack.c.l.b16 %v872
          %v907 = vunpack.c.l.b16 %v873
          %v908 = vunpack.c.l.b16 %v874
          %v909 = vunpack.c.l.b16 %v875
          %v910 = vunpack.c.l.b16 %v876
          %v911 = vunpack.c.l.b16 %v877
          %v912 = vunpack.c.l.b16 %v878
          %v913 = vunpack.c.l.b16 %v879
          %v914 = vpack.c.b16 %v899, %v898
          %v915 = vpack.c.b16 %v901, %v900
          %v916 = vpack.c.b16 %v903, %v902
          %v917 = vpack.c.b16 %v905, %v904
          %v918 = vpack.c.b16 %v907, %v906
          %v919 = vpack.c.b16 %v909, %v908
          %v920 = vpack.c.b16 %v911, %v910
          %v921 = vpack.c.b16 %v913, %v912
          %930 = vmatprep.subr.bf16.mxu0 0
          %931 = vmatpush1.bf16.msra.mxu0 %v914
          %932 = vmatprep.subr.bf16.mxu0 0
          %933 = vmatpush1.bf16.msra.mxu0 %v915
          %934 = vmatprep.subr.bf16.mxu0 0
          %935 = vmatpush1.bf16.msra.mxu0 %v916
          %936 = vmatprep.subr.bf16.mxu0 0
          %937 = vmatpush1.bf16.msra.mxu0 %v917
          %938 = vmatprep.subr.bf16.mxu0 0
          %939 = vmatpush1.bf16.msra.mxu0 %v918
          %940 = vmatprep.subr.bf16.mxu0 0
          %941 = vmatpush1.bf16.msra.mxu0 %v919
          %942 = vmatprep.subr.bf16.mxu0 0
          %943 = vmatpush1.bf16.msra.mxu0 %v920
          %944 = vmatprep.subr.bf16.mxu0 0
          %945 = vmatpush1.bf16.msra.mxu0 %v921
          %946 = vmatprep.subr.bf16.mxu0 0
          %947 = vmatpush1.bf16.msra.mxu0 0
          %948 = vmatprep.subr.bf16.mxu0 0
          %949 = vmatpush1.bf16.msra.mxu0 0
          %950 = vmatprep.subr.bf16.mxu0 0
          %951 = vmatpush1.bf16.msra.mxu0 0
          %952 = vmatprep.subr.bf16.mxu0 0
          %953 = vmatpush1.bf16.msra.mxu0 0
          %954 = vmatprep.subr.bf16.mxu0 0
          %955 = vmatpush1.bf16.msra.mxu0 0
          %956 = vmatprep.subr.bf16.mxu0 0
          %957 = vmatpush1.bf16.msra.mxu0 0
          %958 = vmatprep.subr.bf16.mxu0 0
          %959 = vmatpush1.bf16.msra.mxu0 0
          %960 = vmatprep.subr.bf16.mxu0 0
          %961 = vmatpush1.bf16.msra.mxu0 0
          %962 = vmatprep.mubr.bf16.mxu0 0
          %963 = vmatmul.mubr.bf16.gmra.mrb[0].mxu0 %v880
          %v964 = vpop.f32.mrb[0].mxu0
          %v965 = vadd.f32 %v881, %v964
          %v966 = vpop.f32.mrb[0].mxu0
          %v967 = vpop.f32.mrb[0].mxu0
          %v968 = vpop.f32.mrb[0].mxu0
          %969 = vdwg.mxu0
          %v970 = vmul.f32 %v965, 0.5
          %v971 = vtanh.pop %v970
          %v972 = vmul.f32 %v971, 0.5
          %v973 = vadd.f32 %v972, 0.5
          %v974 = vmul.f32 %v965, %v973
          %975 = vst [vmem:[#allocation2 + $0x8] sm:$0xff] %v974
        $region64: #{fwd.1} parent=39 // pred_fallthru
          _
        %p976 = scmp.eq.s32.totalorder %s19, 2
        // Predicated region
        $region65: #{fwd.1} parent=39 // pred_check
          %p977 = pneg %p976
        $region66: #{fwd.1} parent=39 // pred_check_branch
          %979 = sbr.rel (%p977) target = $region68
        $region67: #{fwd.1} parent=39 // pred_region
          %v980 = vld [vmem:[#allocation8] sm:$0xff]
          %v981 = vld [vmem:[%s242] sm:$0xf]
          %v982 = vld [vmem:[%s242 + $0x4] sm:$0xf]
          %v983 = vld [vmem:[%s242 + $0x8] sm:$0xf]
          %v984 = vld [vmem:[%s242 + $0xc] sm:$0xf]
          %v985 = vld [vmem:[%s242 + $0x10] sm:$0xf]
          %v986 = vld [vmem:[%s242 + $0x14] sm:$0xf]
          %v987 = vld [vmem:[%s242 + $0x18] sm:$0xf]
          %v988 = vld [vmem:[%s242 + $0x1c] sm:$0xf]
          %v989 = vld [vmem:[%s242 + $0x20] sm:$0xf]
          %v990 = vld [vmem:[%s242 + $0x24] sm:$0xf]
          %v991 = vld [vmem:[%s242 + $0x28] sm:$0xf]
          %v992 = vld [vmem:[%s242 + $0x2c] sm:$0xf]
          %v993 = vld [vmem:[%s242 + $0x30] sm:$0xf]
          %v994 = vld [vmem:[%s242 + $0x34] sm:$0xf]
          %v995 = vld [vmem:[%s242 + $0x38] sm:$0xf]
          %v996 = vld [vmem:[%s242 + $0x3c] sm:$0xf]
          %v997 = vpack.c.bf16 %v980, %v980
          %v998 = vld [vmem:[#allocation2] sm:$0xff]
          %v999 = vld [vmem:[#allocation2 + $0x8] sm:$0xff]
          %v1000 = vld [vmem:[%s242 + $0x40] sm:$0xf]
          %v1001 = vld [vmem:[%s242 + $0x44] sm:$0xf]
          %v1002 = vld [vmem:[%s242 + $0x48] sm:$0xf]
          %v1003 = vld [vmem:[%s242 + $0x4c] sm:$0xf]
          %v1004 = vld [vmem:[%s242 + $0x50] sm:$0xf]
          %v1005 = vld [vmem:[%s242 + $0x54] sm:$0xf]
          %v1006 = vld [vmem:[%s242 + $0x58] sm:$0xf]
          %v1007 = vld [vmem:[%s242 + $0x5c] sm:$0xf]
          %v1008 = vld [vmem:[%s242 + $0x60] sm:$0xf]
          %v1009 = vld [vmem:[%s242 + $0x64] sm:$0xf]
          %v1010 = vld [vmem:[%s242 + $0x68] sm:$0xf]
          %v1011 = vld [vmem:[%s242 + $0x6c] sm:$0xf]
          %v1012 = vld [vmem:[%s242 + $0x70] sm:$0xf]
          %v1013 = vld [vmem:[%s242 + $0x74] sm:$0xf]
          %v1014 = vld [vmem:[%s242 + $0x78] sm:$0xf]
          %v1015 = vld [vmem:[%s242 + $0x7c] sm:$0xf]
          %v1016 = vld [vmem:[%s242 + $0x80] sm:$0xf]
          %v1017 = vld [vmem:[%s242 + $0x84] sm:$0xf]
          %v1018 = vld [vmem:[%s242 + $0x88] sm:$0xf]
          %v1019 = vld [vmem:[%s242 + $0x8c] sm:$0xf]
          %v1020 = vld [vmem:[%s242 + $0x90] sm:$0xf]
          %v1021 = vld [vmem:[%s242 + $0x94] sm:$0xf]
          %v1022 = vld [vmem:[%s242 + $0x98] sm:$0xf]
          %v1023 = vld [vmem:[%s242 + $0x9c] sm:$0xf]
          %v1024 = vld [vmem:[%s242 + $0xa0] sm:$0xf]
          %v1025 = vld [vmem:[%s242 + $0xa4] sm:$0xf]
          %v1026 = vld [vmem:[%s242 + $0xa8] sm:$0xf]
          %v1027 = vld [vmem:[%s242 + $0xac] sm:$0xf]
          %v1028 = vld [vmem:[%s242 + $0xb0] sm:$0xf]
          %v1029 = vld [vmem:[%s242 + $0xb4] sm:$0xf]
          %v1030 = vld [vmem:[%s242 + $0xb8] sm:$0xf]
          %v1031 = vld [vmem:[%s242 + $0xbc] sm:$0xf]
          %v1032 = vpack.c.bf16 %v998, %v998
          %v1033 = vpack.c.bf16 %v999, %v999
          %v1066 = vunpack.c.l.b16 %v1000
          %v1067 = vunpack.c.l.b16 %v1001
          %v1068 = vunpack.c.l.b16 %v1002
          %v1069 = vunpack.c.l.b16 %v1003
          %v1070 = vunpack.c.l.b16 %v1004
          %v1071 = vunpack.c.l.b16 %v1005
          %v1072 = vunpack.c.l.b16 %v1006
          %v1073 = vunpack.c.l.b16 %v1007
          %v1074 = vunpack.c.l.b16 %v1008
          %v1075 = vunpack.c.l.b16 %v1009
          %v1076 = vunpack.c.l.b16 %v1010
          %v1077 = vunpack.c.l.b16 %v1011
          %v1078 = vunpack.c.l.b16 %v1012
          %v1079 = vunpack.c.l.b16 %v1013
          %v1080 = vunpack.c.l.b16 %v1014
          %v1081 = vunpack.c.l.b16 %v1015
          %v1082 = vunpack.c.l.b16 %v1016
          %v1083 = vunpack.c.l.b16 %v1017
          %v1084 = vunpack.c.l.b16 %v1018
          %v1085 = vunpack.c.l.b16 %v1019
          %v1086 = vunpack.c.l.b16 %v1020
          %v1087 = vunpack.c.l.b16 %v1021
          %v1088 = vunpack.c.l.b16 %v1022
          %v1089 = vunpack.c.l.b16 %v1023
          %v1090 = vunpack.c.l.b16 %v1024
          %v1091 = vunpack.c.l.b16 %v1025
          %v1092 = vunpack.c.l.b16 %v1026
          %v1093 = vunpack.c.l.b16 %v1027
          %v1094 = vunpack.c.l.b16 %v1028
          %v1095 = vunpack.c.l.b16 %v1029
          %v1096 = vunpack.c.l.b16 %v1030
          %v1097 = vunpack.c.l.b16 %v1031
          %v1098 = vpack.c.b16 %v1067, %v1066
          %v1099 = vpack.c.b16 %v1069, %v1068
          %v1100 = vpack.c.b16 %v1071, %v1070
          %v1101 = vpack.c.b16 %v1073, %v1072
          %v1102 = vpack.c.b16 %v1075, %v1074
          %v1103 = vpack.c.b16 %v1077, %v1076
          %v1104 = vpack.c.b16 %v1079, %v1078
          %v1105 = vpack.c.b16 %v1081, %v1080
          %v1106 = vpack.c.b16 %v1083, %v1082
          %v1107 = vpack.c.b16 %v1085, %v1084
          %v1108 = vpack.c.b16 %v1087, %v1086
          %v1109 = vpack.c.b16 %v1089, %v1088
          %v1110 = vpack.c.b16 %v1091, %v1090
          %v1111 = vpack.c.b16 %v1093, %v1092
          %v1112 = vpack.c.b16 %v1095, %v1094
          %v1113 = vpack.c.b16 %v1097, %v1096
          %1130 = vmatprep.subr.bf16.mxu0 0
          %1131 = vmatpush1.bf16.msra.mxu0 %v1098
          %1132 = vmatprep.subr.bf16.mxu0 0
          %1133 = vmatpush1.bf16.msra.mxu0 %v1099
          %1134 = vmatprep.subr.bf16.mxu0 0
          %1135 = vmatpush1.bf16.msra.mxu0 %v1100
          %1136 = vmatprep.subr.bf16.mxu0 0
          %1137 = vmatpush1.bf16.msra.mxu0 %v1101
          %1138 = vmatprep.subr.bf16.mxu0 0
          %1139 = vmatpush1.bf16.msra.mxu0 %v1102
          %1140 = vmatprep.subr.bf16.mxu0 0
          %1141 = vmatpush1.bf16.msra.mxu0 %v1103
          %1142 = vmatprep.subr.bf16.mxu0 0
          %1143 = vmatpush1.bf16.msra.mxu0 %v1104
          %1144 = vmatprep.subr.bf16.mxu0 0
          %1145 = vmatpush1.bf16.msra.mxu0 %v1105
          %1146 = vmatprep.subr.bf16.mxu0 0
          %1147 = vmatpush1.bf16.msra.mxu0 %v1106
          %1148 = vmatprep.subr.bf16.mxu0 0
          %1149 = vmatpush1.bf16.msra.mxu0 %v1107
          %1150 = vmatprep.subr.bf16.mxu0 0
          %1151 = vmatpush1.bf16.msra.mxu0 %v1108
          %1152 = vmatprep.subr.bf16.mxu0 0
          %1153 = vmatpush1.bf16.msra.mxu0 %v1109
          %1154 = vmatprep.subr.bf16.mxu0 0
          %1155 = vmatpush1.bf16.msra.mxu0 %v1110
          %1156 = vmatprep.subr.bf16.mxu0 0
          %1157 = vmatpush1.bf16.msra.mxu0 %v1111
          %1158 = vmatprep.subr.bf16.mxu0 0
          %1159 = vmatpush1.bf16.msra.mxu0 %v1112
          %1160 = vmatprep.subr.bf16.mxu0 0
          %1161 = vmatpush1.bf16.msra.mxu0 %v1113
          %1162 = vmatprep.mubr.bf16.mxu0 %v1033
          %1163 = vmatmul.mubr.bf16.gmra.mrb[0].mxu0 %v1032
          %v1164 = vpop.f32.mrb[0].mxu0
          %v1165 = vadd.f32 0.0, %v1164
          %v1166 = vpop.f32.mrb[0].mxu0
          %v1167 = vpop.f32.mrb[0].mxu0
          %v1168 = vpop.f32.mrb[0].mxu0
          %1169 = vdwg.mxu0
          %v1186 = vunpack.c.l.b16 %v981
          %v1187 = vunpack.c.l.b16 %v982
          %v1188 = vunpack.c.l.b16 %v983
          %v1189 = vunpack.c.l.b16 %v984
          %v1190 = vunpack.c.l.b16 %v985
          %v1191 = vunpack.c.l.b16 %v986
          %v1192 = vunpack.c.l.b16 %v987
          %v1193 = vunpack.c.l.b16 %v988
          %v1194 = vunpack.c.l.b16 %v989
          %v1195 = vunpack.c.l.b16 %v990
          %v1196 = vunpack.c.l.b16 %v991
          %v1197 = vunpack.c.l.b16 %v992
          %v1198 = vunpack.c.l.b16 %v993
          %v1199 = vunpack.c.l.b16 %v994
          %v1200 = vunpack.c.l.b16 %v995
          %v1201 = vunpack.c.l.b16 %v996
          %v1202 = vpack.c.b16 %v1187, %v1186
          %v1203 = vpack.c.b16 %v1189, %v1188
          %v1204 = vpack.c.b16 %v1191, %v1190
          %v1205 = vpack.c.b16 %v1193, %v1192
          %v1206 = vpack.c.b16 %v1195, %v1194
          %v1207 = vpack.c.b16 %v1197, %v1196
          %v1208 = vpack.c.b16 %v1199, %v1198
          %v1209 = vpack.c.b16 %v1201, %v1200
          %1218 = vmatprep.subr.bf16.mxu0 0
          %1219 = vmatpush1.bf16.msra.mxu0 %v1202
          %1220 = vmatprep.subr.bf16.mxu0 0
          %1221 = vmatpush1.bf16.msra.mxu0 %v1203
          %1222 = vmatprep.subr.bf16.mxu0 0
          %1223 = vmatpush1.bf16.msra.mxu0 %v1204
          %1224 = vmatprep.subr.bf16.mxu0 0
          %1225 = vmatpush1.bf16.msra.mxu0 %v1205
          %1226 = vmatprep.subr.bf16.mxu0 0
          %1227 = vmatpush1.bf16.msra.mxu0 %v1206
          %1228 = vmatprep.subr.bf16.mxu0 0
          %1229 = vmatpush1.bf16.msra.mxu0 %v1207
          %1230 = vmatprep.subr.bf16.mxu0 0
          %1231 = vmatpush1.bf16.msra.mxu0 %v1208
          %1232 = vmatprep.subr.bf16.mxu0 0
          %1233 = vmatpush1.bf16.msra.mxu0 %v1209
          %1234 = vmatprep.subr.bf16.mxu0 0
          %1235 = vmatpush1.bf16.msra.mxu0 0
          %1236 = vmatprep.subr.bf16.mxu0 0
          %1237 = vmatpush1.bf16.msra.mxu0 0
          %1238 = vmatprep.subr.bf16.mxu0 0
          %1239 = vmatpush1.bf16.msra.mxu0 0
          %1240 = vmatprep.subr.bf16.mxu0 0
          %1241 = vmatpush1.bf16.msra.mxu0 0
          %1242 = vmatprep.subr.bf16.mxu0 0
          %1243 = vmatpush1.bf16.msra.mxu0 0
          %1244 = vmatprep.subr.bf16.mxu0 0
          %1245 = vmatpush1.bf16.msra.mxu0 0
          %1246 = vmatprep.subr.bf16.mxu0 0
          %1247 = vmatpush1.bf16.msra.mxu0 0
          %1248 = vmatprep.subr.bf16.mxu0 0
          %1249 = vmatpush1.bf16.msra.mxu0 0
          %1250 = vmatprep.mubr.bf16.mxu0 0
          %1251 = vmatmul.mubr.bf16.gmra.mrb[0].mxu0 %v997
          %v1252 = vpop.f32.mrb[0].mxu0
          %v1253 = vadd.f32 %v1165, %v1252
          %v1254 = vpop.f32.mrb[0].mxu0
          %v1255 = vpop.f32.mrb[0].mxu0
          %v1256 = vpop.f32.mrb[0].mxu0
          %1257 = vdwg.mxu0
          %v1258 = vld [vmem:[#allocation11 + $0x5] ss:$0 sm:$0xff]
          %v1259 = vadd.f32 %v1253, %v1258
          %v1260 = vld [vmem:[#allocation11 + $0x6] ss:$0 sm:$0xff]
          %v1261 = vld [vmem:[#allocation11 + $0x7] ss:$0 sm:$0xff]
          %1262 = vadd.xlane.f32.xlu0 %v1259
          %v1263 = vpop.xlane.xlu0 %1262
          %v1264 = vrcp.pop 128.0
          %v1265 = vmul.f32 %v1263, %v1264
          %v1266 = vsub.f32 %v1259, %v1265
          %v1267 = vmul.f32 %v1266, %v1266
          %1268 = vadd.xlane.f32.xlu0 %v1267
          %v1269 = vpop.xlane.xlu0 %1268
          %v1270 = vmul.f32 %v1269, %v1264
          %v1271 = vadd.f32 %v1270, 1e-05
          %v1272 = vrsqrt.pop %v1271
          %v1273 = vmul.f32 %v1266, %v1272
          %v1274 = vmul.f32 %v1273, %v1260
          %v1275 = vadd.f32 %v1274, %v1261
          %v1276 = vmul.f32 %v1275, 0.5
          %v1277 = vtanh.pop %v1276
          %v1278 = vmul.f32 %v1277, 0.5
          %v1279 = vadd.f32 %v1278, 0.5
          %v1280 = vmul.f32 %v1275, %v1279
          %1281 = vst [vmem:[#allocation4] sm:$0xff] %v1280
          %1282 = vst [vmem:[#allocation3] sm:$0xff] %v1280
        $region68: #{fwd.1} parent=39 // pred_fallthru
          _
        %p1283 = scmp.eq.s32.totalorder %s19, 3
        // Predicated region
        $region69: #{fwd.1} parent=39 // pred_check
          %p1284 = pneg %p1283
        $region70: #{fwd.1} parent=39 // pred_check_branch
          %1286 = sbr.rel (%p1284) target = $region72
        $region71: #{fwd.1} parent=39 // pred_region
          %v1287 = vld [vmem:[#allocation3] sm:$0xff]
          %v1288 = vld [vmem:[%s242] sm:$0xf]
          %v1289 = vld [vmem:[%s242 + $0x4] sm:$0xf]
          %v1290 = vld [vmem:[%s242 + $0x8] sm:$0xf]
          %v1291 = vld [vmem:[%s242 + $0xc] sm:$0xf]
          %v1292 = vld [vmem:[%s242 + $0x10] sm:$0xf]
          %v1293 = vld [vmem:[%s242 + $0x14] sm:$0xf]
          %v1294 = vld [vmem:[%s242 + $0x18] sm:$0xf]
          %v1295 = vld [vmem:[%s242 + $0x1c] sm:$0xf]
          %v1296 = vld [vmem:[%s242 + $0x20] sm:$0xf]
          %v1297 = vld [vmem:[%s242 + $0x24] sm:$0xf]
          %v1298 = vld [vmem:[%s242 + $0x28] sm:$0xf]
          %v1299 = vld [vmem:[%s242 + $0x2c] sm:$0xf]
          %v1300 = vld [vmem:[%s242 + $0x30] sm:$0xf]
          %v1301 = vld [vmem:[%s242 + $0x34] sm:$0xf]
          %v1302 = vld [vmem:[%s242 + $0x38] sm:$0xf]
          %v1303 = vld [vmem:[%s242 + $0x3c] sm:$0xf]
          %v1304 = vpack.c.bf16 %v1287, %v1287
          %v1305 = vld [vmem:[#allocation2] sm:$0xff]
          %v1306 = vld [vmem:[#allocation2 + $0x8] sm:$0xff]
          %v1307 = vld [vmem:[%s242 + $0x40] sm:$0xf]
          %v1308 = vld [vmem:[%s242 + $0x44] sm:$0xf]
          %v1309 = vld [vmem:[%s242 + $0x48] sm:$0xf]
          %v1310 = vld [vmem:[%s242 + $0x4c] sm:$0xf]
          %v1311 = vld [vmem:[%s242 + $0x50] sm:$0xf]
          %v1312 = vld [vmem:[%s242 + $0x54] sm:$0xf]
          %v1313 = vld [vmem:[%s242 + $0x58] sm:$0xf]
          %v1314 = vld [vmem:[%s242 + $0x5c] sm:$0xf]
          %v1315 = vld [vmem:[%s242 + $0x60] sm:$0xf]
          %v1316 = vld [vmem:[%s242 + $0x64] sm:$0xf]
          %v1317 = vld [vmem:[%s242 + $0x68] sm:$0xf]
          %v1318 = vld [vmem:[%s242 + $0x6c] sm:$0xf]
          %v1319 = vld [vmem:[%s242 + $0x70] sm:$0xf]
          %v1320 = vld [vmem:[%s242 + $0x74] sm:$0xf]
          %v1321 = vld [vmem:[%s242 + $0x78] sm:$0xf]
          %v1322 = vld [vmem:[%s242 + $0x7c] sm:$0xf]
          %v1323 = vld [vmem:[%s242 + $0x80] sm:$0xf]
          %v1324 = vld [vmem:[%s242 + $0x84] sm:$0xf]
          %v1325 = vld [vmem:[%s242 + $0x88] sm:$0xf]
          %v1326 = vld [vmem:[%s242 + $0x8c] sm:$0xf]
          %v1327 = vld [vmem:[%s242 + $0x90] sm:$0xf]
          %v1328 = vld [vmem:[%s242 + $0x94] sm:$0xf]
          %v1329 = vld [vmem:[%s242 + $0x98] sm:$0xf]
          %v1330 = vld [vmem:[%s242 + $0x9c] sm:$0xf]
          %v1331 = vld [vmem:[%s242 + $0xa0] sm:$0xf]
          %v1332 = vld [vmem:[%s242 + $0xa4] sm:$0xf]
          %v1333 = vld [vmem:[%s242 + $0xa8] sm:$0xf]
          %v1334 = vld [vmem:[%s242 + $0xac] sm:$0xf]
          %v1335 = vld [vmem:[%s242 + $0xb0] sm:$0xf]
          %v1336 = vld [vmem:[%s242 + $0xb4] sm:$0xf]
          %v1337 = vld [vmem:[%s242 + $0xb8] sm:$0xf]
          %v1338 = vld [vmem:[%s242 + $0xbc] sm:$0xf]
          %v1339 = vpack.c.bf16 %v1305, %v1305
          %v1340 = vpack.c.bf16 %v1306, %v1306
          %v1373 = vunpack.c.l.b16 %v1307
          %v1374 = vunpack.c.l.b16 %v1308
          %v1375 = vunpack.c.l.b16 %v1309
          %v1376 = vunpack.c.l.b16 %v1310
          %v1377 = vunpack.c.l.b16 %v1311
          %v1378 = vunpack.c.l.b16 %v1312
          %v1379 = vunpack.c.l.b16 %v1313
          %v1380 = vunpack.c.l.b16 %v1314
          %v1381 = vunpack.c.l.b16 %v1315
          %v1382 = vunpack.c.l.b16 %v1316
          %v1383 = vunpack.c.l.b16 %v1317
          %v1384 = vunpack.c.l.b16 %v1318
          %v1385 = vunpack.c.l.b16 %v1319
          %v1386 = vunpack.c.l.b16 %v1320
          %v1387 = vunpack.c.l.b16 %v1321
          %v1388 = vunpack.c.l.b16 %v1322
          %v1389 = vunpack.c.l.b16 %v1323
          %v1390 = vunpack.c.l.b16 %v1324
          %v1391 = vunpack.c.l.b16 %v1325
          %v1392 = vunpack.c.l.b16 %v1326
          %v1393 = vunpack.c.l.b16 %v1327
          %v1394 = vunpack.c.l.b16 %v1328
          %v1395 = vunpack.c.l.b16 %v1329
          %v1396 = vunpack.c.l.b16 %v1330
          %v1397 = vunpack.c.l.b16 %v1331
          %v1398 = vunpack.c.l.b16 %v1332
          %v1399 = vunpack.c.l.b16 %v1333
          %v1400 = vunpack.c.l.b16 %v1334
          %v1401 = vunpack.c.l.b16 %v1335
          %v1402 = vunpack.c.l.b16 %v1336
          %v1403 = vunpack.c.l.b16 %v1337
          %v1404 = vunpack.c.l.b16 %v1338
          %v1405 = vpack.c.b16 %v1374, %v1373
          %v1406 = vpack.c.b16 %v1376, %v1375
          %v1407 = vpack.c.b16 %v1378, %v1377
          %v1408 = vpack.c.b16 %v1380, %v1379
          %v1409 = vpack.c.b16 %v1382, %v1381
          %v1410 = vpack.c.b16 %v1384, %v1383
          %v1411 = vpack.c.b16 %v1386, %v1385
          %v1412 = vpack.c.b16 %v1388, %v1387
          %v1413 = vpack.c.b16 %v1390, %v1389
          %v1414 = vpack.c.b16 %v1392, %v1391
          %v1415 = vpack.c.b16 %v1394, %v1393
          %v1416 = vpack.c.b16 %v1396, %v1395
          %v1417 = vpack.c.b16 %v1398, %v1397
          %v1418 = vpack.c.b16 %v1400, %v1399
          %v1419 = vpack.c.b16 %v1402, %v1401
          %v1420 = vpack.c.b16 %v1404, %v1403
          %1437 = vmatprep.subr.bf16.mxu0 0
          %1438 = vmatpush1.bf16.msra.mxu0 %v1405
          %1439 = vmatprep.subr.bf16.mxu0 0
          %1440 = vmatpush1.bf16.msra.mxu0 %v1406
          %1441 = vmatprep.subr.bf16.mxu0 0
          %1442 = vmatpush1.bf16.msra.mxu0 %v1407
          %1443 = vmatprep.subr.bf16.mxu0 0
          %1444 = vmatpush1.bf16.msra.mxu0 %v1408
          %1445 = vmatprep.subr.bf16.mxu0 0
          %1446 = vmatpush1.bf16.msra.mxu0 %v1409
          %1447 = vmatprep.subr.bf16.mxu0 0
          %1448 = vmatpush1.bf16.msra.mxu0 %v1410
          %1449 = vmatprep.subr.bf16.mxu0 0
          %1450 = vmatpush1.bf16.msra.mxu0 %v1411
          %1451 = vmatprep.subr.bf16.mxu0 0
          %1452 = vmatpush1.bf16.msra.mxu0 %v1412
          %1453 = vmatprep.subr.bf16.mxu0 0
          %1454 = vmatpush1.bf16.msra.mxu0 %v1413
          %1455 = vmatprep.subr.bf16.mxu0 0
          %1456 = vmatpush1.bf16.msra.mxu0 %v1414
          %1457 = vmatprep.subr.bf16.mxu0 0
          %1458 = vmatpush1.bf16.msra.mxu0 %v1415
          %1459 = vmatprep.subr.bf16.mxu0 0
          %1460 = vmatpush1.bf16.msra.mxu0 %v1416
          %1461 = vmatprep.subr.bf16.mxu0 0
          %1462 = vmatpush1.bf16.msra.mxu0 %v1417
          %1463 = vmatprep.subr.bf16.mxu0 0
          %1464 = vmatpush1.bf16.msra.mxu0 %v1418
          %1465 = vmatprep.subr.bf16.mxu0 0
          %1466 = vmatpush1.bf16.msra.mxu0 %v1419
          %1467 = vmatprep.subr.bf16.mxu0 0
          %1468 = vmatpush1.bf16.msra.mxu0 %v1420
          %1469 = vmatprep.mubr.bf16.mxu0 %v1340
          %1470 = vmatmul.mubr.bf16.gmra.mrb[0].mxu0 %v1339
          %v1471 = vpop.f32.mrb[0].mxu0
          %v1472 = vadd.f32 0.0, %v1471
          %v1473 = vpop.f32.mrb[0].mxu0
          %v1474 = vpop.f32.mrb[0].mxu0
          %v1475 = vpop.f32.mrb[0].mxu0
          %1476 = vdwg.mxu0
          %v1493 = vunpack.c.l.b16 %v1288
          %v1494 = vunpack.c.l.b16 %v1289
          %v1495 = vunpack.c.l.b16 %v1290
          %v1496 = vunpack.c.l.b16 %v1291
          %v1497 = vunpack.c.l.b16 %v1292
          %v1498 = vunpack.c.l.b16 %v1293
          %v1499 = vunpack.c.l.b16 %v1294
          %v1500 = vunpack.c.l.b16 %v1295
          %v1501 = vunpack.c.l.b16 %v1296
          %v1502 = vunpack.c.l.b16 %v1297
          %v1503 = vunpack.c.l.b16 %v1298
          %v1504 = vunpack.c.l.b16 %v1299
          %v1505 = vunpack.c.l.b16 %v1300
          %v1506 = vunpack.c.l.b16 %v1301
          %v1507 = vunpack.c.l.b16 %v1302
          %v1508 = vunpack.c.l.b16 %v1303
          %v1509 = vpack.c.b16 %v1494, %v1493
          %v1510 = vpack.c.b16 %v1496, %v1495
          %v1511 = vpack.c.b16 %v1498, %v1497
          %v1512 = vpack.c.b16 %v1500, %v1499
          %v1513 = vpack.c.b16 %v1502, %v1501
          %v1514 = vpack.c.b16 %v1504, %v1503
          %v1515 = vpack.c.b16 %v1506, %v1505
          %v1516 = vpack.c.b16 %v1508, %v1507
          %1525 = vmatprep.subr.bf16.mxu0 0
          %1526 = vmatpush1.bf16.msra.mxu0 %v1509
          %1527 = vmatprep.subr.bf16.mxu0 0
          %1528 = vmatpush1.bf16.msra.mxu0 %v1510
          %1529 = vmatprep.subr.bf16.mxu0 0
          %1530 = vmatpush1.bf16.msra.mxu0 %v1511
          %1531 = vmatprep.subr.bf16.mxu0 0
          %1532 = vmatpush1.bf16.msra.mxu0 %v1512
          %1533 = vmatprep.subr.bf16.mxu0 0
          %1534 = vmatpush1.bf16.msra.mxu0 %v1513
          %1535 = vmatprep.subr.bf16.mxu0 0
          %1536 = vmatpush1.bf16.msra.mxu0 %v1514
          %1537 = vmatprep.subr.bf16.mxu0 0
          %1538 = vmatpush1.bf16.msra.mxu0 %v1515
          %1539 = vmatprep.subr.bf16.mxu0 0
          %1540 = vmatpush1.bf16.msra.mxu0 %v1516
          %1541 = vmatprep.subr.bf16.mxu0 0
          %1542 = vmatpush1.bf16.msra.mxu0 0
          %1543 = vmatprep.subr.bf16.mxu0 0
          %1544 = vmatpush1.bf16.msra.mxu0 0
          %1545 = vmatprep.subr.bf16.mxu0 0
          %1546 = vmatpush1.bf16.msra.mxu0 0
          %1547 = vmatprep.subr.bf16.mxu0 0
          %1548 = vmatpush1.bf16.msra.mxu0 0
          %1549 = vmatprep.subr.bf16.mxu0 0
          %1550 = vmatpush1.bf16.msra.mxu0 0
          %1551 = vmatprep.subr.bf16.mxu0 0
          %1552 = vmatpush1.bf16.msra.mxu0 0
          %1553 = vmatprep.subr.bf16.mxu0 0
          %1554 = vmatpush1.bf16.msra.mxu0 0
          %1555 = vmatprep.subr.bf16.mxu0 0
          %1556 = vmatpush1.bf16.msra.mxu0 0
          %1557 = vmatprep.mubr.bf16.mxu0 0
          %1558 = vmatmul.mubr.bf16.gmra.mrb[0].mxu0 %v1304
          %v1559 = vpop.f32.mrb[0].mxu0
          %v1560 = vadd.f32 %v1472, %v1559
          %v1561 = vpop.f32.mrb[0].mxu0
          %v1562 = vpop.f32.mrb[0].mxu0
          %v1563 = vpop.f32.mrb[0].mxu0
          %1564 = vdwg.mxu0
          %v1565 = vld [vmem:[#allocation11 + $0x10] ss:$0 sm:$0xff]
          %v1566 = vadd.f32 %v1560, %v1565
          %v1567 = vld [vmem:[#allocation11 + $0x11] ss:$0 sm:$0xff]
          %v1568 = vld [vmem:[#allocation11 + $0x12] ss:$0 sm:$0xff]
          %1569 = vadd.xlane.f32.xlu0 %v1566
          %v1570 = vpop.xlane.xlu0 %1569
          %v1571 = vrcp.pop 128.0
          %v1572 = vmul.f32 %v1570, %v1571
          %v1573 = vsub.f32 %v1566, %v1572
          %v1574 = vmul.f32 %v1573, %v1573
          %1575 = vadd.xlane.f32.xlu0 %v1574
          %v1576 = vpop.xlane.xlu0 %1575
          %v1577 = vmul.f32 %v1576, %v1571
          %v1578 = vadd.f32 %v1577, 1e-05
          %v1579 = vrsqrt.pop %v1578
          %v1580 = vmul.f32 %v1573, %v1579
          %v1581 = vmul.f32 %v1580, %v1567
          %v1582 = vadd.f32 %v1581, %v1568
          %v1583 = vmul.f32 %v1582, 0.5
          %v1584 = vtanh.pop %v1583
          %v1585 = vmul.f32 %v1584, 0.5
          %v1586 = vadd.f32 %v1585, 0.5
          %v1587 = vmul.f32 %v1582, %v1586
          %s1588 = scalar_lea.vmem [#allocation4], 8
          %1589 = vst [vmem:[%s1588] sm:$0xff] %v1587
          %1590 = vst [vmem:[#allocation3] sm:$0xff] %v1587
        $region72: #{fwd.1} parent=39 // pred_fallthru
          _
        %p1591 = scmp.eq.s32.totalorder %s19, 4
        // Predicated region
        $region73: #{fwd.1} parent=39 // pred_check
          %p1592 = pneg %p1591
        $region74: #{fwd.1} parent=39 // pred_check_branch
          %1594 = sbr.rel (%p1592) target = $region76
        $region75: #{fwd.1} parent=39 // pred_region
          %v1595 = vld [vmem:[#allocation3] sm:$0xff]
          %v1596 = vld [vmem:[%s242] sm:$0xf]
          %v1597 = vld [vmem:[%s242 + $0x4] sm:$0xf]
          %v1598 = vld [vmem:[%s242 + $0x8] sm:$0xf]
          %v1599 = vld [vmem:[%s242 + $0xc] sm:$0xf]
          %v1600 = vld [vmem:[%s242 + $0x10] sm:$0xf]
          %v1601 = vld [vmem:[%s242 + $0x14] sm:$0xf]
          %v1602 = vld [vmem:[%s242 + $0x18] sm:$0xf]
          %v1603 = vld [vmem:[%s242 + $0x1c] sm:$0xf]
          %v1604 = vld [vmem:[%s242 + $0x20] sm:$0xf]
          %v1605 = vld [vmem:[%s242 + $0x24] sm:$0xf]
          %v1606 = vld [vmem:[%s242 + $0x28] sm:$0xf]
          %v1607 = vld [vmem:[%s242 + $0x2c] sm:$0xf]
          %v1608 = vld [vmem:[%s242 + $0x30] sm:$0xf]
          %v1609 = vld [vmem:[%s242 + $0x34] sm:$0xf]
          %v1610 = vld [vmem:[%s242 + $0x38] sm:$0xf]
          %v1611 = vld [vmem:[%s242 + $0x3c] sm:$0xf]
          %v1612 = vpack.c.bf16 %v1595, %v1595
          %v1613 = vld [vmem:[#allocation2] sm:$0xff]
          %v1614 = vld [vmem:[#allocation2 + $0x8] sm:$0xff]
          %v1615 = vld [vmem:[%s242 + $0x40] sm:$0xf]
          %v1616 = vld [vmem:[%s242 + $0x44] sm:$0xf]
          %v1617 = vld [vmem:[%s242 + $0x48] sm:$0xf]
          %v1618 = vld [vmem:[%s242 + $0x4c] sm:$0xf]
          %v1619 = vld [vmem:[%s242 + $0x50] sm:$0xf]
          %v1620 = vld [vmem:[%s242 + $0x54] sm:$0xf]
          %v1621 = vld [vmem:[%s242 + $0x58] sm:$0xf]
          %v1622 = vld [vmem:[%s242 + $0x5c] sm:$0xf]
          %v1623 = vld [vmem:[%s242 + $0x60] sm:$0xf]
          %v1624 = vld [vmem:[%s242 + $0x64] sm:$0xf]
          %v1625 = vld [vmem:[%s242 + $0x68] sm:$0xf]
          %v1626 = vld [vmem:[%s242 + $0x6c] sm:$0xf]
          %v1627 = vld [vmem:[%s242 + $0x70] sm:$0xf]
          %v1628 = vld [vmem:[%s242 + $0x74] sm:$0xf]
          %v1629 = vld [vmem:[%s242 + $0x78] sm:$0xf]
          %v1630 = vld [vmem:[%s242 + $0x7c] sm:$0xf]
          %v1631 = vld [vmem:[%s242 + $0x80] sm:$0xf]
          %v1632 = vld [vmem:[%s242 + $0x84] sm:$0xf]
          %v1633 = vld [vmem:[%s242 + $0x88] sm:$0xf]
          %v1634 = vld [vmem:[%s242 + $0x8c] sm:$0xf]
          %v1635 = vld [vmem:[%s242 + $0x90] sm:$0xf]
          %v1636 = vld [vmem:[%s242 + $0x94] sm:$0xf]
          %v1637 = vld [vmem:[%s242 + $0x98] sm:$0xf]
          %v1638 = vld [vmem:[%s242 + $0x9c] sm:$0xf]
          %v1639 = vld [vmem:[%s242 + $0xa0] sm:$0xf]
          %v1640 = vld [vmem:[%s242 + $0xa4] sm:$0xf]
          %v1641 = vld [vmem:[%s242 + $0xa8] sm:$0xf]
          %v1642 = vld [vmem:[%s242 + $0xac] sm:$0xf]
          %v1643 = vld [vmem:[%s242 + $0xb0] sm:$0xf]
          %v1644 = vld [vmem:[%s242 + $0xb4] sm:$0xf]
          %v1645 = vld [vmem:[%s242 + $0xb8] sm:$0xf]
          %v1646 = vld [vmem:[%s242 + $0xbc] sm:$0xf]
          %v1647 = vpack.c.bf16 %v1613, %v1613
          %v1648 = vpack.c.bf16 %v1614, %v1614
          %v1681 = vunpack.c.l.b16 %v1615
          %v1682 = vunpack.c.l.b16 %v1616
          %v1683 = vunpack.c.l.b16 %v1617
          %v1684 = vunpack.c.l.b16 %v1618
          %v1685 = vunpack.c.l.b16 %v1619
          %v1686 = vunpack.c.l.b16 %v1620
          %v1687 = vunpack.c.l.b16 %v1621
          %v1688 = vunpack.c.l.b16 %v1622
          %v1689 = vunpack.c.l.b16 %v1623
          %v1690 = vunpack.c.l.b16 %v1624
          %v1691 = vunpack.c.l.b16 %v1625
          %v1692 = vunpack.c.l.b16 %v1626
          %v1693 = vunpack.c.l.b16 %v1627
          %v1694 = vunpack.c.l.b16 %v1628
          %v1695 = vunpack.c.l.b16 %v1629
          %v1696 = vunpack.c.l.b16 %v1630
          %v1697 = vunpack.c.l.b16 %v1631
          %v1698 = vunpack.c.l.b16 %v1632
          %v1699 = vunpack.c.l.b16 %v1633
          %v1700 = vunpack.c.l.b16 %v1634
          %v1701 = vunpack.c.l.b16 %v1635
          %v1702 = vunpack.c.l.b16 %v1636
          %v1703 = vunpack.c.l.b16 %v1637
          %v1704 = vunpack.c.l.b16 %v1638
          %v1705 = vunpack.c.l.b16 %v1639
          %v1706 = vunpack.c.l.b16 %v1640
          %v1707 = vunpack.c.l.b16 %v1641
          %v1708 = vunpack.c.l.b16 %v1642
          %v1709 = vunpack.c.l.b16 %v1643
          %v1710 = vunpack.c.l.b16 %v1644
          %v1711 = vunpack.c.l.b16 %v1645
          %v1712 = vunpack.c.l.b16 %v1646
          %v1713 = vpack.c.b16 %v1682, %v1681
          %v1714 = vpack.c.b16 %v1684, %v1683
          %v1715 = vpack.c.b16 %v1686, %v1685
          %v1716 = vpack.c.b16 %v1688, %v1687
          %v1717 = vpack.c.b16 %v1690, %v1689
          %v1718 = vpack.c.b16 %v1692, %v1691
          %v1719 = vpack.c.b16 %v1694, %v1693
          %v1720 = vpack.c.b16 %v1696, %v1695
          %v1721 = vpack.c.b16 %v1698, %v1697
          %v1722 = vpack.c.b16 %v1700, %v1699
          %v1723 = vpack.c.b16 %v1702, %v1701
          %v1724 = vpack.c.b16 %v1704, %v1703
          %v1725 = vpack.c.b16 %v1706, %v1705
          %v1726 = vpack.c.b16 %v1708, %v1707
          %v1727 = vpack.c.b16 %v1710, %v1709
          %v1728 = vpack.c.b16 %v1712, %v1711
          %1745 = vmatprep.subr.bf16.mxu0 0
          %1746 = vmatpush1.bf16.msra.mxu0 %v1713
          %1747 = vmatprep.subr.bf16.mxu0 0
          %1748 = vmatpush1.bf16.msra.mxu0 %v1714
          %1749 = vmatprep.subr.bf16.mxu0 0
          %1750 = vmatpush1.bf16.msra.mxu0 %v1715
          %1751 = vmatprep.subr.bf16.mxu0 0
          %1752 = vmatpush1.bf16.msra.mxu0 %v1716
          %1753 = vmatprep.subr.bf16.mxu0 0
          %1754 = vmatpush1.bf16.msra.mxu0 %v1717
          %1755 = vmatprep.subr.bf16.mxu0 0
          %1756 = vmatpush1.bf16.msra.mxu0 %v1718
          %1757 = vmatprep.subr.bf16.mxu0 0
          %1758 = vmatpush1.bf16.msra.mxu0 %v1719
          %1759 = vmatprep.subr.bf16.mxu0 0
          %1760 = vmatpush1.bf16.msra.mxu0 %v1720
          %1761 = vmatprep.subr.bf16.mxu0 0
          %1762 = vmatpush1.bf16.msra.mxu0 %v1721
          %1763 = vmatprep.subr.bf16.mxu0 0
          %1764 = vmatpush1.bf16.msra.mxu0 %v1722
          %1765 = vmatprep.subr.bf16.mxu0 0
          %1766 = vmatpush1.bf16.msra.mxu0 %v1723
          %1767 = vmatprep.subr.bf16.mxu0 0
          %1768 = vmatpush1.bf16.msra.mxu0 %v1724
          %1769 = vmatprep.subr.bf16.mxu0 0
          %1770 = vmatpush1.bf16.msra.mxu0 %v1725
          %1771 = vmatprep.subr.bf16.mxu0 0
          %1772 = vmatpush1.bf16.msra.mxu0 %v1726
          %1773 = vmatprep.subr.bf16.mxu0 0
          %1774 = vmatpush1.bf16.msra.mxu0 %v1727
          %1775 = vmatprep.subr.bf16.mxu0 0
          %1776 = vmatpush1.bf16.msra.mxu0 %v1728
          %1777 = vmatprep.mubr.bf16.mxu0 %v1648
          %1778 = vmatmul.mubr.bf16.gmra.mrb[0].mxu0 %v1647
          %v1779 = vpop.f32.mrb[0].mxu0
          %v1780 = vadd.f32 0.0, %v1779
          %v1781 = vpop.f32.mrb[0].mxu0
          %v1782 = vpop.f32.mrb[0].mxu0
          %v1783 = vpop.f32.mrb[0].mxu0
          %1784 = vdwg.mxu0
          %v1801 = vunpack.c.l.b16 %v1596
          %v1802 = vunpack.c.l.b16 %v1597
          %v1803 = vunpack.c.l.b16 %v1598
          %v1804 = vunpack.c.l.b16 %v1599
          %v1805 = vunpack.c.l.b16 %v1600
          %v1806 = vunpack.c.l.b16 %v1601
          %v1807 = vunpack.c.l.b16 %v1602
          %v1808 = vunpack.c.l.b16 %v1603
          %v1809 = vunpack.c.l.b16 %v1604
          %v1810 = vunpack.c.l.b16 %v1605
          %v1811 = vunpack.c.l.b16 %v1606
          %v1812 = vunpack.c.l.b16 %v1607
          %v1813 = vunpack.c.l.b16 %v1608
          %v1814 = vunpack.c.l.b16 %v1609
          %v1815 = vunpack.c.l.b16 %v1610
          %v1816 = vunpack.c.l.b16 %v1611
          %v1817 = vpack.c.b16 %v1802, %v1801
          %v1818 = vpack.c.b16 %v1804, %v1803
          %v1819 = vpack.c.b16 %v1806, %v1805
          %v1820 = vpack.c.b16 %v1808, %v1807
          %v1821 = vpack.c.b16 %v1810, %v1809
          %v1822 = vpack.c.b16 %v1812, %v1811
          %v1823 = vpack.c.b16 %v1814, %v1813
          %v1824 = vpack.c.b16 %v1816, %v1815
          %1833 = vmatprep.subr.bf16.mxu0 0
          %1834 = vmatpush1.bf16.msra.mxu0 %v1817
          %1835 = vmatprep.subr.bf16.mxu0 0
          %1836 = vmatpush1.bf16.msra.mxu0 %v1818
          %1837 = vmatprep.subr.bf16.mxu0 0
          %1838 = vmatpush1.bf16.msra.mxu0 %v1819
          %1839 = vmatprep.subr.bf16.mxu0 0
          %1840 = vmatpush1.bf16.msra.mxu0 %v1820
          %1841 = vmatprep.subr.bf16.mxu0 0
          %1842 = vmatpush1.bf16.msra.mxu0 %v1821
          %1843 = vmatprep.subr.bf16.mxu0 0
          %1844 = vmatpush1.bf16.msra.mxu0 %v1822
          %1845 = vmatprep.subr.bf16.mxu0 0
          %1846 = vmatpush1.bf16.msra.mxu0 %v1823
          %1847 = vmatprep.subr.bf16.mxu0 0
          %1848 = vmatpush1.bf16.msra.mxu0 %v1824
          %1849 = vmatprep.subr.bf16.mxu0 0
          %1850 = vmatpush1.bf16.msra.mxu0 0
          %1851 = vmatprep.subr.bf16.mxu0 0
          %1852 = vmatpush1.bf16.msra.mxu0 0
          %1853 = vmatprep.subr.bf16.mxu0 0
          %1854 = vmatpush1.bf16.msra.mxu0 0
          %1855 = vmatprep.subr.bf16.mxu0 0
          %1856 = vmatpush1.bf16.msra.mxu0 0
          %1857 = vmatprep.subr.bf16.mxu0 0
          %1858 = vmatpush1.bf16.msra.mxu0 0
          %1859 = vmatprep.subr.bf16.mxu0 0
          %1860 = vmatpush1.bf16.msra.mxu0 0
          %1861 = vmatprep.subr.bf16.mxu0 0
          %1862 = vmatpush1.bf16.msra.mxu0 0
          %1863 = vmatprep.subr.bf16.mxu0 0
          %1864 = vmatpush1.bf16.msra.mxu0 0
          %1865 = vmatprep.mubr.bf16.mxu0 0
          %1866 = vmatmul.mubr.bf16.gmra.mrb[0].mxu0 %v1612
          %v1867 = vpop.f32.mrb[0].mxu0
          %v1868 = vadd.f32 %v1780, %v1867
          %v1869 = vpop.f32.mrb[0].mxu0
          %v1870 = vpop.f32.mrb[0].mxu0
          %v1871 = vpop.f32.mrb[0].mxu0
          %1872 = vdwg.mxu0
          %v1873 = vld [vmem:[#allocation11 + $0x13] ss:$0 sm:$0xff]
          %v1874 = vadd.f32 %v1868, %v1873
          %v1875 = vld [vmem:[#allocation11 + $0x14] ss:$0 sm:$0xff]
          %v1876 = vld [vmem:[#allocation11 + $0x15] ss:$0 sm:$0xff]
          %vm1877 = vcmask 523264
          %v1878 = vsel %vm1877, %v1874, 0.0
          %1879 = vadd.xlane.f32.xlu0 %v1878
          %v1880 = vpop.xlane.xlu0 %1879
          %v1881 = vrcp.pop 64.0
          %v1882 = vmul.f32 %v1880, %v1881
          %v1883 = vsub.f32 %v1874, %v1882
          %v1884 = vmul.f32 %v1883, %v1883
          %v1885 = vsel %vm1877, %v1884, 0.0
          %1886 = vadd.xlane.f32.xlu0 %v1885
          %v1887 = vpop.xlane.xlu0 %1886
          %v1888 = vmul.f32 %v1887, %v1881
          %v1889 = vadd.f32 %v1888, 1e-05
          %v1890 = vrsqrt.pop %v1889
          %v1891 = vmul.f32 %v1883, %v1890
          %v1892 = vmul.f32 %v1891, %v1875
          %v1893 = vadd.f32 %v1892, %v1876
          %v1894 = vmul.f32 %v1893, 0.5
          %v1895 = vtanh.pop %v1894
          %v1896 = vmul.f32 %v1895, 0.5
          %v1897 = vadd.f32 %v1896, 0.5
          %v1898 = vmul.f32 %v1893, %v1897
          %s1899 = scalar_lea.vmem [#allocation4], 16
          %1900 = vst.msk [vmem:[%s1899] sm:$0xff] %vm1877, %v1898
          %1901 = vst.msk [vmem:[#allocation3] sm:$0xff] %vm1877, %v1898
        $region76: #{fwd.1} parent=39 // pred_fallthru
          _
        %p1902 = scmp.eq.s32.totalorder %s19, 5
        // Predicated region
        $region77: #{fwd.1} parent=39 // pred_check
          %p1903 = pneg %p1902
        $region78: #{fwd.1} parent=39 // pred_check_branch
          %1905 = sbr.rel (%p1903) target = $region80
        $region79: #{fwd.1} parent=39 // pred_region
          %v1906 = vld [vmem:[#allocation3] sm:$0xff]
          %v1907 = vld [vmem:[%s242] sm:$0xf]
          %v1908 = vld [vmem:[%s242 + $0x4] sm:$0xf]
          %v1909 = vld [vmem:[%s242 + $0x8] sm:$0xf]
          %v1910 = vld [vmem:[%s242 + $0xc] sm:$0xf]
          %v1911 = vld [vmem:[%s242 + $0x10] sm:$0xf]
          %v1912 = vld [vmem:[%s242 + $0x14] sm:$0xf]
          %v1913 = vld [vmem:[%s242 + $0x18] sm:$0xf]
          %v1914 = vld [vmem:[%s242 + $0x1c] sm:$0xf]
          %v1915 = vpack.c.bf16 %v1906, %v1906
          %v1916 = vld [vmem:[#allocation2] sm:$0xff]
          %v1917 = vld [vmem:[#allocation2 + $0x8] sm:$0xff]
          %v1918 = vld [vmem:[%s242 + $0x20] sm:$0xf]
          %v1919 = vld [vmem:[%s242 + $0x24] sm:$0xf]
          %v1920 = vld [vmem:[%s242 + $0x28] sm:$0xf]
          %v1921 = vld [vmem:[%s242 + $0x2c] sm:$0xf]
          %v1922 = vld [vmem:[%s242 + $0x30] sm:$0xf]
          %v1923 = vld [vmem:[%s242 + $0x34] sm:$0xf]
          %v1924 = vld [vmem:[%s242 + $0x38] sm:$0xf]
          %v1925 = vld [vmem:[%s242 + $0x3c] sm:$0xf]
          %v1926 = vld [vmem:[%s242 + $0x40] sm:$0xf]
          %v1927 = vld [vmem:[%s242 + $0x44] sm:$0xf]
          %v1928 = vld [vmem:[%s242 + $0x48] sm:$0xf]
          %v1929 = vld [vmem:[%s242 + $0x4c] sm:$0xf]
          %v1930 = vld [vmem:[%s242 + $0x50] sm:$0xf]
          %v1931 = vld [vmem:[%s242 + $0x54] sm:$0xf]
          %v1932 = vld [vmem:[%s242 + $0x58] sm:$0xf]
          %v1933 = vld [vmem:[%s242 + $0x5c] sm:$0xf]
          %v1934 = vld [vmem:[%s242 + $0x60] sm:$0xf]
          %v1935 = vld [vmem:[%s242 + $0x64] sm:$0xf]
          %v1936 = vld [vmem:[%s242 + $0x68] sm:$0xf]
          %v1937 = vld [vmem:[%s242 + $0x6c] sm:$0xf]
          %v1938 = vld [vmem:[%s242 + $0x70] sm:$0xf]
          %v1939 = vld [vmem:[%s242 + $0x74] sm:$0xf]
          %v1940 = vld [vmem:[%s242 + $0x78] sm:$0xf]
          %v1941 = vld [vmem:[%s242 + $0x7c] sm:$0xf]
          %v1942 = vld [vmem:[%s242 + $0x80] sm:$0xf]
          %v1943 = vld [vmem:[%s242 + $0x84] sm:$0xf]
          %v1944 = vld [vmem:[%s242 + $0x88] sm:$0xf]
          %v1945 = vld [vmem:[%s242 + $0x8c] sm:$0xf]
          %v1946 = vld [vmem:[%s242 + $0x90] sm:$0xf]
          %v1947 = vld [vmem:[%s242 + $0x94] sm:$0xf]
          %v1948 = vld [vmem:[%s242 + $0x98] sm:$0xf]
          %v1949 = vld [vmem:[%s242 + $0x9c] sm:$0xf]
          %v1950 = vpack.c.bf16 %v1916, %v1916
          %v1951 = vpack.c.bf16 %v1917, %v1917
          %v1984 = vunpack.c.l.b16 %v1918
          %v1985 = vunpack.c.l.b16 %v1919
          %v1986 = vunpack.c.l.b16 %v1920
          %v1987 = vunpack.c.l.b16 %v1921
          %v1988 = vunpack.c.l.b16 %v1922
          %v1989 = vunpack.c.l.b16 %v1923
          %v1990 = vunpack.c.l.b16 %v1924
          %v1991 = vunpack.c.l.b16 %v1925
          %v1992 = vunpack.c.l.b16 %v1926
          %v1993 = vunpack.c.l.b16 %v1927
          %v1994 = vunpack.c.l.b16 %v1928
          %v1995 = vunpack.c.l.b16 %v1929
          %v1996 = vunpack.c.l.b16 %v1930
          %v1997 = vunpack.c.l.b16 %v1931
          %v1998 = vunpack.c.l.b16 %v1932
          %v1999 = vunpack.c.l.b16 %v1933
          %v2000 = vunpack.c.l.b16 %v1934
          %v2001 = vunpack.c.l.b16 %v1935
          %v2002 = vunpack.c.l.b16 %v1936
          %v2003 = vunpack.c.l.b16 %v1937
          %v2004 = vunpack.c.l.b16 %v1938
          %v2005 = vunpack.c.l.b16 %v1939
          %v2006 = vunpack.c.l.b16 %v1940
          %v2007 = vunpack.c.l.b16 %v1941
          %v2008 = vunpack.c.l.b16 %v1942
          %v2009 = vunpack.c.l.b16 %v1943
          %v2010 = vunpack.c.l.b16 %v1944
          %v2011 = vunpack.c.l.b16 %v1945
          %v2012 = vunpack.c.l.b16 %v1946
          %v2013 = vunpack.c.l.b16 %v1947
          %v2014 = vunpack.c.l.b16 %v1948
          %v2015 = vunpack.c.l.b16 %v1949
          %v2016 = vpack.c.b16 %v1985, %v1984
          %v2017 = vpack.c.b16 %v1987, %v1986
          %v2018 = vpack.c.b16 %v1989, %v1988
          %v2019 = vpack.c.b16 %v1991, %v1990
          %v2020 = vpack.c.b16 %v1993, %v1992
          %v2021 = vpack.c.b16 %v1995, %v1994
          %v2022 = vpack.c.b16 %v1997, %v1996
          %v2023 = vpack.c.b16 %v1999, %v1998
          %v2024 = vpack.c.b16 %v2001, %v2000
          %v2025 = vpack.c.b16 %v2003, %v2002
          %v2026 = vpack.c.b16 %v2005, %v2004
          %v2027 = vpack.c.b16 %v2007, %v2006
          %v2028 = vpack.c.b16 %v2009, %v2008
          %v2029 = vpack.c.b16 %v2011, %v2010
          %v2030 = vpack.c.b16 %v2013, %v2012
          %v2031 = vpack.c.b16 %v2015, %v2014
          %2048 = vmatprep.subr.bf16.mxu0 0
          %2049 = vmatpush1.bf16.msra.mxu0 %v2016
          %2050 = vmatprep.subr.bf16.mxu0 0
          %2051 = vmatpush1.bf16.msra.mxu0 %v2017
          %2052 = vmatprep.subr.bf16.mxu0 0
          %2053 = vmatpush1.bf16.msra.mxu0 %v2018
          %2054 = vmatprep.subr.bf16.mxu0 0
          %2055 = vmatpush1.bf16.msra.mxu0 %v2019
          %2056 = vmatprep.subr.bf16.mxu0 0
          %2057 = vmatpush1.bf16.msra.mxu0 %v2020
          %2058 = vmatprep.subr.bf16.mxu0 0
          %2059 = vmatpush1.bf16.msra.mxu0 %v2021
          %2060 = vmatprep.subr.bf16.mxu0 0
          %2061 = vmatpush1.bf16.msra.mxu0 %v2022
          %2062 = vmatprep.subr.bf16.mxu0 0
          %2063 = vmatpush1.bf16.msra.mxu0 %v2023
          %2064 = vmatprep.subr.bf16.mxu0 0
          %2065 = vmatpush1.bf16.msra.mxu0 %v2024
          %2066 = vmatprep.subr.bf16.mxu0 0
          %2067 = vmatpush1.bf16.msra.mxu0 %v2025
          %2068 = vmatprep.subr.bf16.mxu0 0
          %2069 = vmatpush1.bf16.msra.mxu0 %v2026
          %2070 = vmatprep.subr.bf16.mxu0 0
          %2071 = vmatpush1.bf16.msra.mxu0 %v2027
          %2072 = vmatprep.subr.bf16.mxu0 0
          %2073 = vmatpush1.bf16.msra.mxu0 %v2028
          %2074 = vmatprep.subr.bf16.mxu0 0
          %2075 = vmatpush1.bf16.msra.mxu0 %v2029
          %2076 = vmatprep.subr.bf16.mxu0 0
          %2077 = vmatpush1.bf16.msra.mxu0 %v2030
          %2078 = vmatprep.subr.bf16.mxu0 0
          %2079 = vmatpush1.bf16.msra.mxu0 %v2031
          %2080 = vmatprep.mubr.bf16.mxu0 %v1951
          %2081 = vmatmul.mubr.bf16.gmra.mrb[0].mxu0 %v1950
          %v2082 = vpop.f32.mrb[0].mxu0
          %v2083 = vadd.f32 0.0, %v2082
          %v2084 = vpop.f32.mrb[0].mxu0
          %v2085 = vpop.f32.mrb[0].mxu0
          %v2086 = vpop.f32.mrb[0].mxu0
          %2087 = vdwg.mxu0
          %v2096 = vunpack.c.l.b16 %v1907
          %v2097 = vunpack.c.l.b16 %v1908
          %v2098 = vunpack.c.l.b16 %v1909
          %v2099 = vunpack.c.l.b16 %v1910
          %v2100 = vunpack.c.l.b16 %v1911
          %v2101 = vunpack.c.l.b16 %v1912
          %v2102 = vunpack.c.l.b16 %v1913
          %v2103 = vunpack.c.l.b16 %v1914
          %v2104 = vpack.c.b16 %v2097, %v2096
          %v2105 = vpack.c.b16 %v2099, %v2098
          %v2106 = vpack.c.b16 %v2101, %v2100
          %v2107 = vpack.c.b16 %v2103, %v2102
          %vm2112 = vcmask 523264
          %v2114 = vsel %vm2112, %v1915, 0
          %2116 = vmatprep.subr.bf16.mxu0 0
          %2117 = vmatpush1.bf16.msra.mxu0 %v2104
          %2118 = vmatprep.subr.bf16.mxu0 0
          %2119 = vmatpush1.bf16.msra.mxu0 %v2105
          %2120 = vmatprep.subr.bf16.mxu0 0
          %2121 = vmatpush1.bf16.msra.mxu0 %v2106
          %2122 = vmatprep.subr.bf16.mxu0 0
          %2123 = vmatpush1.bf16.msra.mxu0 %v2107
          %2124 = vmatprep.subr.bf16.mxu0 0
          %2125 = vmatpush1.bf16.msra.mxu0 0
          %2126 = vmatprep.subr.bf16.mxu0 0
          %2127 = vmatpush1.bf16.msra.mxu0 0
          %2128 = vmatprep.subr.bf16.mxu0 0
          %2129 = vmatpush1.bf16.msra.mxu0 0
          %2130 = vmatprep.subr.bf16.mxu0 0
          %2131 = vmatpush1.bf16.msra.mxu0 0
          %2132 = vmatprep.subr.bf16.mxu0 0
          %2133 = vmatpush1.bf16.msra.mxu0 0
          %2134 = vmatprep.subr.bf16.mxu0 0
          %2135 = vmatpush1.bf16.msra.mxu0 0
          %2136 = vmatprep.subr.bf16.mxu0 0
          %2137 = vmatpush1.bf16.msra.mxu0 0
          %2138 = vmatprep.subr.bf16.mxu0 0
          %2139 = vmatpush1.bf16.msra.mxu0 0
          %2140 = vmatprep.subr.bf16.mxu0 0
          %2141 = vmatpush1.bf16.msra.mxu0 0
          %2142 = vmatprep.subr.bf16.mxu0 0
          %2143 = vmatpush1.bf16.msra.mxu0 0
          %2144 = vmatprep.subr.bf16.mxu0 0
          %2145 = vmatpush1.bf16.msra.mxu0 0
          %2146 = vmatprep.subr.bf16.mxu0 0
          %2147 = vmatpush1.bf16.msra.mxu0 0
          %2148 = vmatprep.mubr.bf16.mxu0 0
          %2149 = vmatmul.mubr.bf16.gmra.mrb[0].mxu0 %v2114
          %v2150 = vpop.f32.mrb[0].mxu0
          %v2151 = vadd.f32 %v2083, %v2150
          %v2152 = vpop.f32.mrb[0].mxu0
          %v2153 = vpop.f32.mrb[0].mxu0
          %v2154 = vpop.f32.mrb[0].mxu0
          %2155 = vdwg.mxu0
          %v2156 = vld [vmem:[#allocation11 + $0x16] ss:$0 sm:$0xff]
          %v2157 = vadd.f32 %v2151, %v2156
          %v2158 = vld [vmem:[#allocation11 + $0x17] ss:$0 sm:$0xff]
          %v2159 = vld [vmem:[#allocation11 + $0x20] ss:$0 sm:$0xff]
          %v2160 = vsel %vm2112, %v2157, 0.0
          %2161 = vadd.xlane.f32.xlu0 %v2160
          %v2162 = vpop.xlane.xlu0 %2161
          %v2163 = vrcp.pop 64.0
          %v2164 = vmul.f32 %v2162, %v2163
          %v2165 = vsub.f32 %v2157, %v2164
          %v2166 = vmul.f32 %v2165, %v2165
          %v2167 = vsel %vm2112, %v2166, 0.0
          %2168 = vadd.xlane.f32.xlu0 %v2167
          %v2169 = vpop.xlane.xlu0 %2168
          %v2170 = vmul.f32 %v2169, %v2163
          %v2171 = vadd.f32 %v2170, 1e-05
          %v2172 = vrsqrt.pop %v2171
          %v2173 = vmul.f32 %v2165, %v2172
          %v2174 = vmul.f32 %v2173, %v2158
          %v2175 = vadd.f32 %v2174, %v2159
          %v2176 = vmul.f32 %v2175, 0.5
          %v2177 = vtanh.pop %v2176
          %v2178 = vmul.f32 %v2177, 0.5
          %v2179 = vadd.f32 %v2178, 0.5
          %v2180 = vmul.f32 %v2175, %v2179
          %2181 = vst.msk [vmem:[#allocation3] sm:$0xff] %vm2112, %v2180
        $region80: #{fwd.1} parent=39 // pred_fallthru
          _
        %p2182 = scmp.eq.s32.totalorder %s19, 6
        // Predicated region
        $region81: #{fwd.1} parent=39 // pred_check
          %p2183 = pneg %p2182
        $region82: #{fwd.1} parent=39 // pred_check_branch
          %2185 = sbr.rel (%p2183) target = $region84
        $region83: #{fwd.1} parent=39 // pred_region
          %v2186 = vld [vmem:[#allocation3] sm:$0xff]
          %v2187 = vld [vmem:[%s242] sm:$0xf]
          %v2188 = vld [vmem:[%s242 + $0x4] sm:$0xf]
          %v2189 = vld [vmem:[%s242 + $0x8] sm:$0xf]
          %v2190 = vld [vmem:[%s242 + $0xc] sm:$0xf]
          %v2191 = vld [vmem:[%s242 + $0x10] sm:$0xf]
          %v2192 = vld [vmem:[%s242 + $0x14] sm:$0xf]
          %v2193 = vld [vmem:[%s242 + $0x18] sm:$0xf]
          %v2194 = vld [vmem:[%s242 + $0x1c] sm:$0xf]
          %v2195 = vpack.c.bf16 %v2186, %v2186
          %v2196 = vld [vmem:[#allocation2] sm:$0xff]
          %v2197 = vld [vmem:[#allocation2 + $0x8] sm:$0xff]
          %v2198 = vld [vmem:[%s242 + $0x20] sm:$0xf]
          %v2199 = vld [vmem:[%s242 + $0x24] sm:$0xf]
          %v2200 = vld [vmem:[%s242 + $0x28] sm:$0xf]
          %v2201 = vld [vmem:[%s242 + $0x2c] sm:$0xf]
          %v2202 = vld [vmem:[%s242 + $0x30] sm:$0xf]
          %v2203 = vld [vmem:[%s242 + $0x34] sm:$0xf]
          %v2204 = vld [vmem:[%s242 + $0x38] sm:$0xf]
          %v2205 = vld [vmem:[%s242 + $0x3c] sm:$0xf]
          %v2206 = vld [vmem:[%s242 + $0x40] sm:$0xf]
          %v2207 = vld [vmem:[%s242 + $0x44] sm:$0xf]
          %v2208 = vld [vmem:[%s242 + $0x48] sm:$0xf]
          %v2209 = vld [vmem:[%s242 + $0x4c] sm:$0xf]
          %v2210 = vld [vmem:[%s242 + $0x50] sm:$0xf]
          %v2211 = vld [vmem:[%s242 + $0x54] sm:$0xf]
          %v2212 = vld [vmem:[%s242 + $0x58] sm:$0xf]
          %v2213 = vld [vmem:[%s242 + $0x5c] sm:$0xf]
          %v2214 = vld [vmem:[%s242 + $0x60] sm:$0xf]
          %v2215 = vld [vmem:[%s242 + $0x64] sm:$0xf]
          %v2216 = vld [vmem:[%s242 + $0x68] sm:$0xf]
          %v2217 = vld [vmem:[%s242 + $0x6c] sm:$0xf]
          %v2218 = vld [vmem:[%s242 + $0x70] sm:$0xf]
          %v2219 = vld [vmem:[%s242 + $0x74] sm:$0xf]
          %v2220 = vld [vmem:[%s242 + $0x78] sm:$0xf]
          %v2221 = vld [vmem:[%s242 + $0x7c] sm:$0xf]
          %v2222 = vld [vmem:[%s242 + $0x80] sm:$0xf]
          %v2223 = vld [vmem:[%s242 + $0x84] sm:$0xf]
          %v2224 = vld [vmem:[%s242 + $0x88] sm:$0xf]
          %v2225 = vld [vmem:[%s242 + $0x8c] sm:$0xf]
          %v2226 = vld [vmem:[%s242 + $0x90] sm:$0xf]
          %v2227 = vld [vmem:[%s242 + $0x94] sm:$0xf]
          %v2228 = vld [vmem:[%s242 + $0x98] sm:$0xf]
          %v2229 = vld [vmem:[%s242 + $0x9c] sm:$0xf]
          %v2230 = vpack.c.bf16 %v2196, %v2196
          %v2231 = vpack.c.bf16 %v2197, %v2197
          %v2264 = vunpack.c.l.b16 %v2198
          %v2265 = vunpack.c.l.b16 %v2199
          %v2266 = vunpack.c.l.b16 %v2200
          %v2267 = vunpack.c.l.b16 %v2201
          %v2268 = vunpack.c.l.b16 %v2202
          %v2269 = vunpack.c.l.b16 %v2203
          %v2270 = vunpack.c.l.b16 %v2204
          %v2271 = vunpack.c.l.b16 %v2205
          %v2272 = vunpack.c.l.b16 %v2206
          %v2273 = vunpack.c.l.b16 %v2207
          %v2274 = vunpack.c.l.b16 %v2208
          %v2275 = vunpack.c.l.b16 %v2209
          %v2276 = vunpack.c.l.b16 %v2210
          %v2277 = vunpack.c.l.b16 %v2211
          %v2278 = vunpack.c.l.b16 %v2212
          %v2279 = vunpack.c.l.b16 %v2213
          %v2280 = vunpack.c.l.b16 %v2214
          %v2281 = vunpack.c.l.b16 %v2215
          %v2282 = vunpack.c.l.b16 %v2216
          %v2283 = vunpack.c.l.b16 %v2217
          %v2284 = vunpack.c.l.b16 %v2218
          %v2285 = vunpack.c.l.b16 %v2219
          %v2286 = vunpack.c.l.b16 %v2220
          %v2287 = vunpack.c.l.b16 %v2221
          %v2288 = vunpack.c.l.b16 %v2222
          %v2289 = vunpack.c.l.b16 %v2223
          %v2290 = vunpack.c.l.b16 %v2224
          %v2291 = vunpack.c.l.b16 %v2225
          %v2292 = vunpack.c.l.b16 %v2226
          %v2293 = vunpack.c.l.b16 %v2227
          %v2294 = vunpack.c.l.b16 %v2228
          %v2295 = vunpack.c.l.b16 %v2229
          %v2296 = vpack.c.b16 %v2265, %v2264
          %v2297 = vpack.c.b16 %v2267, %v2266
          %v2298 = vpack.c.b16 %v2269, %v2268
          %v2299 = vpack.c.b16 %v2271, %v2270
          %v2300 = vpack.c.b16 %v2273, %v2272
          %v2301 = vpack.c.b16 %v2275, %v2274
          %v2302 = vpack.c.b16 %v2277, %v2276
          %v2303 = vpack.c.b16 %v2279, %v2278
          %v2304 = vpack.c.b16 %v2281, %v2280
          %v2305 = vpack.c.b16 %v2283, %v2282
          %v2306 = vpack.c.b16 %v2285, %v2284
          %v2307 = vpack.c.b16 %v2287, %v2286
          %v2308 = vpack.c.b16 %v2289, %v2288
          %v2309 = vpack.c.b16 %v2291, %v2290
          %v2310 = vpack.c.b16 %v2293, %v2292
          %v2311 = vpack.c.b16 %v2295, %v2294
          %2328 = vmatprep.subr.bf16.mxu0 0
          %2329 = vmatpush1.bf16.msra.mxu0 %v2296
          %2330 = vmatprep.subr.bf16.mxu0 0
          %2331 = vmatpush1.bf16.msra.mxu0 %v2297
          %2332 = vmatprep.subr.bf16.mxu0 0
          %2333 = vmatpush1.bf16.msra.mxu0 %v2298
          %2334 = vmatprep.subr.bf16.mxu0 0
          %2335 = vmatpush1.bf16.msra.mxu0 %v2299
          %2336 = vmatprep.subr.bf16.mxu0 0
          %2337 = vmatpush1.bf16.msra.mxu0 %v2300
          %2338 = vmatprep.subr.bf16.mxu0 0
          %2339 = vmatpush1.bf16.msra.mxu0 %v2301
          %2340 = vmatprep.subr.bf16.mxu0 0
          %2341 = vmatpush1.bf16.msra.mxu0 %v2302
          %2342 = vmatprep.subr.bf16.mxu0 0
          %2343 = vmatpush1.bf16.msra.mxu0 %v2303
          %2344 = vmatprep.subr.bf16.mxu0 0
          %2345 = vmatpush1.bf16.msra.mxu0 %v2304
          %2346 = vmatprep.subr.bf16.mxu0 0
          %2347 = vmatpush1.bf16.msra.mxu0 %v2305
          %2348 = vmatprep.subr.bf16.mxu0 0
          %2349 = vmatpush1.bf16.msra.mxu0 %v2306
          %2350 = vmatprep.subr.bf16.mxu0 0
          %2351 = vmatpush1.bf16.msra.mxu0 %v2307
          %2352 = vmatprep.subr.bf16.mxu0 0
          %2353 = vmatpush1.bf16.msra.mxu0 %v2308
          %2354 = vmatprep.subr.bf16.mxu0 0
          %2355 = vmatpush1.bf16.msra.mxu0 %v2309
          %2356 = vmatprep.subr.bf16.mxu0 0
          %2357 = vmatpush1.bf16.msra.mxu0 %v2310
          %2358 = vmatprep.subr.bf16.mxu0 0
          %2359 = vmatpush1.bf16.msra.mxu0 %v2311
          %2360 = vmatprep.mubr.bf16.mxu0 %v2231
          %2361 = vmatmul.mubr.bf16.gmra.mrb[0].mxu0 %v2230
          %v2362 = vpop.f32.mrb[0].mxu0
          %v2363 = vadd.f32 0.0, %v2362
          %v2364 = vpop.f32.mrb[0].mxu0
          %v2365 = vpop.f32.mrb[0].mxu0
          %v2366 = vpop.f32.mrb[0].mxu0
          %2367 = vdwg.mxu0
          %v2376 = vunpack.c.l.b16 %v2187
          %v2377 = vunpack.c.l.b16 %v2188
          %v2378 = vunpack.c.l.b16 %v2189
          %v2379 = vunpack.c.l.b16 %v2190
          %v2380 = vunpack.c.l.b16 %v2191
          %v2381 = vunpack.c.l.b16 %v2192
          %v2382 = vunpack.c.l.b16 %v2193
          %v2383 = vunpack.c.l.b16 %v2194
          %v2384 = vpack.c.b16 %v2377, %v2376
          %v2385 = vpack.c.b16 %v2379, %v2378
          %v2386 = vpack.c.b16 %v2381, %v2380
          %v2387 = vpack.c.b16 %v2383, %v2382
          %vm2392 = vcmask 523264
          %v2394 = vsel %vm2392, %v2195, 0
          %2396 = vmatprep.subr.bf16.mxu0 0
          %2397 = vmatpush1.bf16.msra.mxu0 %v2384
          %2398 = vmatprep.subr.bf16.mxu0 0
          %2399 = vmatpush1.bf16.msra.mxu0 %v2385
          %2400 = vmatprep.subr.bf16.mxu0 0
          %2401 = vmatpush1.bf16.msra.mxu0 %v2386
          %2402 = vmatprep.subr.bf16.mxu0 0
          %2403 = vmatpush1.bf16.msra.mxu0 %v2387
          %2404 = vmatprep.subr.bf16.mxu0 0
          %2405 = vmatpush1.bf16.msra.mxu0 0
          %2406 = vmatprep.subr.bf16.mxu0 0
          %2407 = vmatpush1.bf16.msra.mxu0 0
          %2408 = vmatprep.subr.bf16.mxu0 0
          %2409 = vmatpush1.bf16.msra.mxu0 0
          %2410 = vmatprep.subr.bf16.mxu0 0
          %2411 = vmatpush1.bf16.msra.mxu0 0
          %2412 = vmatprep.subr.bf16.mxu0 0
          %2413 = vmatpush1.bf16.msra.mxu0 0
          %2414 = vmatprep.subr.bf16.mxu0 0
          %2415 = vmatpush1.bf16.msra.mxu0 0
          %2416 = vmatprep.subr.bf16.mxu0 0
          %2417 = vmatpush1.bf16.msra.mxu0 0
          %2418 = vmatprep.subr.bf16.mxu0 0
          %2419 = vmatpush1.bf16.msra.mxu0 0
          %2420 = vmatprep.subr.bf16.mxu0 0
          %2421 = vmatpush1.bf16.msra.mxu0 0
          %2422 = vmatprep.subr.bf16.mxu0 0
          %2423 = vmatpush1.bf16.msra.mxu0 0
          %2424 = vmatprep.subr.bf16.mxu0 0
          %2425 = vmatpush1.bf16.msra.mxu0 0
          %2426 = vmatprep.subr.bf16.mxu0 0
          %2427 = vmatpush1.bf16.msra.mxu0 0
          %2428 = vmatprep.mubr.bf16.mxu0 0
          %2429 = vmatmul.mubr.bf16.gmra.mrb[0].mxu0 %v2394
          %v2430 = vpop.f32.mrb[0].mxu0
          %v2431 = vadd.f32 %v2363, %v2430
          %v2432 = vpop.f32.mrb[0].mxu0
          %v2433 = vpop.f32.mrb[0].mxu0
          %v2434 = vpop.f32.mrb[0].mxu0
          %2435 = vdwg.mxu0
          %v2436 = vld [vmem:[#allocation11 + $0x21] ss:$0 sm:$0xff]
          %v2437 = vadd.f32 %v2431, %v2436
          %v2438 = vld [vmem:[#allocation11 + $0x22] ss:$0 sm:$0xff]
          %v2439 = vld [vmem:[#allocation11 + $0x23] ss:$0 sm:$0xff]
          %v2440 = vsel %vm2392, %v2437, 0.0
          %2441 = vadd.xlane.f32.xlu0 %v2440
          %v2442 = vpop.xlane.xlu0 %2441
          %v2443 = vrcp.pop 64.0
          %v2444 = vmul.f32 %v2442, %v2443
          %v2445 = vsub.f32 %v2437, %v2444
          %v2446 = vmul.f32 %v2445, %v2445
          %v2447 = vsel %vm2392, %v2446, 0.0
          %2448 = vadd.xlane.f32.xlu0 %v2447
          %v2449 = vpop.xlane.xlu0 %2448
          %v2450 = vmul.f32 %v2449, %v2443
          %v2451 = vadd.f32 %v2450, 1e-05
          %v2452 = vrsqrt.pop %v2451
          %v2453 = vmul.f32 %v2445, %v2452
          %v2454 = vmul.f32 %v2453, %v2438
          %v2455 = vadd.f32 %v2454, %v2439
          %v2456 = vmul.f32 %v2455, 0.5
          %v2457 = vtanh.pop %v2456
          %v2458 = vmul.f32 %v2457, 0.5
          %v2459 = vadd.f32 %v2458, 0.5
          %v2460 = vmul.f32 %v2455, %v2459
          %s2461 = scalar_lea.vmem [#allocation4], 16
          %v2462 = vld [vmem:[%s2461] sm:$0xff]
          %v2463 = vadd.f32 %v2460, %v2462
          %2464 = vst.msk [vmem:[#allocation3] sm:$0xff] %vm2392, %v2463
        $region84: #{fwd.1} parent=39 // pred_fallthru
          _
        %p2465 = scmp.eq.s32.totalorder %s19, 7
        // Predicated region
        $region85: #{fwd.1} parent=39 // pred_check
          %p2466 = pneg %p2465
        $region86: #{fwd.1} parent=39 // pred_check_branch
          %2468 = sbr.rel (%p2466) target = $region88
        $region87: #{fwd.1} parent=39 // pred_region
          %v2469 = vld [vmem:[#allocation3] sm:$0xff]
          %v2470 = vld [vmem:[%s242] sm:$0xf]
          %v2471 = vld [vmem:[%s242 + $0x4] sm:$0xf]
          %v2472 = vld [vmem:[%s242 + $0x8] sm:$0xf]
          %v2473 = vld [vmem:[%s242 + $0xc] sm:$0xf]
          %v2474 = vld [vmem:[%s242 + $0x10] sm:$0xf]
          %v2475 = vld [vmem:[%s242 + $0x14] sm:$0xf]
          %v2476 = vld [vmem:[%s242 + $0x18] sm:$0xf]
          %v2477 = vld [vmem:[%s242 + $0x1c] sm:$0xf]
          %v2478 = vpack.c.bf16 %v2469, %v2469
          %v2479 = vld [vmem:[#allocation2] sm:$0xff]
          %v2480 = vld [vmem:[#allocation2 + $0x8] sm:$0xff]
          %v2481 = vld [vmem:[%s242 + $0x20] sm:$0xf]
          %v2482 = vld [vmem:[%s242 + $0x24] sm:$0xf]
          %v2483 = vld [vmem:[%s242 + $0x28] sm:$0xf]
          %v2484 = vld [vmem:[%s242 + $0x2c] sm:$0xf]
          %v2485 = vld [vmem:[%s242 + $0x30] sm:$0xf]
          %v2486 = vld [vmem:[%s242 + $0x34] sm:$0xf]
          %v2487 = vld [vmem:[%s242 + $0x38] sm:$0xf]
          %v2488 = vld [vmem:[%s242 + $0x3c] sm:$0xf]
          %v2489 = vld [vmem:[%s242 + $0x40] sm:$0xf]
          %v2490 = vld [vmem:[%s242 + $0x44] sm:$0xf]
          %v2491 = vld [vmem:[%s242 + $0x48] sm:$0xf]
          %v2492 = vld [vmem:[%s242 + $0x4c] sm:$0xf]
          %v2493 = vld [vmem:[%s242 + $0x50] sm:$0xf]
          %v2494 = vld [vmem:[%s242 + $0x54] sm:$0xf]
          %v2495 = vld [vmem:[%s242 + $0x58] sm:$0xf]
          %v2496 = vld [vmem:[%s242 + $0x5c] sm:$0xf]
          %v2497 = vld [vmem:[%s242 + $0x60] sm:$0xf]
          %v2498 = vld [vmem:[%s242 + $0x64] sm:$0xf]
          %v2499 = vld [vmem:[%s242 + $0x68] sm:$0xf]
          %v2500 = vld [vmem:[%s242 + $0x6c] sm:$0xf]
          %v2501 = vld [vmem:[%s242 + $0x70] sm:$0xf]
          %v2502 = vld [vmem:[%s242 + $0x74] sm:$0xf]
          %v2503 = vld [vmem:[%s242 + $0x78] sm:$0xf]
          %v2504 = vld [vmem:[%s242 + $0x7c] sm:$0xf]
          %v2505 = vld [vmem:[%s242 + $0x80] sm:$0xf]
          %v2506 = vld [vmem:[%s242 + $0x84] sm:$0xf]
          %v2507 = vld [vmem:[%s242 + $0x88] sm:$0xf]
          %v2508 = vld [vmem:[%s242 + $0x8c] sm:$0xf]
          %v2509 = vld [vmem:[%s242 + $0x90] sm:$0xf]
          %v2510 = vld [vmem:[%s242 + $0x94] sm:$0xf]
          %v2511 = vld [vmem:[%s242 + $0x98] sm:$0xf]
          %v2512 = vld [vmem:[%s242 + $0x9c] sm:$0xf]
          %v2513 = vpack.c.bf16 %v2479, %v2479
          %v2514 = vpack.c.bf16 %v2480, %v2480
          %v2547 = vunpack.c.l.b16 %v2481
          %v2548 = vunpack.c.l.b16 %v2482
          %v2549 = vunpack.c.l.b16 %v2483
          %v2550 = vunpack.c.l.b16 %v2484
          %v2551 = vunpack.c.l.b16 %v2485
          %v2552 = vunpack.c.l.b16 %v2486
          %v2553 = vunpack.c.l.b16 %v2487
          %v2554 = vunpack.c.l.b16 %v2488
          %v2555 = vunpack.c.l.b16 %v2489
          %v2556 = vunpack.c.l.b16 %v2490
          %v2557 = vunpack.c.l.b16 %v2491
          %v2558 = vunpack.c.l.b16 %v2492
          %v2559 = vunpack.c.l.b16 %v2493
          %v2560 = vunpack.c.l.b16 %v2494
          %v2561 = vunpack.c.l.b16 %v2495
          %v2562 = vunpack.c.l.b16 %v2496
          %v2563 = vunpack.c.l.b16 %v2497
          %v2564 = vunpack.c.l.b16 %v2498
          %v2565 = vunpack.c.l.b16 %v2499
          %v2566 = vunpack.c.l.b16 %v2500
          %v2567 = vunpack.c.l.b16 %v2501
          %v2568 = vunpack.c.l.b16 %v2502
          %v2569 = vunpack.c.l.b16 %v2503
          %v2570 = vunpack.c.l.b16 %v2504
          %v2571 = vunpack.c.l.b16 %v2505
          %v2572 = vunpack.c.l.b16 %v2506
          %v2573 = vunpack.c.l.b16 %v2507
          %v2574 = vunpack.c.l.b16 %v2508
          %v2575 = vunpack.c.l.b16 %v2509
          %v2576 = vunpack.c.l.b16 %v2510
          %v2577 = vunpack.c.l.b16 %v2511
          %v2578 = vunpack.c.l.b16 %v2512
          %v2579 = vpack.c.b16 %v2548, %v2547
          %v2580 = vpack.c.b16 %v2550, %v2549
          %v2581 = vpack.c.b16 %v2552, %v2551
          %v2582 = vpack.c.b16 %v2554, %v2553
          %v2583 = vpack.c.b16 %v2556, %v2555
          %v2584 = vpack.c.b16 %v2558, %v2557
          %v2585 = vpack.c.b16 %v2560, %v2559
          %v2586 = vpack.c.b16 %v2562, %v2561
          %v2587 = vpack.c.b16 %v2564, %v2563
          %v2588 = vpack.c.b16 %v2566, %v2565
          %v2589 = vpack.c.b16 %v2568, %v2567
          %v2590 = vpack.c.b16 %v2570, %v2569
          %v2591 = vpack.c.b16 %v2572, %v2571
          %v2592 = vpack.c.b16 %v2574, %v2573
          %v2593 = vpack.c.b16 %v2576, %v2575
          %v2594 = vpack.c.b16 %v2578, %v2577
          %2611 = vmatprep.subr.bf16.mxu0 0
          %2612 = vmatpush1.bf16.msra.mxu0 %v2579
          %2613 = vmatprep.subr.bf16.mxu0 0
          %2614 = vmatpush1.bf16.msra.mxu0 %v2580
          %2615 = vmatprep.subr.bf16.mxu0 0
          %2616 = vmatpush1.bf16.msra.mxu0 %v2581
          %2617 = vmatprep.subr.bf16.mxu0 0
          %2618 = vmatpush1.bf16.msra.mxu0 %v2582
          %2619 = vmatprep.subr.bf16.mxu0 0
          %2620 = vmatpush1.bf16.msra.mxu0 %v2583
          %2621 = vmatprep.subr.bf16.mxu0 0
          %2622 = vmatpush1.bf16.msra.mxu0 %v2584
          %2623 = vmatprep.subr.bf16.mxu0 0
          %2624 = vmatpush1.bf16.msra.mxu0 %v2585
          %2625 = vmatprep.subr.bf16.mxu0 0
          %2626 = vmatpush1.bf16.msra.mxu0 %v2586
          %2627 = vmatprep.subr.bf16.mxu0 0
          %2628 = vmatpush1.bf16.msra.mxu0 %v2587
          %2629 = vmatprep.subr.bf16.mxu0 0
          %2630 = vmatpush1.bf16.msra.mxu0 %v2588
          %2631 = vmatprep.subr.bf16.mxu0 0
          %2632 = vmatpush1.bf16.msra.mxu0 %v2589
          %2633 = vmatprep.subr.bf16.mxu0 0
          %2634 = vmatpush1.bf16.msra.mxu0 %v2590
          %2635 = vmatprep.subr.bf16.mxu0 0
          %2636 = vmatpush1.bf16.msra.mxu0 %v2591
          %2637 = vmatprep.subr.bf16.mxu0 0
          %2638 = vmatpush1.bf16.msra.mxu0 %v2592
          %2639 = vmatprep.subr.bf16.mxu0 0
          %2640 = vmatpush1.bf16.msra.mxu0 %v2593
          %2641 = vmatprep.subr.bf16.mxu0 0
          %2642 = vmatpush1.bf16.msra.mxu0 %v2594
          %2643 = vmatprep.mubr.bf16.mxu0 %v2514
          %2644 = vmatmul.mubr.bf16.gmra.mrb[0].mxu0 %v2513
          %v2645 = vpop.f32.mrb[0].mxu0
          %v2646 = vadd.f32 0.0, %v2645
          %v2647 = vpop.f32.mrb[0].mxu0
          %v2648 = vpop.f32.mrb[0].mxu0
          %v2649 = vpop.f32.mrb[0].mxu0
          %2650 = vdwg.mxu0
          %v2659 = vunpack.c.l.b16 %v2470
          %v2660 = vunpack.c.l.b16 %v2471
          %v2661 = vunpack.c.l.b16 %v2472
          %v2662 = vunpack.c.l.b16 %v2473
          %v2663 = vunpack.c.l.b16 %v2474
          %v2664 = vunpack.c.l.b16 %v2475
          %v2665 = vunpack.c.l.b16 %v2476
          %v2666 = vunpack.c.l.b16 %v2477
          %v2667 = vpack.c.b16 %v2660, %v2659
          %v2668 = vpack.c.b16 %v2662, %v2661
          %v2669 = vpack.c.b16 %v2664, %v2663
          %v2670 = vpack.c.b16 %v2666, %v2665
          %vm2675 = vcmask 523264
          %v2677 = vsel %vm2675, %v2478, 0
          %2679 = vmatprep.subr.bf16.mxu0 0
          %2680 = vmatpush1.bf16.msra.mxu0 %v2667
          %2681 = vmatprep.subr.bf16.mxu0 0
          %2682 = vmatpush1.bf16.msra.mxu0 %v2668
          %2683 = vmatprep.subr.bf16.mxu0 0
          %2684 = vmatpush1.bf16.msra.mxu0 %v2669
          %2685 = vmatprep.subr.bf16.mxu0 0
          %2686 = vmatpush1.bf16.msra.mxu0 %v2670
          %2687 = vmatprep.subr.bf16.mxu0 0
          %2688 = vmatpush1.bf16.msra.mxu0 0
          %2689 = vmatprep.subr.bf16.mxu0 0
          %2690 = vmatpush1.bf16.msra.mxu0 0
          %2691 = vmatprep.subr.bf16.mxu0 0
          %2692 = vmatpush1.bf16.msra.mxu0 0
          %2693 = vmatprep.subr.bf16.mxu0 0
          %2694 = vmatpush1.bf16.msra.mxu0 0
          %2695 = vmatprep.subr.bf16.mxu0 0
          %2696 = vmatpush1.bf16.msra.mxu0 0
          %2697 = vmatprep.subr.bf16.mxu0 0
          %2698 = vmatpush1.bf16.msra.mxu0 0
          %2699 = vmatprep.subr.bf16.mxu0 0
          %2700 = vmatpush1.bf16.msra.mxu0 0
          %2701 = vmatprep.subr.bf16.mxu0 0
          %2702 = vmatpush1.bf16.msra.mxu0 0
          %2703 = vmatprep.subr.bf16.mxu0 0
          %2704 = vmatpush1.bf16.msra.mxu0 0
          %2705 = vmatprep.subr.bf16.mxu0 0
          %2706 = vmatpush1.bf16.msra.mxu0 0
          %2707 = vmatprep.subr.bf16.mxu0 0
          %2708 = vmatpush1.bf16.msra.mxu0 0
          %2709 = vmatprep.subr.bf16.mxu0 0
          %2710 = vmatpush1.bf16.msra.mxu0 0
          %2711 = vmatprep.mubr.bf16.mxu0 0
          %2712 = vmatmul.mubr.bf16.gmra.mrb[0].mxu0 %v2677
          %v2713 = vpop.f32.mrb[0].mxu0
          %v2714 = vadd.f32 %v2646, %v2713
          %v2715 = vpop.f32.mrb[0].mxu0
          %v2716 = vpop.f32.mrb[0].mxu0
          %v2717 = vpop.f32.mrb[0].mxu0
          %2718 = vdwg.mxu0
          %v2719 = vld [vmem:[#allocation11 + $0x24] ss:$0 sm:$0xff]
          %v2720 = vadd.f32 %v2714, %v2719
          %v2721 = vld [vmem:[#allocation11 + $0x25] ss:$0 sm:$0xff]
          %v2722 = vld [vmem:[#allocation11 + $0x26] ss:$0 sm:$0xff]
          %2723 = vadd.xlane.f32.xlu0 %v2720
          %v2724 = vpop.xlane.xlu0 %2723
          %v2725 = vrcp.pop 128.0
          %v2726 = vmul.f32 %v2724, %v2725
          %v2727 = vsub.f32 %v2720, %v2726
          %v2728 = vmul.f32 %v2727, %v2727
          %2729 = vadd.xlane.f32.xlu0 %v2728
          %v2730 = vpop.xlane.xlu0 %2729
          %v2731 = vmul.f32 %v2730, %v2725
          %v2732 = vadd.f32 %v2731, 1e-05
          %v2733 = vrsqrt.pop %v2732
          %v2734 = vmul.f32 %v2727, %v2733
          %v2735 = vmul.f32 %v2734, %v2721
          %v2736 = vadd.f32 %v2735, %v2722
          %v2737 = vmul.f32 %v2736, 0.5
          %v2738 = vtanh.pop %v2737
          %v2739 = vmul.f32 %v2738, 0.5
          %v2740 = vadd.f32 %v2739, 0.5
          %v2741 = vmul.f32 %v2736, %v2740
          %s2742 = scalar_lea.vmem [#allocation4], 8
          %v2743 = vld [vmem:[%s2742] sm:$0xff]
          %v2744 = vadd.f32 %v2741, %v2743
          %2745 = vst [vmem:[#allocation3] sm:$0xff] %v2744
        $region88: #{fwd.1} parent=39 // pred_fallthru
          _
        %p2746 = scmp.eq.s32.totalorder %s19, 8
        // Predicated region
        $region89: #{fwd.1} parent=39 // pred_check
          %p2747 = pneg %p2746
        $region90: #{fwd.1} parent=39 // pred_check_branch
          %2749 = sbr.rel (%p2747) target = $region92
        $region91: #{fwd.1} parent=39 // pred_region
          %v2750 = vld [vmem:[#allocation3] sm:$0xff]
          %v2751 = vld [vmem:[%s242] sm:$0xf]
          %v2752 = vld [vmem:[%s242 + $0x4] sm:$0xf]
          %v2753 = vld [vmem:[%s242 + $0x8] sm:$0xf]
          %v2754 = vld [vmem:[%s242 + $0xc] sm:$0xf]
          %v2755 = vld [vmem:[%s242 + $0x10] sm:$0xf]
          %v2756 = vld [vmem:[%s242 + $0x14] sm:$0xf]
          %v2757 = vld [vmem:[%s242 + $0x18] sm:$0xf]
          %v2758 = vld [vmem:[%s242 + $0x1c] sm:$0xf]
          %v2759 = vld [vmem:[%s242 + $0x20] sm:$0xf]
          %v2760 = vld [vmem:[%s242 + $0x24] sm:$0xf]
          %v2761 = vld [vmem:[%s242 + $0x28] sm:$0xf]
          %v2762 = vld [vmem:[%s242 + $0x2c] sm:$0xf]
          %v2763 = vld [vmem:[%s242 + $0x30] sm:$0xf]
          %v2764 = vld [vmem:[%s242 + $0x34] sm:$0xf]
          %v2765 = vld [vmem:[%s242 + $0x38] sm:$0xf]
          %v2766 = vld [vmem:[%s242 + $0x3c] sm:$0xf]
          %v2767 = vpack.c.bf16 %v2750, %v2750
          %v2768 = vld [vmem:[#allocation2] sm:$0xff]
          %v2769 = vld [vmem:[#allocation2 + $0x8] sm:$0xff]
          %v2770 = vld [vmem:[%s242 + $0x40] sm:$0xf]
          %v2771 = vld [vmem:[%s242 + $0x44] sm:$0xf]
          %v2772 = vld [vmem:[%s242 + $0x48] sm:$0xf]
          %v2773 = vld [vmem:[%s242 + $0x4c] sm:$0xf]
          %v2774 = vld [vmem:[%s242 + $0x50] sm:$0xf]
          %v2775 = vld [vmem:[%s242 + $0x54] sm:$0xf]
          %v2776 = vld [vmem:[%s242 + $0x58] sm:$0xf]
          %v2777 = vld [vmem:[%s242 + $0x5c] sm:$0xf]
          %v2778 = vld [vmem:[%s242 + $0x60] sm:$0xf]
          %v2779 = vld [vmem:[%s242 + $0x64] sm:$0xf]
          %v2780 = vld [vmem:[%s242 + $0x68] sm:$0xf]
          %v2781 = vld [vmem:[%s242 + $0x6c] sm:$0xf]
          %v2782 = vld [vmem:[%s242 + $0x70] sm:$0xf]
          %v2783 = vld [vmem:[%s242 + $0x74] sm:$0xf]
          %v2784 = vld [vmem:[%s242 + $0x78] sm:$0xf]
          %v2785 = vld [vmem:[%s242 + $0x7c] sm:$0xf]
          %v2786 = vld [vmem:[%s242 + $0x80] sm:$0xf]
          %v2787 = vld [vmem:[%s242 + $0x84] sm:$0xf]
          %v2788 = vld [vmem:[%s242 + $0x88] sm:$0xf]
          %v2789 = vld [vmem:[%s242 + $0x8c] sm:$0xf]
          %v2790 = vld [vmem:[%s242 + $0x90] sm:$0xf]
          %v2791 = vld [vmem:[%s242 + $0x94] sm:$0xf]
          %v2792 = vld [vmem:[%s242 + $0x98] sm:$0xf]
          %v2793 = vld [vmem:[%s242 + $0x9c] sm:$0xf]
          %v2794 = vld [vmem:[%s242 + $0xa0] sm:$0xf]
          %v2795 = vld [vmem:[%s242 + $0xa4] sm:$0xf]
          %v2796 = vld [vmem:[%s242 + $0xa8] sm:$0xf]
          %v2797 = vld [vmem:[%s242 + $0xac] sm:$0xf]
          %v2798 = vld [vmem:[%s242 + $0xb0] sm:$0xf]
          %v2799 = vld [vmem:[%s242 + $0xb4] sm:$0xf]
          %v2800 = vld [vmem:[%s242 + $0xb8] sm:$0xf]
          %v2801 = vld [vmem:[%s242 + $0xbc] sm:$0xf]
          %v2802 = vpack.c.bf16 %v2768, %v2768
          %v2803 = vpack.c.bf16 %v2769, %v2769
          %v2836 = vunpack.c.l.b16 %v2770
          %v2837 = vunpack.c.l.b16 %v2771
          %v2838 = vunpack.c.l.b16 %v2772
          %v2839 = vunpack.c.l.b16 %v2773
          %v2840 = vunpack.c.l.b16 %v2774
          %v2841 = vunpack.c.l.b16 %v2775
          %v2842 = vunpack.c.l.b16 %v2776
          %v2843 = vunpack.c.l.b16 %v2777
          %v2844 = vunpack.c.l.b16 %v2778
          %v2845 = vunpack.c.l.b16 %v2779
          %v2846 = vunpack.c.l.b16 %v2780
          %v2847 = vunpack.c.l.b16 %v2781
          %v2848 = vunpack.c.l.b16 %v2782
          %v2849 = vunpack.c.l.b16 %v2783
          %v2850 = vunpack.c.l.b16 %v2784
          %v2851 = vunpack.c.l.b16 %v2785
          %v2852 = vunpack.c.l.b16 %v2786
          %v2853 = vunpack.c.l.b16 %v2787
          %v2854 = vunpack.c.l.b16 %v2788
          %v2855 = vunpack.c.l.b16 %v2789
          %v2856 = vunpack.c.l.b16 %v2790
          %v2857 = vunpack.c.l.b16 %v2791
          %v2858 = vunpack.c.l.b16 %v2792
          %v2859 = vunpack.c.l.b16 %v2793
          %v2860 = vunpack.c.l.b16 %v2794
          %v2861 = vunpack.c.l.b16 %v2795
          %v2862 = vunpack.c.l.b16 %v2796
          %v2863 = vunpack.c.l.b16 %v2797
          %v2864 = vunpack.c.l.b16 %v2798
          %v2865 = vunpack.c.l.b16 %v2799
          %v2866 = vunpack.c.l.b16 %v2800
          %v2867 = vunpack.c.l.b16 %v2801
          %v2868 = vpack.c.b16 %v2837, %v2836
          %v2869 = vpack.c.b16 %v2839, %v2838
          %v2870 = vpack.c.b16 %v2841, %v2840
          %v2871 = vpack.c.b16 %v2843, %v2842
          %v2872 = vpack.c.b16 %v2845, %v2844
          %v2873 = vpack.c.b16 %v2847, %v2846
          %v2874 = vpack.c.b16 %v2849, %v2848
          %v2875 = vpack.c.b16 %v2851, %v2850
          %v2876 = vpack.c.b16 %v2853, %v2852
          %v2877 = vpack.c.b16 %v2855, %v2854
          %v2878 = vpack.c.b16 %v2857, %v2856
          %v2879 = vpack.c.b16 %v2859, %v2858
          %v2880 = vpack.c.b16 %v2861, %v2860
          %v2881 = vpack.c.b16 %v2863, %v2862
          %v2882 = vpack.c.b16 %v2865, %v2864
          %v2883 = vpack.c.b16 %v2867, %v2866
          %2900 = vmatprep.subr.bf16.mxu0 0
          %2901 = vmatpush1.bf16.msra.mxu0 %v2868
          %2902 = vmatprep.subr.bf16.mxu0 0
          %2903 = vmatpush1.bf16.msra.mxu0 %v2869
          %2904 = vmatprep.subr.bf16.mxu0 0
          %2905 = vmatpush1.bf16.msra.mxu0 %v2870
          %2906 = vmatprep.subr.bf16.mxu0 0
          %2907 = vmatpush1.bf16.msra.mxu0 %v2871
          %2908 = vmatprep.subr.bf16.mxu0 0
          %2909 = vmatpush1.bf16.msra.mxu0 %v2872
          %2910 = vmatprep.subr.bf16.mxu0 0
          %2911 = vmatpush1.bf16.msra.mxu0 %v2873
          %2912 = vmatprep.subr.bf16.mxu0 0
          %2913 = vmatpush1.bf16.msra.mxu0 %v2874
          %2914 = vmatprep.subr.bf16.mxu0 0
          %2915 = vmatpush1.bf16.msra.mxu0 %v2875
          %2916 = vmatprep.subr.bf16.mxu0 0
          %2917 = vmatpush1.bf16.msra.mxu0 %v2876
          %2918 = vmatprep.subr.bf16.mxu0 0
          %2919 = vmatpush1.bf16.msra.mxu0 %v2877
          %2920 = vmatprep.subr.bf16.mxu0 0
          %2921 = vmatpush1.bf16.msra.mxu0 %v2878
          %2922 = vmatprep.subr.bf16.mxu0 0
          %2923 = vmatpush1.bf16.msra.mxu0 %v2879
          %2924 = vmatprep.subr.bf16.mxu0 0
          %2925 = vmatpush1.bf16.msra.mxu0 %v2880
          %2926 = vmatprep.subr.bf16.mxu0 0
          %2927 = vmatpush1.bf16.msra.mxu0 %v2881
          %2928 = vmatprep.subr.bf16.mxu0 0
          %2929 = vmatpush1.bf16.msra.mxu0 %v2882
          %2930 = vmatprep.subr.bf16.mxu0 0
          %2931 = vmatpush1.bf16.msra.mxu0 %v2883
          %2932 = vmatprep.mubr.bf16.mxu0 %v2803
          %2933 = vmatmul.mubr.bf16.gmra.mrb[0].mxu0 %v2802
          %v2934 = vpop.f32.mrb[0].mxu0
          %v2935 = vadd.f32 0.0, %v2934
          %v2936 = vpop.f32.mrb[0].mxu0
          %v2937 = vpop.f32.mrb[0].mxu0
          %v2938 = vpop.f32.mrb[0].mxu0
          %2939 = vdwg.mxu0
          %v2956 = vunpack.c.l.b16 %v2751
          %v2957 = vunpack.c.l.b16 %v2752
          %v2958 = vunpack.c.l.b16 %v2753
          %v2959 = vunpack.c.l.b16 %v2754
          %v2960 = vunpack.c.l.b16 %v2755
          %v2961 = vunpack.c.l.b16 %v2756
          %v2962 = vunpack.c.l.b16 %v2757
          %v2963 = vunpack.c.l.b16 %v2758
          %v2964 = vunpack.c.l.b16 %v2759
          %v2965 = vunpack.c.l.b16 %v2760
          %v2966 = vunpack.c.l.b16 %v2761
          %v2967 = vunpack.c.l.b16 %v2762
          %v2968 = vunpack.c.l.b16 %v2763
          %v2969 = vunpack.c.l.b16 %v2764
          %v2970 = vunpack.c.l.b16 %v2765
          %v2971 = vunpack.c.l.b16 %v2766
          %v2972 = vpack.c.b16 %v2957, %v2956
          %v2973 = vpack.c.b16 %v2959, %v2958
          %v2974 = vpack.c.b16 %v2961, %v2960
          %v2975 = vpack.c.b16 %v2963, %v2962
          %v2976 = vpack.c.b16 %v2965, %v2964
          %v2977 = vpack.c.b16 %v2967, %v2966
          %v2978 = vpack.c.b16 %v2969, %v2968
          %v2979 = vpack.c.b16 %v2971, %v2970
          %2988 = vmatprep.subr.bf16.mxu0 0
          %2989 = vmatpush1.bf16.msra.mxu0 %v2972
          %2990 = vmatprep.subr.bf16.mxu0 0
          %2991 = vmatpush1.bf16.msra.mxu0 %v2973
          %2992 = vmatprep.subr.bf16.mxu0 0
          %2993 = vmatpush1.bf16.msra.mxu0 %v2974
          %2994 = vmatprep.subr.bf16.mxu0 0
          %2995 = vmatpush1.bf16.msra.mxu0 %v2975
          %2996 = vmatprep.subr.bf16.mxu0 0
          %2997 = vmatpush1.bf16.msra.mxu0 %v2976
          %2998 = vmatprep.subr.bf16.mxu0 0
          %2999 = vmatpush1.bf16.msra.mxu0 %v2977
          %3000 = vmatprep.subr.bf16.mxu0 0
          %3001 = vmatpush1.bf16.msra.mxu0 %v2978
          %3002 = vmatprep.subr.bf16.mxu0 0
          %3003 = vmatpush1.bf16.msra.mxu0 %v2979
          %3004 = vmatprep.subr.bf16.mxu0 0
          %3005 = vmatpush1.bf16.msra.mxu0 0
          %3006 = vmatprep.subr.bf16.mxu0 0
          %3007 = vmatpush1.bf16.msra.mxu0 0
          %3008 = vmatprep.subr.bf16.mxu0 0
          %3009 = vmatpush1.bf16.msra.mxu0 0
          %3010 = vmatprep.subr.bf16.mxu0 0
          %3011 = vmatpush1.bf16.msra.mxu0 0
          %3012 = vmatprep.subr.bf16.mxu0 0
          %3013 = vmatpush1.bf16.msra.mxu0 0
          %3014 = vmatprep.subr.bf16.mxu0 0
          %3015 = vmatpush1.bf16.msra.mxu0 0
          %3016 = vmatprep.subr.bf16.mxu0 0
          %3017 = vmatpush1.bf16.msra.mxu0 0
          %3018 = vmatprep.subr.bf16.mxu0 0
          %3019 = vmatpush1.bf16.msra.mxu0 0
          %3020 = vmatprep.mubr.bf16.mxu0 0
          %3021 = vmatmul.mubr.bf16.gmra.mrb[0].mxu0 %v2767
          %v3022 = vpop.f32.mrb[0].mxu0
          %v3023 = vadd.f32 %v2935, %v3022
          %v3024 = vpop.f32.mrb[0].mxu0
          %v3025 = vpop.f32.mrb[0].mxu0
          %v3026 = vpop.f32.mrb[0].mxu0
          %3027 = vdwg.mxu0
          %v3028 = vld [vmem:[#allocation11 + $0x27] ss:$0 sm:$0xff]
          %v3029 = vadd.f32 %v3023, %v3028
          %v3030 = vld [vmem:[#allocation11 + $0x30] ss:$0 sm:$0xff]
          %v3031 = vld [vmem:[#allocation11 + $0x31] ss:$0 sm:$0xff]
          %3032 = vadd.xlane.f32.xlu0 %v3029
          %v3033 = vpop.xlane.xlu0 %3032
          %v3034 = vrcp.pop 128.0
          %v3035 = vmul.f32 %v3033, %v3034
          %v3036 = vsub.f32 %v3029, %v3035
          %v3037 = vmul.f32 %v3036, %v3036
          %3038 = vadd.xlane.f32.xlu0 %v3037
          %v3039 = vpop.xlane.xlu0 %3038
          %v3040 = vmul.f32 %v3039, %v3034
          %v3041 = vadd.f32 %v3040, 1e-05
          %v3042 = vrsqrt.pop %v3041
          %v3043 = vmul.f32 %v3036, %v3042
          %v3044 = vmul.f32 %v3043, %v3030
          %v3045 = vadd.f32 %v3044, %v3031
          %v3046 = vmul.f32 %v3045, 0.5
          %v3047 = vtanh.pop %v3046
          %v3048 = vmul.f32 %v3047, 0.5
          %v3049 = vadd.f32 %v3048, 0.5
          %v3050 = vmul.f32 %v3045, %v3049
          %v3051 = vld [vmem:[#allocation4] sm:$0xff]
          %v3052 = vadd.f32 %v3050, %v3051
          %3053 = vst [vmem:[#allocation3] sm:$0xff] %v3052
        $region92: #{fwd.1} parent=39 // pred_fallthru
          _
        %p3054 = scmp.eq.s32.totalorder %s19, 9
        // Predicated region
        $region93: #{fwd.1} parent=39 // pred_check
          %p3055 = pneg %p3054
        $region94: #{fwd.1} parent=39 // pred_check_branch
          %3057 = sbr.rel (%p3055) target = $region96
        $region95: #{fwd.1} parent=39 // pred_region
          %v3058 = vld [vmem:[#allocation3] sm:$0xff]
          %v3059 = vld [vmem:[%s242] sm:$0xf]
          %v3060 = vld [vmem:[%s242 + $0x4] sm:$0xf]
          %v3061 = vld [vmem:[%s242 + $0x8] sm:$0xf]
          %v3062 = vld [vmem:[%s242 + $0xc] sm:$0xf]
          %v3063 = vld [vmem:[%s242 + $0x10] sm:$0xf]
          %v3064 = vld [vmem:[%s242 + $0x14] sm:$0xf]
          %v3065 = vld [vmem:[%s242 + $0x18] sm:$0xf]
          %v3066 = vld [vmem:[%s242 + $0x1c] sm:$0xf]
          %v3067 = vld [vmem:[%s242 + $0x20] sm:$0xf]
          %v3068 = vld [vmem:[%s242 + $0x24] sm:$0xf]
          %v3069 = vld [vmem:[%s242 + $0x28] sm:$0xf]
          %v3070 = vld [vmem:[%s242 + $0x2c] sm:$0xf]
          %v3071 = vld [vmem:[%s242 + $0x30] sm:$0xf]
          %v3072 = vld [vmem:[%s242 + $0x34] sm:$0xf]
          %v3073 = vld [vmem:[%s242 + $0x38] sm:$0xf]
          %v3074 = vld [vmem:[%s242 + $0x3c] sm:$0xf]
          %v3075 = vpack.c.bf16 %v3058, %v3058
          %v3092 = vunpack.c.l.b16 %v3059
          %v3093 = vunpack.c.l.b16 %v3060
          %v3094 = vunpack.c.l.b16 %v3061
          %v3095 = vunpack.c.l.b16 %v3062
          %v3096 = vunpack.c.l.b16 %v3063
          %v3097 = vunpack.c.l.b16 %v3064
          %v3098 = vunpack.c.l.b16 %v3065
          %v3099 = vunpack.c.l.b16 %v3066
          %v3100 = vunpack.c.l.b16 %v3067
          %v3101 = vunpack.c.l.b16 %v3068
          %v3102 = vunpack.c.l.b16 %v3069
          %v3103 = vunpack.c.l.b16 %v3070
          %v3104 = vunpack.c.l.b16 %v3071
          %v3105 = vunpack.c.l.b16 %v3072
          %v3106 = vunpack.c.l.b16 %v3073
          %v3107 = vunpack.c.l.b16 %v3074
          %v3108 = vpack.c.b16 %v3093, %v3092
          %v3109 = vpack.c.b16 %v3095, %v3094
          %v3110 = vpack.c.b16 %v3097, %v3096
          %v3111 = vpack.c.b16 %v3099, %v3098
          %v3112 = vpack.c.b16 %v3101, %v3100
          %v3113 = vpack.c.b16 %v3103, %v3102
          %v3114 = vpack.c.b16 %v3105, %v3104
          %v3115 = vpack.c.b16 %v3107, %v3106
          %3124 = vmatprep.subr.bf16.mxu0 0
          %3125 = vmatpush1.bf16.msra.mxu0 %v3108
          %3126 = vmatprep.subr.bf16.mxu0 0
          %3127 = vmatpush1.bf16.msra.mxu0 %v3109
          %3128 = vmatprep.subr.bf16.mxu0 0
          %3129 = vmatpush1.bf16.msra.mxu0 %v3110
          %3130 = vmatprep.subr.bf16.mxu0 0
          %3131 = vmatpush1.bf16.msra.mxu0 %v3111
          %3132 = vmatprep.subr.bf16.mxu0 0
          %3133 = vmatpush1.bf16.msra.mxu0 %v3112
          %3134 = vmatprep.subr.bf16.mxu0 0
          %3135 = vmatpush1.bf16.msra.mxu0 %v3113
          %3136 = vmatprep.subr.bf16.mxu0 0
          %3137 = vmatpush1.bf16.msra.mxu0 %v3114
          %3138 = vmatprep.subr.bf16.mxu0 0
          %3139 = vmatpush1.bf16.msra.mxu0 %v3115
          %3140 = vmatprep.subr.bf16.mxu0 0
          %3141 = vmatpush1.bf16.msra.mxu0 0
          %3142 = vmatprep.subr.bf16.mxu0 0
          %3143 = vmatpush1.bf16.msra.mxu0 0
          %3144 = vmatprep.subr.bf16.mxu0 0
          %3145 = vmatpush1.bf16.msra.mxu0 0
          %3146 = vmatprep.subr.bf16.mxu0 0
          %3147 = vmatpush1.bf16.msra.mxu0 0
          %3148 = vmatprep.subr.bf16.mxu0 0
          %3149 = vmatpush1.bf16.msra.mxu0 0
          %3150 = vmatprep.subr.bf16.mxu0 0
          %3151 = vmatpush1.bf16.msra.mxu0 0
          %3152 = vmatprep.subr.bf16.mxu0 0
          %3153 = vmatpush1.bf16.msra.mxu0 0
          %3154 = vmatprep.subr.bf16.mxu0 0
          %3155 = vmatpush1.bf16.msra.mxu0 0
          %3156 = vmatprep.mubr.bf16.mxu0 0
          %3157 = vmatmul.mubr.bf16.gmra.mrb[0].mxu0 %v3075
          %v3158 = vpop.f32.mrb[0].mxu0
          %v3159 = vadd.f32 0.0, %v3158
          %v3160 = vpop.f32.mrb[0].mxu0
          %v3161 = vpop.f32.mrb[0].mxu0
          %v3162 = vpop.f32.mrb[0].mxu0
          %3163 = vdwg.mxu0
          %v3164 = vld [vmem:[%s242 + $0x40] sm:$0xf]
          %v3165 = vld [vmem:[%s242 + $0x44] sm:$0xf]
          %v3166 = vld [vmem:[%s242 + $0x48] sm:$0xf]
          %v3167 = vld [vmem:[%s242 + $0x4c] sm:$0xf]
          %v3168 = vld [vmem:[%s242 + $0x50] sm:$0xf]
          %v3169 = vld [vmem:[%s242 + $0x54] sm:$0xf]
          %v3170 = vld [vmem:[%s242 + $0x58] sm:$0xf]
          %v3171 = vld [vmem:[%s242 + $0x5c] sm:$0xf]
          %v3172 = vld [vmem:[%s242 + $0x60] sm:$0xf]
          %v3173 = vld [vmem:[%s242 + $0x64] sm:$0xf]
          %v3174 = vld [vmem:[%s242 + $0x68] sm:$0xf]
          %v3175 = vld [vmem:[%s242 + $0x6c] sm:$0xf]
          %v3176 = vld [vmem:[%s242 + $0x70] sm:$0xf]
          %v3177 = vld [vmem:[%s242 + $0x74] sm:$0xf]
          %v3178 = vld [vmem:[%s242 + $0x78] sm:$0xf]
          %v3179 = vld [vmem:[%s242 + $0x7c] sm:$0xf]
          %v3196 = vunpack.c.l.b16 %v3164
          %v3197 = vunpack.c.l.b16 %v3165
          %v3198 = vunpack.c.l.b16 %v3166
          %v3199 = vunpack.c.l.b16 %v3167
          %v3200 = vunpack.c.l.b16 %v3168
          %v3201 = vunpack.c.l.b16 %v3169
          %v3202 = vunpack.c.l.b16 %v3170
          %v3203 = vunpack.c.l.b16 %v3171
          %v3204 = vunpack.c.l.b16 %v3172
          %v3205 = vunpack.c.l.b16 %v3173
          %v3206 = vunpack.c.l.b16 %v3174
          %v3207 = vunpack.c.l.b16 %v3175
          %v3208 = vunpack.c.l.b16 %v3176
          %v3209 = vunpack.c.l.b16 %v3177
          %v3210 = vunpack.c.l.b16 %v3178
          %v3211 = vunpack.c.l.b16 %v3179
          %v3212 = vpack.c.b16 %v3197, %v3196
          %v3213 = vpack.c.b16 %v3199, %v3198
          %v3214 = vpack.c.b16 %v3201, %v3200
          %v3215 = vpack.c.b16 %v3203, %v3202
          %v3216 = vpack.c.b16 %v3205, %v3204
          %v3217 = vpack.c.b16 %v3207, %v3206
          %v3218 = vpack.c.b16 %v3209, %v3208
          %v3219 = vpack.c.b16 %v3211, %v3210
          %3228 = vmatprep.subr.bf16.mxu0 0
          %3229 = vmatpush1.bf16.msra.mxu0 %v3212
          %3230 = vmatprep.subr.bf16.mxu0 0
          %3231 = vmatpush1.bf16.msra.mxu0 %v3213
          %3232 = vmatprep.subr.bf16.mxu0 0
          %3233 = vmatpush1.bf16.msra.mxu0 %v3214
          %3234 = vmatprep.subr.bf16.mxu0 0
          %3235 = vmatpush1.bf16.msra.mxu0 %v3215
          %3236 = vmatprep.subr.bf16.mxu0 0
          %3237 = vmatpush1.bf16.msra.mxu0 %v3216
          %3238 = vmatprep.subr.bf16.mxu0 0
          %3239 = vmatpush1.bf16.msra.mxu0 %v3217
          %3240 = vmatprep.subr.bf16.mxu0 0
          %3241 = vmatpush1.bf16.msra.mxu0 %v3218
          %3242 = vmatprep.subr.bf16.mxu0 0
          %3243 = vmatpush1.bf16.msra.mxu0 %v3219
          %3244 = vmatprep.subr.bf16.mxu0 0
          %3245 = vmatpush1.bf16.msra.mxu0 0
          %3246 = vmatprep.subr.bf16.mxu0 0
          %3247 = vmatpush1.bf16.msra.mxu0 0
          %3248 = vmatprep.subr.bf16.mxu0 0
          %3249 = vmatpush1.bf16.msra.mxu0 0
          %3250 = vmatprep.subr.bf16.mxu0 0
          %3251 = vmatpush1.bf16.msra.mxu0 0
          %3252 = vmatprep.subr.bf16.mxu0 0
          %3253 = vmatpush1.bf16.msra.mxu0 0
          %3254 = vmatprep.subr.bf16.mxu0 0
          %3255 = vmatpush1.bf16.msra.mxu0 0
          %3256 = vmatprep.subr.bf16.mxu0 0
          %3257 = vmatpush1.bf16.msra.mxu0 0
          %3258 = vmatprep.subr.bf16.mxu0 0
          %3259 = vmatpush1.bf16.msra.mxu0 0
          %3260 = vmatprep.mubr.bf16.mxu0 0
          %3261 = vmatmul.mubr.bf16.gmra.mrb[0].mxu0 %v3075
          %v3262 = vpop.f32.mrb[0].mxu0
          %v3263 = vadd.f32 0.0, %v3262
          %v3264 = vpop.f32.mrb[0].mxu0
          %v3265 = vpop.f32.mrb[0].mxu0
          %v3266 = vpop.f32.mrb[0].mxu0
          %3267 = vdwg.mxu0
          %s3268 = scalar_lea.vmem [#allocation11], 50
          %v3269 = vld [vmem:[%s3268] ss:$8 sm:$0x3]
          %v3271 = vlaneseq
          %v3272 = vshrl.u32 %v3271, 7
          %v3273 = vsub.s32 0, %v3272
          %v3274 = vrot.slane %v3269, %v3273
          %v3275 = vlaneseq
          %v3276 = vshrl.u32 %v3275, 7
          %v3277 = vsub.s32 1, %v3276
          %v3278 = vrot.slane %v3269, %v3277
          %v3281 = vadd.f32 %v3159, %v3274
          %v3282 = vadd.f32 %v3263, %v3278
          %s3283 = scalar_lea.vmem [#allocation11], 51
          %v3284 = vld [vmem:[%s3283] ss:$8 sm:$0x3]
          %s3285 = scalar_lea.vmem [#allocation11], 52
          %v3286 = vld [vmem:[%s3285] ss:$8 sm:$0x3]
          %v3287 = vadd.f32 %v3281, %v3282
          %3288 = vadd.xlane.f32.xlu0 %v3287
          %v3289 = vpop.xlane.xlu0 %3288
          %v3290 = vrcp.pop 256.0
          %v3291 = vmul.f32 %v3289, %v3290
          %v3292 = vsub.f32 %v3281, %v3291
          %v3293 = vsub.f32 %v3282, %v3291
          %v3294 = vmul.f32 %v3292, %v3292
          %v3295 = vmul.f32 %v3293, %v3293
          %v3296 = vadd.f32 %v3294, %v3295
          %3297 = vadd.xlane.f32.xlu0 %v3296
          %v3298 = vpop.xlane.xlu0 %3297
          %v3299 = vmul.f32 %v3298, %v3290
          %v3300 = vadd.f32 %v3299, 1e-05
          %v3301 = vrsqrt.pop %v3300
          %v3302 = vmul.f32 %v3292, %v3301
          %v3303 = vmul.f32 %v3293, %v3301
          %v3305 = vlaneseq
          %v3306 = vshrl.u32 %v3305, 7
          %v3307 = vsub.s32 0, %v3306
          %v3308 = vrot.slane %v3284, %v3307
          %v3309 = vlaneseq
          %v3310 = vshrl.u32 %v3309, 7
          %v3311 = vsub.s32 1, %v3310
          %v3312 = vrot.slane %v3284, %v3311
          %v3315 = vmul.f32 %v3302, %v3308
          %v3316 = vmul.f32 %v3303, %v3312
          %v3318 = vlaneseq
          %v3319 = vshrl.u32 %v3318, 7
          %v3320 = vsub.s32 0, %v3319
          %v3321 = vrot.slane %v3286, %v3320
          %v3322 = vlaneseq
          %v3323 = vshrl.u32 %v3322, 7
          %v3324 = vsub.s32 1, %v3323
          %v3325 = vrot.slane %v3286, %v3324
          %v3328 = vadd.f32 %v3315, %v3321
          %v3329 = vadd.f32 %v3316, %v3325
          %v3330 = vmul.f32 %v3328, 0.5
          %v3331 = vmul.f32 %v3329, 0.5
          %v3332 = vtanh.pop %v3330
          %v3333 = vtanh.pop %v3331
          %v3334 = vmul.f32 %v3332, 0.5
          %v3335 = vmul.f32 %v3333, 0.5
          %v3336 = vadd.f32 %v3334, 0.5
          %v3337 = vadd.f32 %v3335, 0.5
          %v3338 = vmul.f32 %v3328, %v3336
          %v3339 = vmul.f32 %v3329, %v3337
          %3340 = vst [vmem:[#allocation3] sm:$0xff] %v3338
          %3341 = vst [vmem:[#allocation3 + $0x8] sm:$0xff] %v3339
        $region96: #{fwd.1} parent=39 // pred_fallthru
          _
        %p3342 = scmp.eq.s32.totalorder %s19, 10
        // Predicated region
        $region97: #{fwd.1} parent=39 // pred_check
          %p3343 = pneg %p3342
        $region98: #{fwd.1} parent=39 // pred_check_branch
          %3345 = sbr.rel (%p3343) target = $region100
        $region99: #{fwd.1} parent=39 // pred_region
          %v3346 = vld [vmem:[#allocation3] sm:$0xff]
          %v3347 = vld [vmem:[#allocation3 + $0x8] sm:$0xff]
          %v3348 = vld [vmem:[%s242] sm:$0xf]
          %v3349 = vld [vmem:[%s242 + $0x4] sm:$0xf]
          %v3350 = vld [vmem:[%s242 + $0x8] sm:$0xf]
          %v3351 = vld [vmem:[%s242 + $0xc] sm:$0xf]
          %v3352 = vld [vmem:[%s242 + $0x10] sm:$0xf]
          %v3353 = vld [vmem:[%s242 + $0x14] sm:$0xf]
          %v3354 = vld [vmem:[%s242 + $0x18] sm:$0xf]
          %v3355 = vld [vmem:[%s242 + $0x1c] sm:$0xf]
          %v3356 = vld [vmem:[%s242 + $0x20] sm:$0xf]
          %v3357 = vld [vmem:[%s242 + $0x24] sm:$0xf]
          %v3358 = vld [vmem:[%s242 + $0x28] sm:$0xf]
          %v3359 = vld [vmem:[%s242 + $0x2c] sm:$0xf]
          %v3360 = vld [vmem:[%s242 + $0x30] sm:$0xf]
          %v3361 = vld [vmem:[%s242 + $0x34] sm:$0xf]
          %v3362 = vld [vmem:[%s242 + $0x38] sm:$0xf]
          %v3363 = vld [vmem:[%s242 + $0x3c] sm:$0xf]
          %v3364 = vld [vmem:[%s242 + $0x40] sm:$0xf]
          %v3365 = vld [vmem:[%s242 + $0x44] sm:$0xf]
          %v3366 = vld [vmem:[%s242 + $0x48] sm:$0xf]
          %v3367 = vld [vmem:[%s242 + $0x4c] sm:$0xf]
          %v3368 = vld [vmem:[%s242 + $0x50] sm:$0xf]
          %v3369 = vld [vmem:[%s242 + $0x54] sm:$0xf]
          %v3370 = vld [vmem:[%s242 + $0x58] sm:$0xf]
          %v3371 = vld [vmem:[%s242 + $0x5c] sm:$0xf]
          %v3372 = vld [vmem:[%s242 + $0x60] sm:$0xf]
          %v3373 = vld [vmem:[%s242 + $0x64] sm:$0xf]
          %v3374 = vld [vmem:[%s242 + $0x68] sm:$0xf]
          %v3375 = vld [vmem:[%s242 + $0x6c] sm:$0xf]
          %v3376 = vld [vmem:[%s242 + $0x70] sm:$0xf]
          %v3377 = vld [vmem:[%s242 + $0x74] sm:$0xf]
          %v3378 = vld [vmem:[%s242 + $0x78] sm:$0xf]
          %v3379 = vld [vmem:[%s242 + $0x7c] sm:$0xf]
          %v3380 = vpack.c.bf16 %v3346, %v3346
          %v3381 = vpack.c.bf16 %v3347, %v3347
          %v3382 = vld [vmem:[#allocation11 + $0x35] ss:$0 sm:$0xff]
          %v3415 = vunpack.c.l.b16 %v3348
          %v3416 = vunpack.c.l.b16 %v3349
          %v3417 = vunpack.c.l.b16 %v3350
          %v3418 = vunpack.c.l.b16 %v3351
          %v3419 = vunpack.c.l.b16 %v3352
          %v3420 = vunpack.c.l.b16 %v3353
          %v3421 = vunpack.c.l.b16 %v3354
          %v3422 = vunpack.c.l.b16 %v3355
          %v3423 = vunpack.c.l.b16 %v3356
          %v3424 = vunpack.c.l.b16 %v3357
          %v3425 = vunpack.c.l.b16 %v3358
          %v3426 = vunpack.c.l.b16 %v3359
          %v3427 = vunpack.c.l.b16 %v3360
          %v3428 = vunpack.c.l.b16 %v3361
          %v3429 = vunpack.c.l.b16 %v3362
          %v3430 = vunpack.c.l.b16 %v3363
          %v3431 = vunpack.c.l.b16 %v3364
          %v3432 = vunpack.c.l.b16 %v3365
          %v3433 = vunpack.c.l.b16 %v3366
          %v3434 = vunpack.c.l.b16 %v3367
          %v3435 = vunpack.c.l.b16 %v3368
          %v3436 = vunpack.c.l.b16 %v3369
          %v3437 = vunpack.c.l.b16 %v3370
          %v3438 = vunpack.c.l.b16 %v3371
          %v3439 = vunpack.c.l.b16 %v3372
          %v3440 = vunpack.c.l.b16 %v3373
          %v3441 = vunpack.c.l.b16 %v3374
          %v3442 = vunpack.c.l.b16 %v3375
          %v3443 = vunpack.c.l.b16 %v3376
          %v3444 = vunpack.c.l.b16 %v3377
          %v3445 = vunpack.c.l.b16 %v3378
          %v3446 = vunpack.c.l.b16 %v3379
          %v3447 = vpack.c.b16 %v3416, %v3415
          %v3448 = vpack.c.b16 %v3418, %v3417
          %v3449 = vpack.c.b16 %v3420, %v3419
          %v3450 = vpack.c.b16 %v3422, %v3421
          %v3451 = vpack.c.b16 %v3424, %v3423
          %v3452 = vpack.c.b16 %v3426, %v3425
          %v3453 = vpack.c.b16 %v3428, %v3427
          %v3454 = vpack.c.b16 %v3430, %v3429
          %v3455 = vpack.c.b16 %v3432, %v3431
          %v3456 = vpack.c.b16 %v3434, %v3433
          %v3457 = vpack.c.b16 %v3436, %v3435
          %v3458 = vpack.c.b16 %v3438, %v3437
          %v3459 = vpack.c.b16 %v3440, %v3439
          %v3460 = vpack.c.b16 %v3442, %v3441
          %v3461 = vpack.c.b16 %v3444, %v3443
          %v3462 = vpack.c.b16 %v3446, %v3445
          %3479 = vmatprep.subr.bf16.mxu0 0
          %3480 = vmatpush1.bf16.msra.mxu0 %v3447
          %3481 = vmatprep.subr.bf16.mxu0 0
          %3482 = vmatpush1.bf16.msra.mxu0 %v3448
          %3483 = vmatprep.subr.bf16.mxu0 0
          %3484 = vmatpush1.bf16.msra.mxu0 %v3449
          %3485 = vmatprep.subr.bf16.mxu0 0
          %3486 = vmatpush1.bf16.msra.mxu0 %v3450
          %3487 = vmatprep.subr.bf16.mxu0 0
          %3488 = vmatpush1.bf16.msra.mxu0 %v3451
          %3489 = vmatprep.subr.bf16.mxu0 0
          %3490 = vmatpush1.bf16.msra.mxu0 %v3452
          %3491 = vmatprep.subr.bf16.mxu0 0
          %3492 = vmatpush1.bf16.msra.mxu0 %v3453
          %3493 = vmatprep.subr.bf16.mxu0 0
          %3494 = vmatpush1.bf16.msra.mxu0 %v3454
          %3495 = vmatprep.subr.bf16.mxu0 0
          %3496 = vmatpush1.bf16.msra.mxu0 %v3455
          %3497 = vmatprep.subr.bf16.mxu0 0
          %3498 = vmatpush1.bf16.msra.mxu0 %v3456
          %3499 = vmatprep.subr.bf16.mxu0 0
          %3500 = vmatpush1.bf16.msra.mxu0 %v3457
          %3501 = vmatprep.subr.bf16.mxu0 0
          %3502 = vmatpush1.bf16.msra.mxu0 %v3458
          %3503 = vmatprep.subr.bf16.mxu0 0
          %3504 = vmatpush1.bf16.msra.mxu0 %v3459
          %3505 = vmatprep.subr.bf16.mxu0 0
          %3506 = vmatpush1.bf16.msra.mxu0 %v3460
          %3507 = vmatprep.subr.bf16.mxu0 0
          %3508 = vmatpush1.bf16.msra.mxu0 %v3461
          %3509 = vmatprep.subr.bf16.mxu0 0
          %3510 = vmatpush1.bf16.msra.mxu0 %v3462
          %3511 = vmatprep.mubr.bf16.mxu0 %v3381
          %3512 = vmatmul.mubr.bf16.gmra.mrb[0].mxu0 %v3380
          %v3513 = vpop.f32.mrb[0].mxu0
          %v3514 = vadd.f32 %v3382, %v3513
          %v3515 = vpop.f32.mrb[0].mxu0
          %v3516 = vpop.f32.mrb[0].mxu0
          %v3517 = vpop.f32.mrb[0].mxu0
          %3518 = vdwg.mxu0
          %3519 = vst [vmem:[#allocation12] sm:$0xff] %v3514
        $region100: #{fwd.1} parent=39 // pred_fallthru
          _
        // Predicated region
        $region101: #{fwd.1} parent=39 // pred_check
          %p3520 = pneg %p142
        $region102: #{fwd.1} parent=39 // pred_check_branch
          %3522 = sbr.rel (%p3520) target = $region104
        $region103: #{fwd.1} parent=39 // pred_region
          %s3524 = ssub.s32 128, 128
          %3525 = vsyncadd [#allocation7], %s3524
          %s3527 = sshll.u32 [#allocation12], 4
          %s3528 = int_to_ptr.vmem [resolvable:$true] %s3527
          %3530 = dma.vmem_to_hbm [thread:$0]  %s3528, 128, %s5, [#allocation7]
        $region104: #{fwd.1} parent=39 // pred_fallthru
          _
        // Predicated region
        $region105: #{fwd.1} parent=39 // pred_check
          %p3531 = pneg %p142
        $region106: #{fwd.1} parent=39 // pred_check_branch
          %3533 = sbr.rel (%p3531) target = $region108
        $region107: #{fwd.1} parent=39 // pred_region
          %3534 = dma.done [#allocation7], 128
        $region108: #{fwd.1} parent=39 // pred_fallthru
          _
      $region40: #{fwd.1} parent=5 // pred_fallthru
        _
      %p3535 = scmp.le.s32.totalorder 2, %s14
      // Predicated region
      $region109: #{fwd.1} parent=5 // pred_check
        %p3536 = pneg %p3535
      $region110: #{fwd.1} parent=5 // pred_check_branch
        %3538 = sbr.rel (%p3536) target = $region112
      $region111: #{fwd.1} parent=5 // pred_region
        %s3539 = ssub.s32 %s14, 2
      $region112: #{fwd.1} parent=5 // pred_fallthru
        _
    $region6: #{fwd.1} parent=1 // loop_footer
      %s18 = sadd.s32 1, %s14
    $region7: #{fwd.1} parent=1 // loop_footer_branch
      %13 = sbr.rel target = $region3
    $region8: #{fwd.1} parent=1 // loop_exit
      _
    %3540 = vsyncpa [#allocation6], 1
    %s3541 = scalar_lea.sflag [#allocation6], 1
    %3542 = vsyncpa %s3541, 1
    %3543 = vsyncpa [#allocation9], 1
    %3544 = vsyncpa [#allocation7], 1
    %s3545 = scalar_lea.sflag [#allocation7], 1
    %3546 = vsyncpa %s3545, 1

</llo_original>
